<compile_context>
chip_gen: v5e
topology: v5e:2x2
jax: 0.10.0
libtpu: 0.0.40
codegen_flags: <defaults>
</compile_context>

<pallas_src>
import functools

import jax
import jax.numpy as jnp
import numpy as np
from jax.experimental import pallas as pl
from jax.experimental.pallas import tpu as pltpu

EPS = 1e-5           # torch.nn.BatchNorm3d default
NUM_CORE_SPLITS = 2  # leading "parallel" grid axis (v7x megacore); serial (harmless) on v5e/v6e


def _round_up(x, m):
    return (x + m - 1) // m * m


def _vmem_limit_bytes():
    """~75% of per-core VMEM, capped at 100 MiB:
    ~96 MiB on v5e/v6e (128 MiB physical), 48 MiB on v7x (64 MiB physical)."""
    try:
        cap = int(pltpu.get_tpu_info().vmem_capacity_bytes)
    except Exception:  # conservative fallback (also valid on v7x)
        cap = 64 * 1024 * 1024
    return int(min(cap * 3 // 4, 100 * 1024 * 1024))


# ------------------------------ Pallas kernels ------------------------------
def _conv_stats_kernel(p_ref, w_ref, y_ref, stats_ref):
    """One M-tile of the conv matmul + per-core-split BN statistics.

    Grid = (NUM_CORE_SPLITS, num_i). Axis 0 is "parallel" (each split owns a
    distinct stats block and a disjoint range of M tiles, so it shards across
    v7x's two TensorCores). Axis 1 is the "arbitrary" M sweep the stats block
    accumulates over.

    p_ref:     (TM, Kp)  bf16 im2col patch rows for this tile
    w_ref:     (Kp, Cp)  bf16 reshaped conv weights (resident across the grid)
    y_ref:     (TM, Cp)  bf16 conv output rows (streamed out per tile)
    stats_ref: (16, Cp)  f32  resident accumulator for this split:
               rows 0:8  = per-sublane partial sum(y)
               rows 8:16 = per-sublane partial sum(y*y)
    """
    i = pl.program_id(1)

    @pl.when(i == 0)
    def _init():
        stats_ref[...] = jnp.zeros_like(stats_ref)

    # Conv3d as one MXU matmul: bf16 inputs, f32 accumulation.
    y = jnp.dot(p_ref[...], w_ref[...], preferred_element_type=jnp.float32)
    y_ref[...] = y.astype(y_ref.dtype)

    # Full-(8,128)-tile accumulation: fold TM -> (TM//8, 8) so the adds into
    # stats_ref are unmasked, sublane-aligned stores; the 8->1 cross-sublane
    # reduction happens once, outside the hot loop (in the wrapper).
    tm, cp = y.shape
    y3 = y.reshape(tm // 8, 8, cp)
    stats_ref[0:8, :] += jnp.sum(y3, axis=0)
    stats_ref[8:16, :] += jnp.sum(y3 * y3, axis=0)


def _bn_relu_kernel(y_ref, scale_ref, shift_ref, o_ref):
    """Streaming BN epilogue: y*scale + shift, ReLU (scale/shift precomputed)."""
    y = y_ref[...].astype(jnp.float32)
    o_ref[...] = jnp.maximum(y * scale_ref[...] + shift_ref[...], 0.0).astype(o_ref.dtype)


# ------------------------------ host wrappers -------------------------------
def _pick_tile_m(m, kp, cp, vmem_limit, *, cap=2048):
    """Rows per grid step for kernel A.

    Per-step, double-buffered: bf16 patches (TM x Kp) + bf16 y (TM x Cp).
    Resident: bf16 weights (Kp x Cp) + f32 stats (16 x Cp). Sized to ~60% of
    the per-generation VMEM limit so double buffering always fits."""
    fixed = 2 * (kp * cp * 2 + 16 * cp * 4)
    per_row = 2 * (kp * 2 + cp * 2)
    budget = int(vmem_limit * 0.6) - fixed
    t = max(8, min(cap, budget // per_row))
    t = max(8, (t // 8) * 8)
    # Don't exceed what one core-split half of M actually needs.
    half = max(8, _round_up(-(-m // NUM_CORE_SPLITS), 8))
    return min(t, half)


def conv3d_bn_relu(x, w, gamma, beta, *, stride, padding, out_dtype=jnp.float32):
    """x: (N, D, H, W, Cin); w: (K, K, K, Cin, Cout); gamma/beta: (Cout,).

    Conv3d + training-mode BatchNorm3d (batch statistics) + affine + ReLU.
    The Conv3d bias is intentionally NOT an input: BN's per-channel mean
    subtraction cancels it exactly (the f32 reference keeps it and matches).
    """
    N, D, H, W, Cin = x.shape
    K = w.shape[0]
    Cout = w.shape[-1]
    s, p = stride, padding

    Do = (D + 2 * p - K) // s + 1
    Ho = (H + 2 * p - K) // s + 1
    Wo = (W + 2 * p - K) // s + 1
    M = N * Do * Ho * Wo
    Kdim = K * K * K * Cin
    Kp = _round_up(Kdim, 128)      # lane-aligned contraction dim
    Cp = _round_up(Cout, 128)      # lane-dense output channels

    vmem_limit = _vmem_limit_bytes()
    tm = _pick_tile_m(M, Kp, Cp, vmem_limit)
    M_pad = _round_up(M, NUM_CORE_SPLITS * tm)
    num_i = M_pad // (NUM_CORE_SPLITS * tm)

    # --- glue: zero-pad + im2col patch extraction (all in bf16) --------------
    # TODO(synk): move patch extraction in-kernel (halo'd manual DMA of x from
    # memory_space=pl.ANY) to cut conv-input HBM traffic ~K^3x; this glue is
    # the remaining dominant HBM cost.
    xb = x.astype(jnp.bfloat16)
    xp = jnp.pad(xb, ((0, 0), (p, p), (p, p), (p, p), (0, 0)))
    cols = []
    for kd in range(K):
        for kh in range(K):
            for kw in range(K):
                cols.append(
                    xp[:,
                       kd: kd + s * (Do - 1) + 1: s,
                       kh: kh + s * (Ho - 1) + 1: s,
                       kw: kw + s * (Wo - 1) + 1: s,
                       :]
                )
    patches = jnp.stack(cols, axis=-2).reshape(M, Kdim)
    # Zero rows/lanes add nothing to the BN sums (which are divided by true M).
    patches = jnp.pad(patches, ((0, M_pad - M), (0, Kp - Kdim)))

    w2 = jnp.pad(w.astype(jnp.bfloat16).reshape(Kdim, Cout),
                 ((0, Kp - Kdim), (0, Cp - Cout)))

    # --- kernel A: tiled conv matmul + per-core-split BN statistics ----------
    y, stats = pl.pallas_call(
        _conv_stats_kernel,
        out_shape=(jax.ShapeDtypeStruct((M_pad, Cp), jnp.bfloat16),
                   jax.ShapeDtypeStruct((NUM_CORE_SPLITS * 16, Cp), jnp.float32)),
        grid=(NUM_CORE_SPLITS, num_i),
        in_specs=[
            pl.BlockSpec((tm, Kp), lambda c, i: (c * num_i + i, 0)),
            pl.BlockSpec((Kp, Cp), lambda c, i: (0, 0)),
        ],
        out_specs=(
            pl.BlockSpec((tm, Cp), lambda c, i: (c * num_i + i, 0)),
            pl.BlockSpec((16, Cp), lambda c, i: (c, 0)),  # per-split resident accumulator
        ),
        compiler_params=pltpu.CompilerParams(
            # Stats accumulate across the M-tile axis -> "arbitrary"; each
            # core-split owns disjoint stats/y blocks -> "parallel" (shards
            # across v7x's two TensorCores; a plain serial loop on v5e/v6e).
            dimension_semantics=("parallel", "arbitrary"),
            vmem_limit_bytes=vmem_limit,
        ),
    )(patches, w2)

    # --- tiny glue: fold partial sums -> per-channel scale/shift -------------
    st = stats.reshape(NUM_CORE_SPLITS, 2, 8, Cp)
    sum_y = jnp.sum(st[:, 0], axis=(0, 1))
    sum_y2 = jnp.sum(st[:, 1], axis=(0, 1))
    inv_m = 1.0 / M
    mean = sum_y * inv_m
    var = sum_y2 * inv_m - mean * mean          # biased variance, f32
    inv_std = jax.lax.rsqrt(var + EPS)
    # Padded channels: var == 0 -> inv_std = 1/sqrt(eps), masked by the
    # zero-padded gamma (scale == 0) and sliced off below.
    g2 = jnp.pad(gamma.astype(jnp.float32), (0, Cp - Cout))
    b2 = jnp.pad(beta.astype(jnp.float32), (0, Cp - Cout))
    scale = (g2 * inv_std).reshape(1, Cp)
    shift = (b2 - mean * g2 * inv_std).reshape(1, Cp)

    # --- kernel B: streaming y*scale + shift, ReLU ----------------------------
    out = pl.pallas_call(
        _bn_relu_kernel,
        out_shape=jax.ShapeDtypeStruct((M_pad, Cp), out_dtype),
        grid=(M_pad // tm,),
        in_specs=[
            pl.BlockSpec((tm, Cp), lambda i: (i, 0)),
            pl.BlockSpec((1, Cp), lambda i: (0, 0)),
            pl.BlockSpec((1, Cp), lambda i: (0, 0)),
        ],
        out_specs=pl.BlockSpec((tm, Cp), lambda i: (i, 0)),
        compiler_params=pltpu.CompilerParams(
            dimension_semantics=("parallel",),
            vmem_limit_bytes=vmem_limit,
        ),
    )(y, scale, shift)

    return out[:M, :Cout].reshape(N, Do, Ho, Wo, Cout)


def init_ops_params(key, channel_in, channel_inter, channel_out, kernel):
    ks = jax.random.split(key, 8)
    shape1 = (kernel, kernel, kernel, channel_in, channel_inter)
    shape2 = (kernel, kernel, kernel, channel_inter, channel_out)
    return {
        "w1": jax.random.normal(ks[0], shape1, jnp.float32) * 0.1,
        "b1": jax.random.normal(ks[1], (channel_inter,), jnp.float32) * 0.1,
        "g1": 1.0 + 0.1 * jax.random.normal(ks[2], (channel_inter,), jnp.float32),
        "bt1": 0.1 * jax.random.normal(ks[3], (channel_inter,), jnp.float32),
        "w2": jax.random.normal(ks[4], shape2, jnp.float32) * 0.1,
        "b2": jax.random.normal(ks[5], (channel_out,), jnp.float32) * 0.1,
        "g2": 1.0 + 0.1 * jax.random.normal(ks[6], (channel_out,), jnp.float32),
        "bt2": 0.1 * jax.random.normal(ks[7], (channel_out,), jnp.float32),
    }


@functools.partial(jax.jit, static_argnames=("stride", "padding"))
def ops_forward(x_ncdhw, params, *, stride, padding):
    """Matches `ops.forward`: x is NCDHW (PyTorch convention).
    Conv biases b1/b2 are not passed to the kernels: training-mode BN cancels
    them exactly. The inter-stage activation stays in bf16 (stage 2 casts its
    matmul inputs to bf16 anyway); only the final stage emits f32."""
    x = jnp.transpose(x_ncdhw, (0, 2, 3, 4, 1))  # NCDHW -> NDHWC
    y = conv3d_bn_relu(x, params["w1"], params["g1"], params["bt1"],
                       stride=stride, padding=padding, out_dtype=jnp.bfloat16)
    y = conv3d_bn_relu(y, params["w2"], params["g2"], params["bt2"],
                       stride=stride, padding=padding, out_dtype=jnp.float32)
    return jnp.transpose(y, (0, 4, 1, 2, 3))     # NDHWC -> NCDHW


# ----------------------------- pure-JAX reference ----------------------------
def _ref_conv_bn_relu(x, w, b, gamma, beta, *, stride, padding):
    y = jax.lax.conv_general_dilated(
        x, w,
        window_strides=(stride,) * 3,
        padding=[(padding, padding)] * 3,
        dimension_numbers=("NDHWC", "DHWIO", "NDHWC"),
        precision=jax.lax.Precision.HIGHEST,
    ) + b
    mean = jnp.mean(y, axis=(0, 1, 2, 3), keepdims=True)
    var = jnp.mean((y - mean) ** 2, axis=(0, 1, 2, 3), keepdims=True)
    y = (y - mean) * jax.lax.rsqrt(var + EPS) * gamma + beta
    return jnp.maximum(y, 0.0)


def ops_forward_ref(x_ncdhw, params, *, stride, padding):
    x = jnp.transpose(x_ncdhw, (0, 2, 3, 4, 1))
    y = _ref_conv_bn_relu(x, params["w1"], params["b1"], params["g1"], params["bt1"],
                          stride=stride, padding=padding)
    y = _ref_conv_bn_relu(y, params["w2"], params["b2"], params["g2"], params["bt2"],
                          stride=stride, padding=padding)
    return jnp.transpose(y, (0, 4, 1, 2, 3))


if __name__ == "__main__":
    # ops(channel_in=4, channel_inter=8, channel_out=8, kernel=3, stride=1, padding=1)
    channel_in, channel_inter, channel_out = 4, 8, 8
    kernel, stride, padding = 3, 1, 1
    N, D, H, W = 2, 8, 8, 8

    key = jax.random.PRNGKey(0)
    kx, kp = jax.random.split(key)
    x = jax.random.normal(kx, (N, channel_in, D, H, W), jnp.float32)  # NCDHW
    params = init_ops_params(kp, channel_in, channel_inter, channel_out, kernel)

    out = ops_forward(x, params, stride=stride, padding=padding)
    out = jax.block_until_ready(out)
    assert out.shape == (N, channel_out, D, H, W), out.shape

    ref = jax.block_until_ready(
        ops_forward_ref(x, params, stride=stride, padding=padding))
    # bf16 MXU inputs + bf16 intermediate conv outputs / inter-stage activation
    # vs a HIGHEST-precision f32 reference -> tolerance accounts for two stacked
    # bf16 conv stages on O(1) BN-normalized outputs.
    np.testing.assert_allclose(np.asarray(out), np.asarray(ref), rtol=4e-2, atol=4e-2)

    print("KERNEL_OK")
</pallas_src>

<mosaic_0001>
module attributes {stable_mosaic.version = 11 : i64} {
  func.func @_conv_stats_kernel(%arg0: i32, %arg1: i32, %arg2: memref<512x128xbf16, #tpu.memory_space<vmem>>, %arg3: memref<128x128xbf16, #tpu.memory_space<vmem>>, %arg4: memref<512x128xbf16, #tpu.memory_space<vmem>>, %arg5: memref<16x128xf32, #tpu.memory_space<vmem>>) attributes {dimension_semantics = [#tpu.dimension_semantics<parallel>, #tpu.dimension_semantics<arbitrary>], iteration_bounds = array<i64: 2, 1>, scalar_prefetch = 0 : i64, scratch_operands = 0 : i64, tpu.core_type = #tpu.core_type<tc>, window_params = [{transform_indices = @transform_0, window_bounds = array<i64: 512, 128>}, {pipeline_mode = #tpu.pipeline_mode<synchronous>, transform_indices = @transform_1, window_bounds = array<i64: 128, 128>}, {transform_indices = @transform_2, window_bounds = array<i64: 512, 128>}, {transform_indices = @transform_3, window_bounds = array<i64: 16, 128>}]} {
    %c0_i32 = arith.constant 0 : i32
    %0 = arith.cmpi eq, %arg1, %c0_i32 : i32
    %1 = arith.extui %0 : i1 to i32
    %c0_i32_0 = arith.constant 0 : i32
    %2 = arith.cmpi ne, %1, %c0_i32_0 : i32
    scf.if %2 {
      %cst_15 = arith.constant 0.000000e+00 : f32
      %18 = vector.broadcast %cst_15 : f32 to vector<16x128xf32>
      %c0_16 = arith.constant 0 : index
      %c0_17 = arith.constant 0 : index
      %19 = vector.load %arg5[%c0_16, %c0_17] : memref<16x128xf32, #tpu.memory_space<vmem>>, vector<16x128xf32>
      tpu.vector_store %arg5[%c0_16, %c0_17], %18 {strides = array<i32>} : memref<16x128xf32, #tpu.memory_space<vmem>>, vector<16x128xf32>,
    } else {
    }
    %c0 = arith.constant 0 : index
    %c0_1 = arith.constant 0 : index
    %3 = vector.load %arg2[%c0, %c0_1] : memref<512x128xbf16, #tpu.memory_space<vmem>>, vector<512x128xbf16>
    %c0_2 = arith.constant 0 : index
    %c0_3 = arith.constant 0 : index
    %4 = vector.load %arg3[%c0_2, %c0_3] : memref<128x128xbf16, #tpu.memory_space<vmem>>, vector<128x128xbf16>
    %cst = arith.constant dense<0.000000e+00> : vector<512x128xf32>
    %5 = tpu.matmul %3, %4, %cst {dimension_numbers = #tpu.dot_dimension_numbers<[1], [0], [0], [1], [0, 0, 1, 1], [], []>} : vector<512x128xbf16>, vector<128x128xbf16>, vector<512x128xf32> -> vector<512x128xf32>
    %6 = arith.truncf %5 : vector<512x128xf32> to vector<512x128xbf16>
    %c0_4 = arith.constant 0 : index
    %c0_5 = arith.constant 0 : index
    %7 = vector.load %arg4[%c0_4, %c0_5] : memref<512x128xbf16, #tpu.memory_space<vmem>>, vector<512x128xbf16>
    tpu.vector_store %arg4[%c0_4, %c0_5], %6 {strides = array<i32>} : memref<512x128xbf16, #tpu.memory_space<vmem>>, vector<512x128xbf16>,
    %8 = vector.shape_cast %5 : vector<512x128xf32> to vector<64x8x128xf32>
    %c0_6 = arith.constant 0 : index
    %c0_7 = arith.constant 0 : index
    %9 = vector.load %arg5[%c0_6, %c0_7] : memref<16x128xf32, #tpu.memory_space<vmem>>, vector<8x128xf32>
    %cst_8 = arith.constant dense<0.000000e+00> : vector<8x128xf32>
    %10 = vector.multi_reduction <add>, %8, %cst_8 [0] : vector<64x8x128xf32> to vector<8x128xf32>
    %11 = arith.addf %9, %10 : vector<8x128xf32>
    %c0_9 = arith.constant 0 : index
    %c0_10 = arith.constant 0 : index
    %12 = vector.load %arg5[%c0_9, %c0_10] : memref<16x128xf32, #tpu.memory_space<vmem>>, vector<8x128xf32>
    tpu.vector_store %arg5[%c0_9, %c0_10], %11 {strides = array<i32>} : memref<16x128xf32, #tpu.memory_space<vmem>>, vector<8x128xf32>,
    %c8 = arith.constant 8 : index
    %c0_11 = arith.constant 0 : index
    %13 = vector.load %arg5[%c8, %c0_11] : memref<16x128xf32, #tpu.memory_space<vmem>>, vector<8x128xf32>
    %14 = arith.mulf %8, %8 : vector<64x8x128xf32>
    %cst_12 = arith.constant dense<0.000000e+00> : vector<8x128xf32>
    %15 = vector.multi_reduction <add>, %14, %cst_12 [0] : vector<64x8x128xf32> to vector<8x128xf32>
    %16 = arith.addf %13, %15 : vector<8x128xf32>
    %c8_13 = arith.constant 8 : index
    %c0_14 = arith.constant 0 : index
    %17 = vector.load %arg5[%c8_13, %c0_14] : memref<16x128xf32, #tpu.memory_space<vmem>>, vector<8x128xf32>
    tpu.vector_store %arg5[%c8_13, %c0_14], %16 {strides = array<i32>} : memref<16x128xf32, #tpu.memory_space<vmem>>, vector<8x128xf32>,
    return
  }
  func.func @transform_0(%arg0: i32, %arg1: i32) -> (i32, i32) {
    %c1_i32 = arith.constant 1 : i32
    %0 = arith.muli %arg0, %c1_i32 : i32
    %1 = arith.addi %0, %arg1 : i32
    %c0_i32 = arith.constant 0 : i32
    %c0_i32_0 = arith.constant 0 : i32
    return %1, %c0_i32 : i32, i32
  }
  func.func @transform_1(%arg0: i32, %arg1: i32) -> (i32, i32) {
    %c0_i32 = arith.constant 0 : i32
    %c0_i32_0 = arith.constant 0 : i32
    %c0_i32_1 = arith.constant 0 : i32
    return %c0_i32, %c0_i32_0 : i32, i32
  }
  func.func @transform_2(%arg0: i32, %arg1: i32) -> (i32, i32) {
    %c1_i32 = arith.constant 1 : i32
    %0 = arith.muli %arg0, %c1_i32 : i32
    %1 = arith.addi %0, %arg1 : i32
    %c0_i32 = arith.constant 0 : i32
    %c0_i32_0 = arith.constant 0 : i32
    return %1, %c0_i32 : i32, i32
  }
  func.func @transform_3(%arg0: i32, %arg1: i32) -> (i32, i32) {
    %c0_i32 = arith.constant 0 : i32
    %c0_i32_0 = arith.constant 0 : i32
    return %arg0, %c0_i32 : i32, i32
  }
}

module attributes {stable_mosaic.version = 11 : i64} {
  func.func @_bn_relu_kernel(%arg0: i32, %arg1: memref<512x128xbf16, #tpu.memory_space<vmem>>, %arg2: memref<1x128xf32, #tpu.memory_space<vmem>>, %arg3: memref<1x128xf32, #tpu.memory_space<vmem>>, %arg4: memref<512x128xbf16, #tpu.memory_space<vmem>>) attributes {dimension_semantics = [#tpu.dimension_semantics<parallel>], iteration_bounds = array<i64: 2>, scalar_prefetch = 0 : i64, scratch_operands = 0 : i64, tpu.core_type = #tpu.core_type<tc>, window_params = [{transform_indices = @transform_0, window_bounds = array<i64: 512, 128>}, {pipeline_mode = #tpu.pipeline_mode<synchronous>, transform_indices = @transform_1, window_bounds = array<i64: 1, 128>}, {pipeline_mode = #tpu.pipeline_mode<synchronous>, transform_indices = @transform_2, window_bounds = array<i64: 1, 128>}, {transform_indices = @transform_3, window_bounds = array<i64: 512, 128>}]} {
    %c0 = arith.constant 0 : index
    %c0_0 = arith.constant 0 : index
    %0 = vector.load %arg1[%c0, %c0_0] : memref<512x128xbf16, #tpu.memory_space<vmem>>, vector<512x128xbf16>
    %1 = arith.extf %0 : vector<512x128xbf16> to vector<512x128xf32>
    %c0_1 = arith.constant 0 : index
    %c0_2 = arith.constant 0 : index
    %2 = vector.load %arg2[%c0_1, %c0_2] : memref<1x128xf32, #tpu.memory_space<vmem>>, vector<1x128xf32>
    %3 = vector.broadcast %2 : vector<1x128xf32> to vector<512x128xf32>
    %4 = arith.mulf %1, %3 : vector<512x128xf32>
    %c0_3 = arith.constant 0 : index
    %c0_4 = arith.constant 0 : index
    %5 = vector.load %arg3[%c0_3, %c0_4] : memref<1x128xf32, #tpu.memory_space<vmem>>, vector<1x128xf32>
    %6 = vector.broadcast %5 : vector<1x128xf32> to vector<512x128xf32>
    %7 = arith.addf %4, %6 : vector<512x128xf32>
    %cst = arith.constant 0.000000e+00 : f32
    %8 = vector.broadcast %cst : f32 to vector<512x128xf32>
    %9 = arith.maximumf %7, %8 : vector<512x128xf32>
    %10 = arith.truncf %9 : vector<512x128xf32> to vector<512x128xbf16>
    %c0_5 = arith.constant 0 : index
    %c0_6 = arith.constant 0 : index
    %11 = vector.load %arg4[%c0_5, %c0_6] : memref<512x128xbf16, #tpu.memory_space<vmem>>, vector<512x128xbf16>
    tpu.vector_store %arg4[%c0_5, %c0_6], %10 {strides = array<i32>} : memref<512x128xbf16, #tpu.memory_space<vmem>>, vector<512x128xbf16>,
    return
  }
  func.func @transform_0(%arg0: i32) -> (i32, i32) {
    %c0_i32 = arith.constant 0 : i32
    %c0_i32_0 = arith.constant 0 : i32
    return %arg0, %c0_i32 : i32, i32
  }
  func.func @transform_1(%arg0: i32) -> (i32, i32) {
    %c0_i32 = arith.constant 0 : i32
    %c0_i32_0 = arith.constant 0 : i32
    %c0_i32_1 = arith.constant 0 : i32
    return %c0_i32, %c0_i32_0 : i32, i32
  }
  func.func @transform_2(%arg0: i32) -> (i32, i32) {
    %c0_i32 = arith.constant 0 : i32
    %c0_i32_0 = arith.constant 0 : i32
    %c0_i32_1 = arith.constant 0 : i32
    return %c0_i32, %c0_i32_0 : i32, i32
  }
  func.func @transform_3(%arg0: i32) -> (i32, i32) {
    %c0_i32 = arith.constant 0 : i32
    %c0_i32_0 = arith.constant 0 : i32
    return %arg0, %c0_i32 : i32, i32
  }
}

module attributes {stable_mosaic.version = 11 : i64} {
  func.func @_conv_stats_kernel(%arg0: i32, %arg1: i32, %arg2: memref<512x256xbf16, #tpu.memory_space<vmem>>, %arg3: memref<256x128xbf16, #tpu.memory_space<vmem>>, %arg4: memref<512x128xbf16, #tpu.memory_space<vmem>>, %arg5: memref<16x128xf32, #tpu.memory_space<vmem>>) attributes {dimension_semantics = [#tpu.dimension_semantics<parallel>, #tpu.dimension_semantics<arbitrary>], iteration_bounds = array<i64: 2, 1>, scalar_prefetch = 0 : i64, scratch_operands = 0 : i64, tpu.core_type = #tpu.core_type<tc>, window_params = [{transform_indices = @transform_0, window_bounds = array<i64: 512, 256>}, {pipeline_mode = #tpu.pipeline_mode<synchronous>, transform_indices = @transform_1, window_bounds = array<i64: 256, 128>}, {transform_indices = @transform_2, window_bounds = array<i64: 512, 128>}, {transform_indices = @transform_3, window_bounds = array<i64: 16, 128>}]} {
    %c0_i32 = arith.constant 0 : i32
    %0 = arith.cmpi eq, %arg1, %c0_i32 : i32
    %1 = arith.extui %0 : i1 to i32
    %c0_i32_0 = arith.constant 0 : i32
    %2 = arith.cmpi ne, %1, %c0_i32_0 : i32
    scf.if %2 {
      %cst_15 = arith.constant 0.000000e+00 : f32
      %18 = vector.broadcast %cst_15 : f32 to vector<16x128xf32>
      %c0_16 = arith.constant 0 : index
      %c0_17 = arith.constant 0 : index
      %19 = vector.load %arg5[%c0_16, %c0_17] : memref<16x128xf32, #tpu.memory_space<vmem>>, vector<16x128xf32>
      tpu.vector_store %arg5[%c0_16, %c0_17], %18 {strides = array<i32>} : memref<16x128xf32, #tpu.memory_space<vmem>>, vector<16x128xf32>,
    } else {
    }
    %c0 = arith.constant 0 : index
    %c0_1 = arith.constant 0 : index
    %3 = vector.load %arg2[%c0, %c0_1] : memref<512x256xbf16, #tpu.memory_space<vmem>>, vector<512x256xbf16>
    %c0_2 = arith.constant 0 : index
    %c0_3 = arith.constant 0 : index
    %4 = vector.load %arg3[%c0_2, %c0_3] : memref<256x128xbf16, #tpu.memory_space<vmem>>, vector<256x128xbf16>
    %cst = arith.constant dense<0.000000e+00> : vector<512x128xf32>
    %5 = tpu.matmul %3, %4, %cst {dimension_numbers = #tpu.dot_dimension_numbers<[1], [0], [0], [1], [0, 0, 1, 1], [], []>} : vector<512x256xbf16>, vector<256x128xbf16>, vector<512x128xf32> -> vector<512x128xf32>
    %6 = arith.truncf %5 : vector<512x128xf32> to vector<512x128xbf16>
    %c0_4 = arith.constant 0 : index
    %c0_5 = arith.constant 0 : index
    %7 = vector.load %arg4[%c0_4, %c0_5] : memref<512x128xbf16, #tpu.memory_space<vmem>>, vector<512x128xbf16>
    tpu.vector_store %arg4[%c0_4, %c0_5], %6 {strides = array<i32>} : memref<512x128xbf16, #tpu.memory_space<vmem>>, vector<512x128xbf16>,
    %8 = vector.shape_cast %5 : vector<512x128xf32> to vector<64x8x128xf32>
    %c0_6 = arith.constant 0 : index
    %c0_7 = arith.constant 0 : index
    %9 = vector.load %arg5[%c0_6, %c0_7] : memref<16x128xf32, #tpu.memory_space<vmem>>, vector<8x128xf32>
    %cst_8 = arith.constant dense<0.000000e+00> : vector<8x128xf32>
    %10 = vector.multi_reduction <add>, %8, %cst_8 [0] : vector<64x8x128xf32> to vector<8x128xf32>
    %11 = arith.addf %9, %10 : vector<8x128xf32>
    %c0_9 = arith.constant 0 : index
    %c0_10 = arith.constant 0 : index
    %12 = vector.load %arg5[%c0_9, %c0_10] : memref<16x128xf32, #tpu.memory_space<vmem>>, vector<8x128xf32>
    tpu.vector_store %arg5[%c0_9, %c0_10], %11 {strides = array<i32>} : memref<16x128xf32, #tpu.memory_space<vmem>>, vector<8x128xf32>,
    %c8 = arith.constant 8 : index
    %c0_11 = arith.constant 0 : index
    %13 = vector.load %arg5[%c8, %c0_11] : memref<16x128xf32, #tpu.memory_space<vmem>>, vector<8x128xf32>
    %14 = arith.mulf %8, %8 : vector<64x8x128xf32>
    %cst_12 = arith.constant dense<0.000000e+00> : vector<8x128xf32>
    %15 = vector.multi_reduction <add>, %14, %cst_12 [0] : vector<64x8x128xf32> to vector<8x128xf32>
    %16 = arith.addf %13, %15 : vector<8x128xf32>
    %c8_13 = arith.constant 8 : index
    %c0_14 = arith.constant 0 : index
    %17 = vector.load %arg5[%c8_13, %c0_14] : memref<16x128xf32, #tpu.memory_space<vmem>>, vector<8x128xf32>
    tpu.vector_store %arg5[%c8_13, %c0_14], %16 {strides = array<i32>} : memref<16x128xf32, #tpu.memory_space<vmem>>, vector<8x128xf32>,
    return
  }
  func.func @transform_0(%arg0: i32, %arg1: i32) -> (i32, i32) {
    %c1_i32 = arith.constant 1 : i32
    %0 = arith.muli %arg0, %c1_i32 : i32
    %1 = arith.addi %0, %arg1 : i32
    %c0_i32 = arith.constant 0 : i32
    %c0_i32_0 = arith.constant 0 : i32
    return %1, %c0_i32 : i32, i32
  }
  func.func @transform_1(%arg0: i32, %arg1: i32) -> (i32, i32) {
    %c0_i32 = arith.constant 0 : i32
    %c0_i32_0 = arith.constant 0 : i32
    %c0_i32_1 = arith.constant 0 : i32
    return %c0_i32, %c0_i32_0 : i32, i32
  }
  func.func @transform_2(%arg0: i32, %arg1: i32) -> (i32, i32) {
    %c1_i32 = arith.constant 1 : i32
    %0 = arith.muli %arg0, %c1_i32 : i32
    %1 = arith.addi %0, %arg1 : i32
    %c0_i32 = arith.constant 0 : i32
    %c0_i32_0 = arith.constant 0 : i32
    return %1, %c0_i32 : i32, i32
  }
  func.func @transform_3(%arg0: i32, %arg1: i32) -> (i32, i32) {
    %c0_i32 = arith.constant 0 : i32
    %c0_i32_0 = arith.constant 0 : i32
    return %arg0, %c0_i32 : i32, i32
  }
}

module attributes {stable_mosaic.version = 11 : i64} {
  func.func @_bn_relu_kernel(%arg0: i32, %arg1: memref<512x128xbf16, #tpu.memory_space<vmem>>, %arg2: memref<1x128xf32, #tpu.memory_space<vmem>>, %arg3: memref<1x128xf32, #tpu.memory_space<vmem>>, %arg4: memref<512x128xf32, #tpu.memory_space<vmem>>) attributes {dimension_semantics = [#tpu.dimension_semantics<parallel>], iteration_bounds = array<i64: 2>, scalar_prefetch = 0 : i64, scratch_operands = 0 : i64, tpu.core_type = #tpu.core_type<tc>, window_params = [{transform_indices = @transform_0, window_bounds = array<i64: 512, 128>}, {pipeline_mode = #tpu.pipeline_mode<synchronous>, transform_indices = @transform_1, window_bounds = array<i64: 1, 128>}, {pipeline_mode = #tpu.pipeline_mode<synchronous>, transform_indices = @transform_2, window_bounds = array<i64: 1, 128>}, {transform_indices = @transform_3, window_bounds = array<i64: 512, 128>}]} {
    %c0 = arith.constant 0 : index
    %c0_0 = arith.constant 0 : index
    %0 = vector.load %arg1[%c0, %c0_0] : memref<512x128xbf16, #tpu.memory_space<vmem>>, vector<512x128xbf16>
    %1 = arith.extf %0 : vector<512x128xbf16> to vector<512x128xf32>
    %c0_1 = arith.constant 0 : index
    %c0_2 = arith.constant 0 : index
    %2 = vector.load %arg2[%c0_1, %c0_2] : memref<1x128xf32, #tpu.memory_space<vmem>>, vector<1x128xf32>
    %3 = vector.broadcast %2 : vector<1x128xf32> to vector<512x128xf32>
    %4 = arith.mulf %1, %3 : vector<512x128xf32>
    %c0_3 = arith.constant 0 : index
    %c0_4 = arith.constant 0 : index
    %5 = vector.load %arg3[%c0_3, %c0_4] : memref<1x128xf32, #tpu.memory_space<vmem>>, vector<1x128xf32>
    %6 = vector.broadcast %5 : vector<1x128xf32> to vector<512x128xf32>
    %7 = arith.addf %4, %6 : vector<512x128xf32>
    %cst = arith.constant 0.000000e+00 : f32
    %8 = vector.broadcast %cst : f32 to vector<512x128xf32>
    %9 = arith.maximumf %7, %8 : vector<512x128xf32>
    %c0_5 = arith.constant 0 : index
    %c0_6 = arith.constant 0 : index
    %10 = vector.load %arg4[%c0_5, %c0_6] : memref<512x128xf32, #tpu.memory_space<vmem>>, vector<512x128xf32>
    tpu.vector_store %arg4[%c0_5, %c0_6], %9 {strides = array<i32>} : memref<512x128xf32, #tpu.memory_space<vmem>>, vector<512x128xf32>,
    return
  }
  func.func @transform_0(%arg0: i32) -> (i32, i32) {
    %c0_i32 = arith.constant 0 : i32
    %c0_i32_0 = arith.constant 0 : i32
    return %arg0, %c0_i32 : i32, i32
  }
  func.func @transform_1(%arg0: i32) -> (i32, i32) {
    %c0_i32 = arith.constant 0 : i32
    %c0_i32_0 = arith.constant 0 : i32
    %c0_i32_1 = arith.constant 0 : i32
    return %c0_i32, %c0_i32_0 : i32, i32
  }
  func.func @transform_2(%arg0: i32) -> (i32, i32) {
    %c0_i32 = arith.constant 0 : i32
    %c0_i32_0 = arith.constant 0 : i32
    %c0_i32_1 = arith.constant 0 : i32
    return %c0_i32, %c0_i32_0 : i32, i32
  }
  func.func @transform_3(%arg0: i32) -> (i32, i32) {
    %c0_i32 = arith.constant 0 : i32
    %c0_i32_0 = arith.constant 0 : i32
    return %arg0, %c0_i32 : i32, i32
  }
}

</mosaic_0001>

<llo_original>
// kernel: ops_forward.5
$region0: #{ops_forward.5}
  #allocation0 [shape = 'u32[]', space=smem, size = 0x4, offset = 0x4, fixed_abs, tag = 'smem constant byte address 0x4 - core index']
  #allocation1 [shape = 'u32[72,128]{1,0:T(1,128)}', space=vmem, size = 0x9000, scoped, tag = 'internal scratch']
  %s0 = inlined_call_operand.vmem [shape: bf16[1024,128], index: 0, kind: input, shape index: {}]
  %s1 = inlined_call_operand.vmem [shape: f32[1,128], index: 1, kind: input, shape index: {}]
  %s2 = inlined_call_operand.vmem [shape: f32[1,128], index: 2, kind: input, shape index: {}]
  %s3 = inlined_call_operand.vmem [shape: bf16[1024,128], index: 3, kind: output, shape index: {}]
  %s4 = sld [smem:[#allocation0]]
  $region45: #{ops_forward.5} parent=0
    _
  %s6 = ssub.s32 1, %s4
  %s7 = scalar_select 0, %s6, %s4
  loop: start=0, step=1, limit=4
  $region2: #{ops_forward.5} parent=0 // loop_pre_header
    _
  $region3: #{ops_forward.5} parent=0 // loop_header
    %s9 = sphi 0, %s13
    %p10 = scmp.ge.s32.totalorder %s9, 4
    %s19 = sphi 0, %s21
    %s22 = sphi 0, %s19
    %s23 = sphi 0, %s22
    %s39 = sphi 0, %s23
    %s43 = sphi 0, %s43
    %s45 = sphi 0, %s43
    %s46 = sphi 0, %s45
    %s60 = sphi 0, %s46
    %s64 = sphi 0, %s64
    %s66 = sphi 0, %s64
    %s67 = sphi 0, %s66
    %s81 = sphi 0, %s67
    %s87 = sphi 0, %s89
    %s90 = sphi 0, %s87
    %s91 = sphi 0, %s90
    %s107 = sphi 0, %s91
  $region4: #{ops_forward.5} parent=0 // loop_header_branch
    %12 = sbr.rel (%p10) target = $region8
  $region5: #{ops_forward.5} parent=0 // loop_body
    %s14 = ssub.s32 %s9, 1
    %s15 = ssub.s32 %s9, 2
    %s16 = sadd.s32 %s9, 1
    %s17 = ssub.s32 %s9, %s16
    %p18 = scmp.eq.s32.totalorder %s17, 0
    %s20 = sadd.s32 %s19, 1
    %s21 = scalar_select %p18, %s19, %s20
    %p24 = pneg %p18
    %p25 = scmp.eq.s32.totalorder %s9, 1
    %p26 = por %p24, %p25
    %p27 = scmp.ne.s32.totalorder %s19, %s22
    %p28 = scmp.eq.s32.totalorder %s9, 0
    %p29 = por %p27, %p28
    %p30 = scmp.ne.s32.totalorder %s19, %s22
    %p31 = scmp.eq.s32.totalorder %s14, 1
    %p32 = por %p30, %p31
    %p33 = scmp.ne.s32.totalorder %s22, %s23
    %p34 = scmp.eq.s32.totalorder %s14, 0
    %p35 = por %p33, %p34
    %p36 = scmp.ne.s32.totalorder %s22, %s23
    %p37 = scmp.eq.s32.totalorder %s15, 1
    %p38 = por %p36, %p37
    %p40 = scmp.ne.s32.totalorder %s23, %s39
    %p41 = scmp.eq.s32.totalorder %s15, 0
    %p42 = por %p40, %p41
    %s44 = sadd.s32 %s43, 1
    %p47 = scmp.eq.s32.totalorder %s9, 1
    %p48 = scmp.ne.s32.totalorder %s43, %s45
    %p49 = scmp.eq.s32.totalorder %s9, 0
    %p50 = por %p48, %p49
    %p51 = scmp.ne.s32.totalorder %s43, %s45
    %p52 = scmp.eq.s32.totalorder %s14, 1
    %p53 = por %p51, %p52
    %p54 = scmp.ne.s32.totalorder %s45, %s46
    %p55 = scmp.eq.s32.totalorder %s14, 0
    %p56 = por %p54, %p55
    %p57 = scmp.ne.s32.totalorder %s45, %s46
    %p58 = scmp.eq.s32.totalorder %s15, 1
    %p59 = por %p57, %p58
    %p61 = scmp.ne.s32.totalorder %s46, %s60
    %p62 = scmp.eq.s32.totalorder %s15, 0
    %p63 = por %p61, %p62
    %s65 = sadd.s32 %s64, 1
    %p68 = scmp.eq.s32.totalorder %s9, 1
    %p69 = scmp.ne.s32.totalorder %s64, %s66
    %p70 = scmp.eq.s32.totalorder %s9, 0
    %p71 = por %p69, %p70
    %p72 = scmp.ne.s32.totalorder %s64, %s66
    %p73 = scmp.eq.s32.totalorder %s14, 1
    %p74 = por %p72, %p73
    %p75 = scmp.ne.s32.totalorder %s66, %s67
    %p76 = scmp.eq.s32.totalorder %s14, 0
    %p77 = por %p75, %p76
    %p78 = scmp.ne.s32.totalorder %s66, %s67
    %p79 = scmp.eq.s32.totalorder %s15, 1
    %p80 = por %p78, %p79
    %p82 = scmp.ne.s32.totalorder %s67, %s81
    %p83 = scmp.eq.s32.totalorder %s15, 0
    %p84 = por %p82, %p83
    %s85 = ssub.s32 %s9, %s16
    %p86 = scmp.eq.s32.totalorder %s85, 0
    %s88 = sadd.s32 %s87, 1
    %s89 = scalar_select %p86, %s87, %s88
    %p92 = pneg %p86
    %p93 = scmp.eq.s32.totalorder %s9, 1
    %p94 = por %p92, %p93
    %p95 = scmp.ne.s32.totalorder %s87, %s90
    %p96 = scmp.eq.s32.totalorder %s9, 0
    %p97 = por %p95, %p96
    %p98 = scmp.ne.s32.totalorder %s87, %s90
    %p99 = scmp.eq.s32.totalorder %s14, 1
    %p100 = por %p98, %p99
    %p101 = scmp.ne.s32.totalorder %s90, %s91
    %p102 = scmp.eq.s32.totalorder %s14, 0
    %p103 = por %p101, %p102
    %p104 = scmp.ne.s32.totalorder %s90, %s91
    %p105 = scmp.eq.s32.totalorder %s15, 1
    %p106 = por %p104, %p105
    %p108 = scmp.ne.s32.totalorder %s91, %s107
    %p109 = scmp.eq.s32.totalorder %s15, 0
    %p110 = por %p108, %p109
    %p111 = scmp.le.s32.totalorder 1, %s9
    %p112 = scmp.lt.s32.totalorder %s9, 3
    %p113 = pnand %p111, %p112
    %p114 = pneg %p113
    // Predicated region
    $region9: #{ops_forward.5} parent=5 // pred_check
      _
    $region10: #{ops_forward.5} parent=5 // pred_check_branch
      %116 = sbr.rel (%p113) target = $region12
    $region11: #{ops_forward.5} parent=5 // pred_region
      %s117 = ssub.s32 %s9, 1
      // Predicated region
      $region13: #{ops_forward.5} parent=11 // pred_check
        %p118 = pneg %p56
      $region14: #{ops_forward.5} parent=11 // pred_check_branch
        %120 = sbr.rel (%p118) target = $region16
      $region15: #{ops_forward.5} parent=11 // pred_region
        _
      $region16: #{ops_forward.5} parent=11 // pred_fallthru
        _
      // Predicated region
      $region17: #{ops_forward.5} parent=11 // pred_check
        %p121 = pneg %p77
      $region18: #{ops_forward.5} parent=11 // pred_check_branch
        %123 = sbr.rel (%p121) target = $region20
      $region19: #{ops_forward.5} parent=11 // pred_region
        _
      $region20: #{ops_forward.5} parent=11 // pred_fallthru
        _
    $region12: #{ops_forward.5} parent=5 // pred_fallthru
      _
    %p124 = scmp.lt.s32.totalorder %s9, 2
    // Predicated region
    $region21: #{ops_forward.5} parent=5 // pred_check
      %p125 = pneg %p124
    $region22: #{ops_forward.5} parent=5 // pred_check_branch
      %127 = sbr.rel (%p125) target = $region24
    $region23: #{ops_forward.5} parent=5 // pred_region
      // Predicated region
      $region25: #{ops_forward.5} parent=23 // pred_check
        %p128 = pneg %p29
      $region26: #{ops_forward.5} parent=23 // pred_check_branch
        %130 = sbr.rel (%p128) target = $region28
      $region27: #{ops_forward.5} parent=23 // pred_region
        %s131 = smul.u32 64, %s9
        %p132 = scmp.lt.s32.totalorder %s131, 127
        %s133 = scalar_select %p132, %s131, 127
        %s134 = smul.addr %s133, 4
        %s135 = scalar_lea.vmem %s0, %s134
        %s136 = smul.u32 64, %s9
      $region28: #{ops_forward.5} parent=23 // pred_fallthru
        _
    $region24: #{ops_forward.5} parent=5 // pred_fallthru
      _
    %p137 = scmp.le.s32.totalorder 1, %s9
    %p138 = scmp.lt.s32.totalorder %s9, 3
    %p139 = pnand %p137, %p138
    %p140 = pneg %p139
    // Predicated region
    $region29: #{ops_forward.5} parent=5 // pred_check
      _
    $region30: #{ops_forward.5} parent=5 // pred_check_branch
      %142 = sbr.rel (%p139) target = $region32
    $region31: #{ops_forward.5} parent=5 // pred_region
      %s143 = ssub.s32 %s9, 1
      %s144 = smul.u32 64, %s14
      %p145 = scmp.lt.s32.totalorder %s144, 127
      %s146 = scalar_select %p145, %s144, 127
      %s147 = smul.addr %s146, 4
      %s148 = scalar_lea.vmem %s0, %s147
      %p149 = pneg %p35
      %p150 = pneg %p32
      %p151 = pneg %p56
      %p152 = pneg %p53
      %p153 = pneg %p77
      %p154 = pneg %p74
      %p155 = pneg %p103
      %p156 = pneg %p100
      %s157 = smul.u32 64, %s14
      %p158 = scmp.lt.s32.totalorder %s157, 127
      %s159 = scalar_select %p158, %s157, 127
      %s160 = smul.addr %s159, 4
      %s161 = scalar_lea.vmem %s3, %s160
      %s162 = smul.u32 64, %s14
      %p163 = scmp.lt.s32.totalorder %s162, 127
      %s164 = scalar_select %p163, %s162, 127
      %s165 = smul.addr %s164, 4
      %s166 = scalar_lea.vmem %s0, %s165
      %s167 = smul.u32 64, %s14
      %s168 = smul.u32 64, %s14
      %p169 = scmp.lt.s32.totalorder %s168, 127
      %s170 = scalar_select %p169, %s168, 127
      %s171 = smul.addr %s170, 4
      %s172 = scalar_lea.vmem %s3, %s171
      %s173 = smul.u32 64, %s14
      %v174 = vld [vmem:[%s166] sm:$0xf]
      %v175 = vld [vmem:[%s166 + $0x4] sm:$0xf]
      %v176 = vld [vmem:[%s166 + $0x8] sm:$0xf]
      %v177 = vld [vmem:[%s166 + $0xc] sm:$0xf]
      %v178 = vld [vmem:[%s166 + $0x10] sm:$0xf]
      %v179 = vld [vmem:[%s166 + $0x14] sm:$0xf]
      %v180 = vld [vmem:[%s166 + $0x18] sm:$0xf]
      %v181 = vld [vmem:[%s166 + $0x1c] sm:$0xf]
      %v182 = vld [vmem:[%s166 + $0x20] sm:$0xf]
      %v183 = vld [vmem:[%s166 + $0x24] sm:$0xf]
      %v184 = vld [vmem:[%s166 + $0x28] sm:$0xf]
      %v185 = vld [vmem:[%s166 + $0x2c] sm:$0xf]
      %v186 = vld [vmem:[%s166 + $0x30] sm:$0xf]
      %v187 = vld [vmem:[%s166 + $0x34] sm:$0xf]
      %v188 = vld [vmem:[%s166 + $0x38] sm:$0xf]
      %v189 = vld [vmem:[%s166 + $0x3c] sm:$0xf]
      %v190 = vld [vmem:[%s166 + $0x40] sm:$0xf]
      %v191 = vld [vmem:[%s166 + $0x44] sm:$0xf]
      %v192 = vld [vmem:[%s166 + $0x48] sm:$0xf]
      %v193 = vld [vmem:[%s166 + $0x4c] sm:$0xf]
      %v194 = vld [vmem:[%s166 + $0x50] sm:$0xf]
      %v195 = vld [vmem:[%s166 + $0x54] sm:$0xf]
      %v196 = vld [vmem:[%s166 + $0x58] sm:$0xf]
      %v197 = vld [vmem:[%s166 + $0x5c] sm:$0xf]
      %v198 = vld [vmem:[%s166 + $0x60] sm:$0xf]
      %v199 = vld [vmem:[%s166 + $0x64] sm:$0xf]
      %v200 = vld [vmem:[%s166 + $0x68] sm:$0xf]
      %v201 = vld [vmem:[%s166 + $0x6c] sm:$0xf]
      %v202 = vld [vmem:[%s166 + $0x70] sm:$0xf]
      %v203 = vld [vmem:[%s166 + $0x74] sm:$0xf]
      %v204 = vld [vmem:[%s166 + $0x78] sm:$0xf]
      %v205 = vld [vmem:[%s166 + $0x7c] sm:$0xf]
      %v206 = vld [vmem:[%s166 + $0x80] sm:$0xf]
      %v207 = vld [vmem:[%s166 + $0x84] sm:$0xf]
      %v208 = vld [vmem:[%s166 + $0x88] sm:$0xf]
      %v209 = vld [vmem:[%s166 + $0x8c] sm:$0xf]
      %v210 = vld [vmem:[%s166 + $0x90] sm:$0xf]
      %v211 = vld [vmem:[%s166 + $0x94] sm:$0xf]
      %v212 = vld [vmem:[%s166 + $0x98] sm:$0xf]
      %v213 = vld [vmem:[%s166 + $0x9c] sm:$0xf]
      %v214 = vld [vmem:[%s166 + $0xa0] sm:$0xf]
      %v215 = vld [vmem:[%s166 + $0xa4] sm:$0xf]
      %v216 = vld [vmem:[%s166 + $0xa8] sm:$0xf]
      %v217 = vld [vmem:[%s166 + $0xac] sm:$0xf]
      %v218 = vld [vmem:[%s166 + $0xb0] sm:$0xf]
      %v219 = vld [vmem:[%s166 + $0xb4] sm:$0xf]
      %v220 = vld [vmem:[%s166 + $0xb8] sm:$0xf]
      %v221 = vld [vmem:[%s166 + $0xbc] sm:$0xf]
      %v222 = vld [vmem:[%s166 + $0xc0] sm:$0xf]
      %v223 = vld [vmem:[%s166 + $0xc4] sm:$0xf]
      %v224 = vld [vmem:[%s166 + $0xc8] sm:$0xf]
      %v225 = vld [vmem:[%s166 + $0xcc] sm:$0xf]
      %v226 = vld [vmem:[%s166 + $0xd0] sm:$0xf]
      %v227 = vld [vmem:[%s166 + $0xd4] sm:$0xf]
      %v228 = vld [vmem:[%s166 + $0xd8] sm:$0xf]
      %v229 = vld [vmem:[%s166 + $0xdc] sm:$0xf]
      %v230 = vld [vmem:[%s166 + $0xe0] sm:$0xf]
      %v231 = vld [vmem:[%s166 + $0xe4] sm:$0xf]
      %v232 = vld [vmem:[%s166 + $0xe8] sm:$0xf]
      %v233 = vld [vmem:[%s166 + $0xec] sm:$0xf]
      %v234 = vld [vmem:[%s166 + $0xf0] sm:$0xf]
      %v235 = vld [vmem:[%s166 + $0xf4] sm:$0xf]
      %v236 = vld [vmem:[%s166 + $0xf8] sm:$0xf]
      %v237 = vld [vmem:[%s166 + $0xfc] sm:$0xf]
      %v238 = vunpack.c.l.bf16 %v174
      %v239 = vunpack.c.l.bf16 %v175
      %v240 = vunpack.c.l.bf16 %v176
      %v241 = vunpack.c.l.bf16 %v177
      %v242 = vunpack.c.l.bf16 %v178
      %v243 = vunpack.c.l.bf16 %v179
      %v244 = vunpack.c.l.bf16 %v180
      %v245 = vunpack.c.l.bf16 %v181
      %v246 = vunpack.c.l.bf16 %v182
      %v247 = vunpack.c.l.bf16 %v183
      %v248 = vunpack.c.l.bf16 %v184
      %v249 = vunpack.c.l.bf16 %v185
      %v250 = vunpack.c.l.bf16 %v186
      %v251 = vunpack.c.l.bf16 %v187
      %v252 = vunpack.c.l.bf16 %v188
      %v253 = vunpack.c.l.bf16 %v189
      %v254 = vunpack.c.l.bf16 %v190
      %v255 = vunpack.c.l.bf16 %v191
      %v256 = vunpack.c.l.bf16 %v192
      %v257 = vunpack.c.l.bf16 %v193
      %v258 = vunpack.c.l.bf16 %v194
      %v259 = vunpack.c.l.bf16 %v195
      %v260 = vunpack.c.l.bf16 %v196
      %v261 = vunpack.c.l.bf16 %v197
      %v262 = vunpack.c.l.bf16 %v198
      %v263 = vunpack.c.l.bf16 %v199
      %v264 = vunpack.c.l.bf16 %v200
      %v265 = vunpack.c.l.bf16 %v201
      %v266 = vunpack.c.l.bf16 %v202
      %v267 = vunpack.c.l.bf16 %v203
      %v268 = vunpack.c.l.bf16 %v204
      %v269 = vunpack.c.l.bf16 %v205
      %v270 = vunpack.c.l.bf16 %v206
      %v271 = vunpack.c.l.bf16 %v207
      %v272 = vunpack.c.l.bf16 %v208
      %v273 = vunpack.c.l.bf16 %v209
      %v274 = vunpack.c.l.bf16 %v210
      %v275 = vunpack.c.l.bf16 %v211
      %v276 = vunpack.c.l.bf16 %v212
      %v277 = vunpack.c.l.bf16 %v213
      %v278 = vunpack.c.l.bf16 %v214
      %v279 = vunpack.c.l.bf16 %v215
      %v280 = vunpack.c.l.bf16 %v216
      %v281 = vunpack.c.l.bf16 %v217
      %v282 = vunpack.c.l.bf16 %v218
      %v283 = vunpack.c.l.bf16 %v219
      %v284 = vunpack.c.l.bf16 %v220
      %v285 = vunpack.c.l.bf16 %v221
      %v286 = vunpack.c.l.bf16 %v222
      %v287 = vunpack.c.l.bf16 %v223
      %v288 = vunpack.c.l.bf16 %v224
      %v289 = vunpack.c.l.bf16 %v225
      %v290 = vunpack.c.l.bf16 %v226
      %v291 = vunpack.c.l.bf16 %v227
      %v292 = vunpack.c.l.bf16 %v228
      %v293 = vunpack.c.l.bf16 %v229
      %v294 = vunpack.c.l.bf16 %v230
      %v295 = vunpack.c.l.bf16 %v231
      %v296 = vunpack.c.l.bf16 %v232
      %v297 = vunpack.c.l.bf16 %v233
      %v298 = vunpack.c.l.bf16 %v234
      %v299 = vunpack.c.l.bf16 %v235
      %v300 = vunpack.c.l.bf16 %v236
      %v301 = vunpack.c.l.bf16 %v237
      %v302 = vld [vmem:[%s1] sm:$0x1]
      %v304 = vperm.slane %v302, 0
      %v306 = vmul.f32 %v238, %v304
      %v307 = vmul.f32 %v239, %v304
      %v308 = vmul.f32 %v240, %v304
      %v309 = vmul.f32 %v241, %v304
      %v310 = vmul.f32 %v242, %v304
      %v311 = vmul.f32 %v243, %v304
      %v312 = vmul.f32 %v244, %v304
      %v313 = vmul.f32 %v245, %v304
      %v314 = vmul.f32 %v246, %v304
      %v315 = vmul.f32 %v247, %v304
      %v316 = vmul.f32 %v248, %v304
      %v317 = vmul.f32 %v249, %v304
      %v318 = vmul.f32 %v250, %v304
      %v319 = vmul.f32 %v251, %v304
      %v320 = vmul.f32 %v252, %v304
      %v321 = vmul.f32 %v253, %v304
      %v322 = vmul.f32 %v254, %v304
      %v323 = vmul.f32 %v255, %v304
      %v324 = vmul.f32 %v256, %v304
      %v325 = vmul.f32 %v257, %v304
      %v326 = vmul.f32 %v258, %v304
      %v327 = vmul.f32 %v259, %v304
      %v328 = vmul.f32 %v260, %v304
      %v329 = vmul.f32 %v261, %v304
      %v330 = vmul.f32 %v262, %v304
      %v331 = vmul.f32 %v263, %v304
      %v332 = vmul.f32 %v264, %v304
      %v333 = vmul.f32 %v265, %v304
      %v334 = vmul.f32 %v266, %v304
      %v335 = vmul.f32 %v267, %v304
      %v336 = vmul.f32 %v268, %v304
      %v337 = vmul.f32 %v269, %v304
      %v338 = vmul.f32 %v270, %v304
      %v339 = vmul.f32 %v271, %v304
      %v340 = vmul.f32 %v272, %v304
      %v341 = vmul.f32 %v273, %v304
      %v342 = vmul.f32 %v274, %v304
      %v343 = vmul.f32 %v275, %v304
      %v344 = vmul.f32 %v276, %v304
      %v345 = vmul.f32 %v277, %v304
      %v346 = vmul.f32 %v278, %v304
      %v347 = vmul.f32 %v279, %v304
      %v348 = vmul.f32 %v280, %v304
      %v349 = vmul.f32 %v281, %v304
      %v350 = vmul.f32 %v282, %v304
      %v351 = vmul.f32 %v283, %v304
      %v352 = vmul.f32 %v284, %v304
      %v353 = vmul.f32 %v285, %v304
      %v354 = vmul.f32 %v286, %v304
      %v355 = vmul.f32 %v287, %v304
      %v356 = vmul.f32 %v288, %v304
      %v357 = vmul.f32 %v289, %v304
      %v358 = vmul.f32 %v290, %v304
      %v359 = vmul.f32 %v291, %v304
      %v360 = vmul.f32 %v292, %v304
      %v361 = vmul.f32 %v293, %v304
      %v362 = vmul.f32 %v294, %v304
      %v363 = vmul.f32 %v295, %v304
      %v364 = vmul.f32 %v296, %v304
      %v365 = vmul.f32 %v297, %v304
      %v366 = vmul.f32 %v298, %v304
      %v367 = vmul.f32 %v299, %v304
      %v368 = vmul.f32 %v300, %v304
      %v369 = vmul.f32 %v301, %v304
      %v370 = vld [vmem:[%s2] sm:$0x1]
      %v372 = vperm.slane %v370, 0
      %v374 = vadd.f32 %v306, %v372
      %v375 = vadd.f32 %v307, %v372
      %v376 = vadd.f32 %v308, %v372
      %v377 = vadd.f32 %v309, %v372
      %v378 = vadd.f32 %v310, %v372
      %v379 = vadd.f32 %v311, %v372
      %v380 = vadd.f32 %v312, %v372
      %v381 = vadd.f32 %v313, %v372
      %v382 = vadd.f32 %v314, %v372
      %v383 = vadd.f32 %v315, %v372
      %v384 = vadd.f32 %v316, %v372
      %v385 = vadd.f32 %v317, %v372
      %v386 = vadd.f32 %v318, %v372
      %v387 = vadd.f32 %v319, %v372
      %v388 = vadd.f32 %v320, %v372
      %v389 = vadd.f32 %v321, %v372
      %v390 = vadd.f32 %v322, %v372
      %v391 = vadd.f32 %v323, %v372
      %v392 = vadd.f32 %v324, %v372
      %v393 = vadd.f32 %v325, %v372
      %v394 = vadd.f32 %v326, %v372
      %v395 = vadd.f32 %v327, %v372
      %v396 = vadd.f32 %v328, %v372
      %v397 = vadd.f32 %v329, %v372
      %v398 = vadd.f32 %v330, %v372
      %v399 = vadd.f32 %v331, %v372
      %v400 = vadd.f32 %v332, %v372
      %v401 = vadd.f32 %v333, %v372
      %v402 = vadd.f32 %v334, %v372
      %v403 = vadd.f32 %v335, %v372
      %v404 = vadd.f32 %v336, %v372
      %v405 = vadd.f32 %v337, %v372
      %v406 = vadd.f32 %v338, %v372
      %v407 = vadd.f32 %v339, %v372
      %v408 = vadd.f32 %v340, %v372
      %v409 = vadd.f32 %v341, %v372
      %v410 = vadd.f32 %v342, %v372
      %v411 = vadd.f32 %v343, %v372
      %v412 = vadd.f32 %v344, %v372
      %v413 = vadd.f32 %v345, %v372
      %v414 = vadd.f32 %v346, %v372
      %v415 = vadd.f32 %v347, %v372
      %v416 = vadd.f32 %v348, %v372
      %v417 = vadd.f32 %v349, %v372
      %v418 = vadd.f32 %v350, %v372
      %v419 = vadd.f32 %v351, %v372
      %v420 = vadd.f32 %v352, %v372
      %v421 = vadd.f32 %v353, %v372
      %v422 = vadd.f32 %v354, %v372
      %v423 = vadd.f32 %v355, %v372
      %v424 = vadd.f32 %v356, %v372
      %v425 = vadd.f32 %v357, %v372
      %v426 = vadd.f32 %v358, %v372
      %v427 = vadd.f32 %v359, %v372
      %v428 = vadd.f32 %v360, %v372
      %v429 = vadd.f32 %v361, %v372
      %v430 = vadd.f32 %v362, %v372
      %v431 = vadd.f32 %v363, %v372
      %v432 = vadd.f32 %v364, %v372
      %v433 = vadd.f32 %v365, %v372
      %v434 = vadd.f32 %v366, %v372
      %v435 = vadd.f32 %v367, %v372
      %v436 = vadd.f32 %v368, %v372
      %v437 = vadd.f32 %v369, %v372
      %v438 = vmax.f32 %v374, 0.0
      %v439 = vmax.f32 %v375, 0.0
      %v440 = vmax.f32 %v376, 0.0
      %v441 = vmax.f32 %v377, 0.0
      %v442 = vmax.f32 %v378, 0.0
      %v443 = vmax.f32 %v379, 0.0
      %v444 = vmax.f32 %v380, 0.0
      %v445 = vmax.f32 %v381, 0.0
      %v446 = vmax.f32 %v382, 0.0
      %v447 = vmax.f32 %v383, 0.0
      %v448 = vmax.f32 %v384, 0.0
      %v449 = vmax.f32 %v385, 0.0
      %v450 = vmax.f32 %v386, 0.0
      %v451 = vmax.f32 %v387, 0.0
      %v452 = vmax.f32 %v388, 0.0
      %v453 = vmax.f32 %v389, 0.0
      %v454 = vmax.f32 %v390, 0.0
      %v455 = vmax.f32 %v391, 0.0
      %v456 = vmax.f32 %v392, 0.0
      %v457 = vmax.f32 %v393, 0.0
      %v458 = vmax.f32 %v394, 0.0
      %v459 = vmax.f32 %v395, 0.0
      %v460 = vmax.f32 %v396, 0.0
      %v461 = vmax.f32 %v397, 0.0
      %v462 = vmax.f32 %v398, 0.0
      %v463 = vmax.f32 %v399, 0.0
      %v464 = vmax.f32 %v400, 0.0
      %v465 = vmax.f32 %v401, 0.0
      %v466 = vmax.f32 %v402, 0.0
      %v467 = vmax.f32 %v403, 0.0
      %v468 = vmax.f32 %v404, 0.0
      %v469 = vmax.f32 %v405, 0.0
      %v470 = vmax.f32 %v406, 0.0
      %v471 = vmax.f32 %v407, 0.0
      %v472 = vmax.f32 %v408, 0.0
      %v473 = vmax.f32 %v409, 0.0
      %v474 = vmax.f32 %v410, 0.0
      %v475 = vmax.f32 %v411, 0.0
      %v476 = vmax.f32 %v412, 0.0
      %v477 = vmax.f32 %v413, 0.0
      %v478 = vmax.f32 %v414, 0.0
      %v479 = vmax.f32 %v415, 0.0
      %v480 = vmax.f32 %v416, 0.0
      %v481 = vmax.f32 %v417, 0.0
      %v482 = vmax.f32 %v418, 0.0
      %v483 = vmax.f32 %v419, 0.0
      %v484 = vmax.f32 %v420, 0.0
      %v485 = vmax.f32 %v421, 0.0
      %v486 = vmax.f32 %v422, 0.0
      %v487 = vmax.f32 %v423, 0.0
      %v488 = vmax.f32 %v424, 0.0
      %v489 = vmax.f32 %v425, 0.0
      %v490 = vmax.f32 %v426, 0.0
      %v491 = vmax.f32 %v427, 0.0
      %v492 = vmax.f32 %v428, 0.0
      %v493 = vmax.f32 %v429, 0.0
      %v494 = vmax.f32 %v430, 0.0
      %v495 = vmax.f32 %v431, 0.0
      %v496 = vmax.f32 %v432, 0.0
      %v497 = vmax.f32 %v433, 0.0
      %v498 = vmax.f32 %v434, 0.0
      %v499 = vmax.f32 %v435, 0.0
      %v500 = vmax.f32 %v436, 0.0
      %v501 = vmax.f32 %v437, 0.0
      %v502 = vpack.c.bf16 %v438, %v438
      %v503 = vpack.c.bf16 %v439, %v439
      %v504 = vpack.c.bf16 %v440, %v440
      %v505 = vpack.c.bf16 %v441, %v441
      %v506 = vpack.c.bf16 %v442, %v442
      %v507 = vpack.c.bf16 %v443, %v443
      %v508 = vpack.c.bf16 %v444, %v444
      %v509 = vpack.c.bf16 %v445, %v445
      %v510 = vpack.c.bf16 %v446, %v446
      %v511 = vpack.c.bf16 %v447, %v447
      %v512 = vpack.c.bf16 %v448, %v448
      %v513 = vpack.c.bf16 %v449, %v449
      %v514 = vpack.c.bf16 %v450, %v450
      %v515 = vpack.c.bf16 %v451, %v451
      %v516 = vpack.c.bf16 %v452, %v452
      %v517 = vpack.c.bf16 %v453, %v453
      %v518 = vpack.c.bf16 %v454, %v454
      %v519 = vpack.c.bf16 %v455, %v455
      %v520 = vpack.c.bf16 %v456, %v456
      %v521 = vpack.c.bf16 %v457, %v457
      %v522 = vpack.c.bf16 %v458, %v458
      %v523 = vpack.c.bf16 %v459, %v459
      %v524 = vpack.c.bf16 %v460, %v460
      %v525 = vpack.c.bf16 %v461, %v461
      %v526 = vpack.c.bf16 %v462, %v462
      %v527 = vpack.c.bf16 %v463, %v463
      %v528 = vpack.c.bf16 %v464, %v464
      %v529 = vpack.c.bf16 %v465, %v465
      %v530 = vpack.c.bf16 %v466, %v466
      %v531 = vpack.c.bf16 %v467, %v467
      %v532 = vpack.c.bf16 %v468, %v468
      %v533 = vpack.c.bf16 %v469, %v469
      %v534 = vpack.c.bf16 %v470, %v470
      %v535 = vpack.c.bf16 %v471, %v471
      %v536 = vpack.c.bf16 %v472, %v472
      %v537 = vpack.c.bf16 %v473, %v473
      %v538 = vpack.c.bf16 %v474, %v474
      %v539 = vpack.c.bf16 %v475, %v475
      %v540 = vpack.c.bf16 %v476, %v476
      %v541 = vpack.c.bf16 %v477, %v477
      %v542 = vpack.c.bf16 %v478, %v478
      %v543 = vpack.c.bf16 %v479, %v479
      %v544 = vpack.c.bf16 %v480, %v480
      %v545 = vpack.c.bf16 %v481, %v481
      %v546 = vpack.c.bf16 %v482, %v482
      %v547 = vpack.c.bf16 %v483, %v483
      %v548 = vpack.c.bf16 %v484, %v484
      %v549 = vpack.c.bf16 %v485, %v485
      %v550 = vpack.c.bf16 %v486, %v486
      %v551 = vpack.c.bf16 %v487, %v487
      %v552 = vpack.c.bf16 %v488, %v488
      %v553 = vpack.c.bf16 %v489, %v489
      %v554 = vpack.c.bf16 %v490, %v490
      %v555 = vpack.c.bf16 %v491, %v491
      %v556 = vpack.c.bf16 %v492, %v492
      %v557 = vpack.c.bf16 %v493, %v493
      %v558 = vpack.c.bf16 %v494, %v494
      %v559 = vpack.c.bf16 %v495, %v495
      %v560 = vpack.c.bf16 %v496, %v496
      %v561 = vpack.c.bf16 %v497, %v497
      %v562 = vpack.c.bf16 %v498, %v498
      %v563 = vpack.c.bf16 %v499, %v499
      %v564 = vpack.c.bf16 %v500, %v500
      %v565 = vpack.c.bf16 %v501, %v501
      %566 = vst [vmem:[%s172] sm:$0xf] %v502
      %567 = vst [vmem:[%s172 + $0x4] sm:$0xf] %v503
      %568 = vst [vmem:[%s172 + $0x8] sm:$0xf] %v504
      %569 = vst [vmem:[%s172 + $0xc] sm:$0xf] %v505
      %570 = vst [vmem:[%s172 + $0x10] sm:$0xf] %v506
      %571 = vst [vmem:[%s172 + $0x14] sm:$0xf] %v507
      %572 = vst [vmem:[%s172 + $0x18] sm:$0xf] %v508
      %573 = vst [vmem:[%s172 + $0x1c] sm:$0xf] %v509
      %574 = vst [vmem:[%s172 + $0x20] sm:$0xf] %v510
      %575 = vst [vmem:[%s172 + $0x24] sm:$0xf] %v511
      %576 = vst [vmem:[%s172 + $0x28] sm:$0xf] %v512
      %577 = vst [vmem:[%s172 + $0x2c] sm:$0xf] %v513
      %578 = vst [vmem:[%s172 + $0x30] sm:$0xf] %v514
      %579 = vst [vmem:[%s172 + $0x34] sm:$0xf] %v515
      %580 = vst [vmem:[%s172 + $0x38] sm:$0xf] %v516
      %581 = vst [vmem:[%s172 + $0x3c] sm:$0xf] %v517
      %582 = vst [vmem:[%s172 + $0x40] sm:$0xf] %v518
      %583 = vst [vmem:[%s172 + $0x44] sm:$0xf] %v519
      %584 = vst [vmem:[%s172 + $0x48] sm:$0xf] %v520
      %585 = vst [vmem:[%s172 + $0x4c] sm:$0xf] %v521
      %586 = vst [vmem:[%s172 + $0x50] sm:$0xf] %v522
      %587 = vst [vmem:[%s172 + $0x54] sm:$0xf] %v523
      %588 = vst [vmem:[%s172 + $0x58] sm:$0xf] %v524
      %589 = vst [vmem:[%s172 + $0x5c] sm:$0xf] %v525
      %590 = vst [vmem:[%s172 + $0x60] sm:$0xf] %v526
      %591 = vst [vmem:[%s172 + $0x64] sm:$0xf] %v527
      %592 = vst [vmem:[%s172 + $0x68] sm:$0xf] %v528
      %593 = vst [vmem:[%s172 + $0x6c] sm:$0xf] %v529
      %594 = vst [vmem:[%s172 + $0x70] sm:$0xf] %v530
      %595 = vst [vmem:[%s172 + $0x74] sm:$0xf] %v531
      %596 = vst [vmem:[%s172 + $0x78] sm:$0xf] %v532
      %597 = vst [vmem:[%s172 + $0x7c] sm:$0xf] %v533
      %598 = vst [vmem:[%s172 + $0x80] sm:$0xf] %v534
      %599 = vst [vmem:[%s172 + $0x84] sm:$0xf] %v535
      %600 = vst [vmem:[%s172 + $0x88] sm:$0xf] %v536
      %601 = vst [vmem:[%s172 + $0x8c] sm:$0xf] %v537
      %602 = vst [vmem:[%s172 + $0x90] sm:$0xf] %v538
      %603 = vst [vmem:[%s172 + $0x94] sm:$0xf] %v539
      %604 = vst [vmem:[%s172 + $0x98] sm:$0xf] %v540
      %605 = vst [vmem:[%s172 + $0x9c] sm:$0xf] %v541
      %606 = vst [vmem:[%s172 + $0xa0] sm:$0xf] %v542
      %607 = vst [vmem:[%s172 + $0xa4] sm:$0xf] %v543
      %608 = vst [vmem:[%s172 + $0xa8] sm:$0xf] %v544
      %609 = vst [vmem:[%s172 + $0xac] sm:$0xf] %v545
      %610 = vst [vmem:[%s172 + $0xb0] sm:$0xf] %v546
      %611 = vst [vmem:[%s172 + $0xb4] sm:$0xf] %v547
      %612 = vst [vmem:[%s172 + $0xb8] sm:$0xf] %v548
      %613 = vst [vmem:[%s172 + $0xbc] sm:$0xf] %v549
      %614 = vst [vmem:[%s172 + $0xc0] sm:$0xf] %v550
      %615 = vst [vmem:[%s172 + $0xc4] sm:$0xf] %v551
      %616 = vst [vmem:[%s172 + $0xc8] sm:$0xf] %v552
      %617 = vst [vmem:[%s172 + $0xcc] sm:$0xf] %v553
      %618 = vst [vmem:[%s172 + $0xd0] sm:$0xf] %v554
      %619 = vst [vmem:[%s172 + $0xd4] sm:$0xf] %v555
      %620 = vst [vmem:[%s172 + $0xd8] sm:$0xf] %v556
      %621 = vst [vmem:[%s172 + $0xdc] sm:$0xf] %v557
      %622 = vst [vmem:[%s172 + $0xe0] sm:$0xf] %v558
      %623 = vst [vmem:[%s172 + $0xe4] sm:$0xf] %v559
      %624 = vst [vmem:[%s172 + $0xe8] sm:$0xf] %v560
      %625 = vst [vmem:[%s172 + $0xec] sm:$0xf] %v561
      %626 = vst [vmem:[%s172 + $0xf0] sm:$0xf] %v562
      %627 = vst [vmem:[%s172 + $0xf4] sm:$0xf] %v563
      %628 = vst [vmem:[%s172 + $0xf8] sm:$0xf] %v564
      %629 = vst [vmem:[%s172 + $0xfc] sm:$0xf] %v565
      %s630 = smul.u32 64, %s14
      %p631 = scmp.lt.s32.totalorder %s630, 127
      %s632 = scalar_select %p631, %s630, 127
      %s633 = smul.addr %s632, 4
      %s634 = scalar_lea.vmem %s3, %s633
      // Predicated region
      $region33: #{ops_forward.5} parent=31 // pred_check
        %p635 = pneg %p100
      $region34: #{ops_forward.5} parent=31 // pred_check_branch
        %637 = sbr.rel (%p635) target = $region36
      $region35: #{ops_forward.5} parent=31 // pred_region
        %s638 = smul.u32 64, %s14
      $region36: #{ops_forward.5} parent=31 // pred_fallthru
        _
    $region32: #{ops_forward.5} parent=5 // pred_fallthru
      _
    %p639 = scmp.le.s32.totalorder 2, %s9
    // Predicated region
    $region37: #{ops_forward.5} parent=5 // pred_check
      %p640 = pneg %p639
    $region38: #{ops_forward.5} parent=5 // pred_check_branch
      %642 = sbr.rel (%p640) target = $region40
    $region39: #{ops_forward.5} parent=5 // pred_region
      %s643 = ssub.s32 %s9, 2
      // Predicated region
      $region41: #{ops_forward.5} parent=39 // pred_check
        %p644 = pneg %p106
      $region42: #{ops_forward.5} parent=39 // pred_check_branch
        %646 = sbr.rel (%p644) target = $region44
      $region43: #{ops_forward.5} parent=39 // pred_region
        %s647 = smul.u32 64, %s15
        %p648 = scmp.lt.s32.totalorder %s647, 127
        %s649 = scalar_select %p648, %s647, 127
        %s650 = smul.addr %s649, 4
        %s651 = scalar_lea.vmem %s3, %s650
      $region44: #{ops_forward.5} parent=39 // pred_fallthru
        _
    $region40: #{ops_forward.5} parent=5 // pred_fallthru
      _
  $region6: #{ops_forward.5} parent=0 // loop_footer
    %s13 = sadd.s32 1, %s9
  $region7: #{ops_forward.5} parent=0 // loop_footer_branch
    %8 = sbr.rel target = $region3
  $region8: #{ops_forward.5} parent=0 // loop_exit
    _

// kernel: ops_forward.4
$region0: #{ops_forward.4}
  #allocation0 [shape = 'u32[]', space=smem, size = 0x4, offset = 0x4, fixed_abs, tag = 'smem constant byte address 0x4 - core index']
  #allocation1 [shape = 'u32[72,128]{1,0:T(1,128)}', space=vmem, size = 0x9000, scoped, tag = 'internal scratch']
  %s0 = inlined_call_operand.vmem [shape: bf16[1024,128], index: 0, kind: input, shape index: {}]
  %s1 = inlined_call_operand.vmem [shape: bf16[128,128], index: 1, kind: input, shape index: {}]
  %s2 = inlined_call_operand.vmem [shape: bf16[1024,128], index: 2, kind: output, shape index: {0}]
  %s3 = inlined_call_operand.vmem [shape: f32[32,128], index: 3, kind: output, shape index: {1}]
  %4 = xla_tuple %s2, %s3
  %s5 = sld [smem:[#allocation0]]
  $region53: #{ops_forward.4} parent=0
    _
  %s7 = ssub.s32 1, %s5
  %s8 = scalar_select 0, %s7, %s5
  loop: start=0, step=1, limit=4
  $region2: #{ops_forward.4} parent=0 // loop_pre_header
    _
  $region3: #{ops_forward.4} parent=0 // loop_header
    %s10 = sphi 0, %s14
    %p11 = scmp.ge.s32.totalorder %s10, 4
    %s17 = sphi 0, %s29
    %s18 = sphi 0, %s25
    %s19 = sphi 0, %s17
    %s20 = sphi 0, %s18
    %s21 = sphi 0, %s19
    %s22 = sphi 0, %s20
    %s34 = sphi 0, %s36
    %s37 = sphi 0, %s34
    %s38 = sphi 0, %s37
    %s54 = sphi 0, %s38
    %s58 = sphi 0, %s58
    %s60 = sphi 0, %s58
    %s61 = sphi 0, %s60
    %s75 = sphi 0, %s61
    %s83 = sphi 0, %s85
    %s86 = sphi 0, %s83
    %s87 = sphi 0, %s86
    %s103 = sphi 0, %s87
    %s109 = sphi 0, %s111
    %s112 = sphi 0, %s109
    %s113 = sphi 0, %s112
    %s129 = sphi 0, %s113
  $region4: #{ops_forward.4} parent=0 // loop_header_branch
    %13 = sbr.rel (%p11) target = $region8
  $region5: #{ops_forward.4} parent=0 // loop_body
    %s15 = ssub.s32 %s10, 1
    %s16 = ssub.s32 %s10, 2
    %s23 = sadd.s32 1, %s18
    %p24 = scmp.ge.s32.totalorder %s23, 1
    %s25 = scalar_select %p24, 0, %s23
    %s26 = sadd.s32 1, %s17
    %s27 = scalar_select %p24, %s26, %s17
    %p28 = scmp.ge.s32.totalorder %s27, 2
    %s29 = scalar_select %p28, 0, %s27
    %s30 = sadd.s32 %s17, %s18
    %s31 = sadd.s32 %s29, %s25
    %s32 = ssub.s32 %s30, %s31
    %p33 = scmp.eq.s32.totalorder %s32, 0
    %s35 = sadd.s32 %s34, 1
    %s36 = scalar_select %p33, %s34, %s35
    %p39 = pneg %p33
    %p40 = scmp.eq.s32.totalorder %s10, 1
    %p41 = por %p39, %p40
    %p42 = scmp.ne.s32.totalorder %s34, %s37
    %p43 = scmp.eq.s32.totalorder %s10, 0
    %p44 = por %p42, %p43
    %p45 = scmp.ne.s32.totalorder %s34, %s37
    %p46 = scmp.eq.s32.totalorder %s15, 1
    %p47 = por %p45, %p46
    %p48 = scmp.ne.s32.totalorder %s37, %s38
    %p49 = scmp.eq.s32.totalorder %s15, 0
    %p50 = por %p48, %p49
    %p51 = scmp.ne.s32.totalorder %s37, %s38
    %p52 = scmp.eq.s32.totalorder %s16, 1
    %p53 = por %p51, %p52
    %p55 = scmp.ne.s32.totalorder %s38, %s54
    %p56 = scmp.eq.s32.totalorder %s16, 0
    %p57 = por %p55, %p56
    %s59 = sadd.s32 %s58, 1
    %p62 = scmp.eq.s32.totalorder %s10, 1
    %p63 = scmp.ne.s32.totalorder %s58, %s60
    %p64 = scmp.eq.s32.totalorder %s10, 0
    %p65 = por %p63, %p64
    %p66 = scmp.ne.s32.totalorder %s58, %s60
    %p67 = scmp.eq.s32.totalorder %s15, 1
    %p68 = por %p66, %p67
    %p69 = scmp.ne.s32.totalorder %s60, %s61
    %p70 = scmp.eq.s32.totalorder %s15, 0
    %p71 = por %p69, %p70
    %p72 = scmp.ne.s32.totalorder %s60, %s61
    %p73 = scmp.eq.s32.totalorder %s16, 1
    %p74 = por %p72, %p73
    %p76 = scmp.ne.s32.totalorder %s61, %s75
    %p77 = scmp.eq.s32.totalorder %s16, 0
    %p78 = por %p76, %p77
    %s79 = sadd.s32 %s17, %s18
    %s80 = sadd.s32 %s29, %s25
    %s81 = ssub.s32 %s79, %s80
    %p82 = scmp.eq.s32.totalorder %s81, 0
    %s84 = sadd.s32 %s83, 1
    %s85 = scalar_select %p82, %s83, %s84
    %p88 = pneg %p82
    %p89 = scmp.eq.s32.totalorder %s10, 1
    %p90 = por %p88, %p89
    %p91 = scmp.ne.s32.totalorder %s83, %s86
    %p92 = scmp.eq.s32.totalorder %s10, 0
    %p93 = por %p91, %p92
    %p94 = scmp.ne.s32.totalorder %s83, %s86
    %p95 = scmp.eq.s32.totalorder %s15, 1
    %p96 = por %p94, %p95
    %p97 = scmp.ne.s32.totalorder %s86, %s87
    %p98 = scmp.eq.s32.totalorder %s15, 0
    %p99 = por %p97, %p98
    %p100 = scmp.ne.s32.totalorder %s86, %s87
    %p101 = scmp.eq.s32.totalorder %s16, 1
    %p102 = por %p100, %p101
    %p104 = scmp.ne.s32.totalorder %s87, %s103
    %p105 = scmp.eq.s32.totalorder %s16, 0
    %p106 = por %p104, %p105
    %s107 = ssub.s32 %s17, %s29
    %p108 = scmp.eq.s32.totalorder %s107, 0
    %s110 = sadd.s32 %s109, 1
    %s111 = scalar_select %p108, %s109, %s110
    %p114 = pneg %p108
    %p115 = scmp.eq.s32.totalorder %s10, 1
    %p116 = por %p114, %p115
    %p117 = scmp.ne.s32.totalorder %s109, %s112
    %p118 = scmp.eq.s32.totalorder %s10, 0
    %p119 = por %p117, %p118
    %p120 = scmp.ne.s32.totalorder %s109, %s112
    %p121 = scmp.eq.s32.totalorder %s15, 1
    %p122 = por %p120, %p121
    %p123 = scmp.ne.s32.totalorder %s112, %s113
    %p124 = scmp.eq.s32.totalorder %s15, 0
    %p125 = por %p123, %p124
    %p126 = scmp.ne.s32.totalorder %s112, %s113
    %p127 = scmp.eq.s32.totalorder %s16, 1
    %p128 = por %p126, %p127
    %p130 = scmp.ne.s32.totalorder %s113, %s129
    %p131 = scmp.eq.s32.totalorder %s16, 0
    %p132 = por %p130, %p131
    %p133 = scmp.le.s32.totalorder 1, %s10
    %p134 = scmp.lt.s32.totalorder %s10, 3
    %p135 = pnand %p133, %p134
    %p136 = pneg %p135
    // Predicated region
    $region9: #{ops_forward.4} parent=5 // pred_check
      _
    $region10: #{ops_forward.4} parent=5 // pred_check_branch
      %138 = sbr.rel (%p135) target = $region12
    $region11: #{ops_forward.4} parent=5 // pred_region
      %s139 = ssub.s32 %s10, 1
      // Predicated region
      $region13: #{ops_forward.4} parent=11 // pred_check
        %p140 = pneg %p71
      $region14: #{ops_forward.4} parent=11 // pred_check_branch
        %142 = sbr.rel (%p140) target = $region16
      $region15: #{ops_forward.4} parent=11 // pred_region
        _
      $region16: #{ops_forward.4} parent=11 // pred_fallthru
        _
    $region12: #{ops_forward.4} parent=5 // pred_fallthru
      _
    %p143 = scmp.lt.s32.totalorder %s10, 2
    // Predicated region
    $region17: #{ops_forward.4} parent=5 // pred_check
      %p144 = pneg %p143
    $region18: #{ops_forward.4} parent=5 // pred_check_branch
      %146 = sbr.rel (%p144) target = $region20
    $region19: #{ops_forward.4} parent=5 // pred_region
      // Predicated region
      $region21: #{ops_forward.4} parent=19 // pred_check
        %p147 = pneg %p44
      $region22: #{ops_forward.4} parent=19 // pred_check_branch
        %149 = sbr.rel (%p147) target = $region24
      $region23: #{ops_forward.4} parent=19 // pred_region
        %s150 = sadd.s32 %s17, %s18
        %s151 = smul.u32 64, %s150
        %p152 = scmp.lt.s32.totalorder %s151, 127
        %s153 = scalar_select %p152, %s151, 127
        %s154 = smul.addr %s153, 4
        %s155 = scalar_lea.vmem %s0, %s154
        %s156 = sadd.s32 %s17, %s18
        %s157 = smul.u32 64, %s156
      $region24: #{ops_forward.4} parent=19 // pred_fallthru
        _
    $region20: #{ops_forward.4} parent=5 // pred_fallthru
      _
    %p158 = scmp.le.s32.totalorder 1, %s10
    %p159 = scmp.lt.s32.totalorder %s10, 3
    %p160 = pnand %p158, %p159
    %p161 = pneg %p160
    // Predicated region
    $region25: #{ops_forward.4} parent=5 // pred_check
      _
    $region26: #{ops_forward.4} parent=5 // pred_check_branch
      %163 = sbr.rel (%p160) target = $region28
    $region27: #{ops_forward.4} parent=5 // pred_region
      %s164 = ssub.s32 %s10, 1
      %s165 = sadd.s32 %s19, %s20
      %s166 = smul.u32 64, %s165
      %p167 = scmp.lt.s32.totalorder %s166, 127
      %s168 = scalar_select %p167, %s166, 127
      %s169 = smul.addr %s168, 4
      %s170 = scalar_lea.vmem %s0, %s169
      %p171 = pneg %p50
      %p172 = pneg %p47
      %p173 = pneg %p71
      %p174 = pneg %p68
      %p175 = pneg %p99
      %p176 = pneg %p96
      %s177 = sadd.s32 %s19, %s20
      %s178 = smul.u32 64, %s177
      %p179 = scmp.lt.s32.totalorder %s178, 127
      %s180 = scalar_select %p179, %s178, 127
      %s181 = smul.addr %s180, 4
      %s182 = scalar_lea.vmem %s2, %s181
      %p183 = pneg %p125
      %p184 = pneg %p122
      %s185 = smul.u32 2, %s19
      %p186 = scmp.lt.s32.totalorder %s185, 3
      %s187 = scalar_select %p186, %s185, 3
      %s188 = smul.addr %s187, 8
      %s189 = scalar_lea.vmem %s3, %s188
      %s190 = sadd.s32 %s19, %s20
      %s191 = smul.u32 64, %s190
      %p192 = scmp.lt.s32.totalorder %s191, 127
      %s193 = scalar_select %p192, %s191, 127
      %s194 = smul.addr %s193, 4
      %s195 = scalar_lea.vmem %s0, %s194
      %s196 = sadd.s32 %s19, %s20
      %s197 = smul.u32 64, %s196
      %s198 = sadd.s32 %s19, %s20
      %s199 = smul.u32 64, %s198
      %p200 = scmp.lt.s32.totalorder %s199, 127
      %s201 = scalar_select %p200, %s199, 127
      %s202 = smul.addr %s201, 4
      %s203 = scalar_lea.vmem %s2, %s202
      %s204 = sadd.s32 %s19, %s20
      %s205 = smul.u32 64, %s204
      %s206 = smul.u32 2, %s19
      %p207 = scmp.lt.s32.totalorder %s206, 3
      %s208 = scalar_select %p207, %s206, 3
      %s209 = smul.addr %s208, 8
      %s210 = scalar_lea.vmem %s3, %s209
      %s211 = smul.u32 2, %s19
      %p212 = scmp.eq.s32.totalorder %s20, 0
      // Predicated region
      $region29: #{ops_forward.4} parent=27 // pred_check
        %p213 = pneg %p212
      $region30: #{ops_forward.4} parent=27 // pred_check_branch
        %215 = sbr.rel (%p213) target = $region32
      $region31: #{ops_forward.4} parent=27 // pred_region
        %216 = vst [vmem:[%s210] sm:$0xff] 0.0
        %217 = vst [vmem:[%s210 + $0x8] sm:$0xff] 0.0
      $region32: #{ops_forward.4} parent=27 // pred_fallthru
        _
      %v218 = vld [vmem:[%s195] sm:$0xf]
      %v219 = vld [vmem:[%s195 + $0x4] sm:$0xf]
      %v220 = vld [vmem:[%s195 + $0x8] sm:$0xf]
      %v221 = vld [vmem:[%s195 + $0xc] sm:$0xf]
      %v222 = vld [vmem:[%s195 + $0x10] sm:$0xf]
      %v223 = vld [vmem:[%s195 + $0x14] sm:$0xf]
      %v224 = vld [vmem:[%s195 + $0x18] sm:$0xf]
      %v225 = vld [vmem:[%s195 + $0x1c] sm:$0xf]
      %v226 = vld [vmem:[%s195 + $0x20] sm:$0xf]
      %v227 = vld [vmem:[%s195 + $0x24] sm:$0xf]
      %v228 = vld [vmem:[%s195 + $0x28] sm:$0xf]
      %v229 = vld [vmem:[%s195 + $0x2c] sm:$0xf]
      %v230 = vld [vmem:[%s195 + $0x30] sm:$0xf]
      %v231 = vld [vmem:[%s195 + $0x34] sm:$0xf]
      %v232 = vld [vmem:[%s195 + $0x38] sm:$0xf]
      %v233 = vld [vmem:[%s195 + $0x3c] sm:$0xf]
      %v234 = vld [vmem:[%s195 + $0x40] sm:$0xf]
      %v235 = vld [vmem:[%s195 + $0x44] sm:$0xf]
      %v236 = vld [vmem:[%s195 + $0x48] sm:$0xf]
      %v237 = vld [vmem:[%s195 + $0x4c] sm:$0xf]
      %v238 = vld [vmem:[%s195 + $0x50] sm:$0xf]
      %v239 = vld [vmem:[%s195 + $0x54] sm:$0xf]
      %v240 = vld [vmem:[%s195 + $0x58] sm:$0xf]
      %v241 = vld [vmem:[%s195 + $0x5c] sm:$0xf]
      %v242 = vld [vmem:[%s195 + $0x60] sm:$0xf]
      %v243 = vld [vmem:[%s195 + $0x64] sm:$0xf]
      %v244 = vld [vmem:[%s195 + $0x68] sm:$0xf]
      %v245 = vld [vmem:[%s195 + $0x6c] sm:$0xf]
      %v246 = vld [vmem:[%s195 + $0x70] sm:$0xf]
      %v247 = vld [vmem:[%s195 + $0x74] sm:$0xf]
      %v248 = vld [vmem:[%s195 + $0x78] sm:$0xf]
      %v249 = vld [vmem:[%s195 + $0x7c] sm:$0xf]
      %v250 = vld [vmem:[%s195 + $0x80] sm:$0xf]
      %v251 = vld [vmem:[%s195 + $0x84] sm:$0xf]
      %v252 = vld [vmem:[%s195 + $0x88] sm:$0xf]
      %v253 = vld [vmem:[%s195 + $0x8c] sm:$0xf]
      %v254 = vld [vmem:[%s195 + $0x90] sm:$0xf]
      %v255 = vld [vmem:[%s195 + $0x94] sm:$0xf]
      %v256 = vld [vmem:[%s195 + $0x98] sm:$0xf]
      %v257 = vld [vmem:[%s195 + $0x9c] sm:$0xf]
      %v258 = vld [vmem:[%s195 + $0xa0] sm:$0xf]
      %v259 = vld [vmem:[%s195 + $0xa4] sm:$0xf]
      %v260 = vld [vmem:[%s195 + $0xa8] sm:$0xf]
      %v261 = vld [vmem:[%s195 + $0xac] sm:$0xf]
      %v262 = vld [vmem:[%s195 + $0xb0] sm:$0xf]
      %v263 = vld [vmem:[%s195 + $0xb4] sm:$0xf]
      %v264 = vld [vmem:[%s195 + $0xb8] sm:$0xf]
      %v265 = vld [vmem:[%s195 + $0xbc] sm:$0xf]
      %v266 = vld [vmem:[%s195 + $0xc0] sm:$0xf]
      %v267 = vld [vmem:[%s195 + $0xc4] sm:$0xf]
      %v268 = vld [vmem:[%s195 + $0xc8] sm:$0xf]
      %v269 = vld [vmem:[%s195 + $0xcc] sm:$0xf]
      %v270 = vld [vmem:[%s195 + $0xd0] sm:$0xf]
      %v271 = vld [vmem:[%s195 + $0xd4] sm:$0xf]
      %v272 = vld [vmem:[%s195 + $0xd8] sm:$0xf]
      %v273 = vld [vmem:[%s195 + $0xdc] sm:$0xf]
      %v274 = vld [vmem:[%s195 + $0xe0] sm:$0xf]
      %v275 = vld [vmem:[%s195 + $0xe4] sm:$0xf]
      %v276 = vld [vmem:[%s195 + $0xe8] sm:$0xf]
      %v277 = vld [vmem:[%s195 + $0xec] sm:$0xf]
      %v278 = vld [vmem:[%s195 + $0xf0] sm:$0xf]
      %v279 = vld [vmem:[%s195 + $0xf4] sm:$0xf]
      %v280 = vld [vmem:[%s195 + $0xf8] sm:$0xf]
      %v281 = vld [vmem:[%s195 + $0xfc] sm:$0xf]
      %v282 = vld [vmem:[%s1] sm:$0xf]
      %v283 = vld [vmem:[%s1 + $0x4] sm:$0xf]
      %v284 = vld [vmem:[%s1 + $0x8] sm:$0xf]
      %v285 = vld [vmem:[%s1 + $0xc] sm:$0xf]
      %v286 = vld [vmem:[%s1 + $0x10] sm:$0xf]
      %v287 = vld [vmem:[%s1 + $0x14] sm:$0xf]
      %v288 = vld [vmem:[%s1 + $0x18] sm:$0xf]
      %v289 = vld [vmem:[%s1 + $0x1c] sm:$0xf]
      %v290 = vld [vmem:[%s1 + $0x20] sm:$0xf]
      %v291 = vld [vmem:[%s1 + $0x24] sm:$0xf]
      %v292 = vld [vmem:[%s1 + $0x28] sm:$0xf]
      %v293 = vld [vmem:[%s1 + $0x2c] sm:$0xf]
      %v294 = vld [vmem:[%s1 + $0x30] sm:$0xf]
      %v295 = vld [vmem:[%s1 + $0x34] sm:$0xf]
      %v296 = vld [vmem:[%s1 + $0x38] sm:$0xf]
      %v297 = vld [vmem:[%s1 + $0x3c] sm:$0xf]
      %v362 = vunpack.c.l.b16 %v218
      %v363 = vunpack.c.l.b16 %v219
      %v364 = vunpack.c.l.b16 %v220
      %v365 = vunpack.c.l.b16 %v221
      %v366 = vunpack.c.l.b16 %v222
      %v367 = vunpack.c.l.b16 %v223
      %v368 = vunpack.c.l.b16 %v224
      %v369 = vunpack.c.l.b16 %v225
      %v370 = vunpack.c.l.b16 %v226
      %v371 = vunpack.c.l.b16 %v227
      %v372 = vunpack.c.l.b16 %v228
      %v373 = vunpack.c.l.b16 %v229
      %v374 = vunpack.c.l.b16 %v230
      %v375 = vunpack.c.l.b16 %v231
      %v376 = vunpack.c.l.b16 %v232
      %v377 = vunpack.c.l.b16 %v233
      %v378 = vunpack.c.l.b16 %v234
      %v379 = vunpack.c.l.b16 %v235
      %v380 = vunpack.c.l.b16 %v236
      %v381 = vunpack.c.l.b16 %v237
      %v382 = vunpack.c.l.b16 %v238
      %v383 = vunpack.c.l.b16 %v239
      %v384 = vunpack.c.l.b16 %v240
      %v385 = vunpack.c.l.b16 %v241
      %v386 = vunpack.c.l.b16 %v242
      %v387 = vunpack.c.l.b16 %v243
      %v388 = vunpack.c.l.b16 %v244
      %v389 = vunpack.c.l.b16 %v245
      %v390 = vunpack.c.l.b16 %v246
      %v391 = vunpack.c.l.b16 %v247
      %v392 = vunpack.c.l.b16 %v248
      %v393 = vunpack.c.l.b16 %v249
      %v394 = vunpack.c.l.b16 %v250
      %v395 = vunpack.c.l.b16 %v251
      %v396 = vunpack.c.l.b16 %v252
      %v397 = vunpack.c.l.b16 %v253
      %v398 = vunpack.c.l.b16 %v254
      %v399 = vunpack.c.l.b16 %v255
      %v400 = vunpack.c.l.b16 %v256
      %v401 = vunpack.c.l.b16 %v257
      %v402 = vunpack.c.l.b16 %v258
      %v403 = vunpack.c.l.b16 %v259
      %v404 = vunpack.c.l.b16 %v260
      %v405 = vunpack.c.l.b16 %v261
      %v406 = vunpack.c.l.b16 %v262
      %v407 = vunpack.c.l.b16 %v263
      %v408 = vunpack.c.l.b16 %v264
      %v409 = vunpack.c.l.b16 %v265
      %v410 = vunpack.c.l.b16 %v266
      %v411 = vunpack.c.l.b16 %v267
      %v412 = vunpack.c.l.b16 %v268
      %v413 = vunpack.c.l.b16 %v269
      %v414 = vunpack.c.l.b16 %v270
      %v415 = vunpack.c.l.b16 %v271
      %v416 = vunpack.c.l.b16 %v272
      %v417 = vunpack.c.l.b16 %v273
      %v418 = vunpack.c.l.b16 %v274
      %v419 = vunpack.c.l.b16 %v275
      %v420 = vunpack.c.l.b16 %v276
      %v421 = vunpack.c.l.b16 %v277
      %v422 = vunpack.c.l.b16 %v278
      %v423 = vunpack.c.l.b16 %v279
      %v424 = vunpack.c.l.b16 %v280
      %v425 = vunpack.c.l.b16 %v281
      %v426 = vpack.c.b16 %v363, %v362
      %v427 = vpack.c.b16 %v365, %v364
      %v428 = vpack.c.b16 %v367, %v366
      %v429 = vpack.c.b16 %v369, %v368
      %v430 = vpack.c.b16 %v371, %v370
      %v431 = vpack.c.b16 %v373, %v372
      %v432 = vpack.c.b16 %v375, %v374
      %v433 = vpack.c.b16 %v377, %v376
      %v434 = vpack.c.b16 %v379, %v378
      %v435 = vpack.c.b16 %v381, %v380
      %v436 = vpack.c.b16 %v383, %v382
      %v437 = vpack.c.b16 %v385, %v384
      %v438 = vpack.c.b16 %v387, %v386
      %v439 = vpack.c.b16 %v389, %v388
      %v440 = vpack.c.b16 %v391, %v390
      %v441 = vpack.c.b16 %v393, %v392
      %v442 = vpack.c.b16 %v395, %v394
      %v443 = vpack.c.b16 %v397, %v396
      %v444 = vpack.c.b16 %v399, %v398
      %v445 = vpack.c.b16 %v401, %v400
      %v446 = vpack.c.b16 %v403, %v402
      %v447 = vpack.c.b16 %v405, %v404
      %v448 = vpack.c.b16 %v407, %v406
      %v449 = vpack.c.b16 %v409, %v408
      %v450 = vpack.c.b16 %v411, %v410
      %v451 = vpack.c.b16 %v413, %v412
      %v452 = vpack.c.b16 %v415, %v414
      %v453 = vpack.c.b16 %v417, %v416
      %v454 = vpack.c.b16 %v419, %v418
      %v455 = vpack.c.b16 %v421, %v420
      %v456 = vpack.c.b16 %v423, %v422
      %v457 = vpack.c.b16 %v425, %v424
      %v506 = vunpack.c.l.b16 %v282
      %v507 = vunpack.c.l.b16 %v283
      %v508 = vunpack.c.l.b16 %v284
      %v509 = vunpack.c.l.b16 %v285
      %v510 = vunpack.c.l.b16 %v286
      %v511 = vunpack.c.l.b16 %v287
      %v512 = vunpack.c.l.b16 %v288
      %v513 = vunpack.c.l.b16 %v289
      %v514 = vunpack.c.l.b16 %v290
      %v515 = vunpack.c.l.b16 %v291
      %v516 = vunpack.c.l.b16 %v292
      %v517 = vunpack.c.l.b16 %v293
      %v518 = vunpack.c.l.b16 %v294
      %v519 = vunpack.c.l.b16 %v295
      %v520 = vunpack.c.l.b16 %v296
      %v521 = vunpack.c.l.b16 %v297
      %v522 = vpack.c.b16 %v507, %v506
      %v523 = vpack.c.b16 %v509, %v508
      %v524 = vpack.c.b16 %v511, %v510
      %v525 = vpack.c.b16 %v513, %v512
      %v526 = vpack.c.b16 %v515, %v514
      %v527 = vpack.c.b16 %v517, %v516
      %v528 = vpack.c.b16 %v519, %v518
      %v529 = vpack.c.b16 %v521, %v520
      %538 = vmatpush.bf16.msra.mxu0 %v529
      %539 = vmatpush.bf16.msra.mxu0 %v528
      %540 = vmatpush.bf16.msra.mxu0 %v527
      %541 = vmatpush.bf16.msra.mxu0 %v526
      %542 = vmatpush.bf16.msra.mxu0 %v525
      %543 = vmatpush.bf16.msra.mxu0 %v524
      %544 = vmatpush.bf16.msra.mxu0 %v523
      %545 = vmatpush.bf16.msra.mxu0 %v522
      %546 = vmatmul.bf16.gmra.mxu0 %v426
      %v547 = vpop.f32.mrf.mxu0
      %v548 = vadd.f32 0.0, %v547
      %v549 = vpop.f32.mrf.mxu0
      %v550 = vadd.f32 0.0, %v549
      %551 = vmatmul.bf16.gmra.mxu0 %v427
      %v552 = vpop.f32.mrf.mxu0
      %v553 = vadd.f32 0.0, %v552
      %v554 = vpop.f32.mrf.mxu0
      %v555 = vadd.f32 0.0, %v554
      %556 = vmatmul.bf16.gmra.mxu0 %v428
      %v557 = vpop.f32.mrf.mxu0
      %v558 = vadd.f32 0.0, %v557
      %v559 = vpop.f32.mrf.mxu0
      %v560 = vadd.f32 0.0, %v559
      %561 = vmatmul.bf16.gmra.mxu0 %v429
      %v562 = vpop.f32.mrf.mxu0
      %v563 = vadd.f32 0.0, %v562
      %v564 = vpop.f32.mrf.mxu0
      %v565 = vadd.f32 0.0, %v564
      %566 = vmatmul.bf16.gmra.mxu0 %v430
      %v567 = vpop.f32.mrf.mxu0
      %v568 = vadd.f32 0.0, %v567
      %v569 = vpop.f32.mrf.mxu0
      %v570 = vadd.f32 0.0, %v569
      %571 = vmatmul.bf16.gmra.mxu0 %v431
      %v572 = vpop.f32.mrf.mxu0
      %v573 = vadd.f32 0.0, %v572
      %v574 = vpop.f32.mrf.mxu0
      %v575 = vadd.f32 0.0, %v574
      %576 = vmatmul.bf16.gmra.mxu0 %v432
      %v577 = vpop.f32.mrf.mxu0
      %v578 = vadd.f32 0.0, %v577
      %v579 = vpop.f32.mrf.mxu0
      %v580 = vadd.f32 0.0, %v579
      %581 = vmatmul.bf16.gmra.mxu0 %v433
      %v582 = vpop.f32.mrf.mxu0
      %v583 = vadd.f32 0.0, %v582
      %v584 = vpop.f32.mrf.mxu0
      %v585 = vadd.f32 0.0, %v584
      %586 = vmatmul.bf16.gmra.mxu0 %v434
      %v587 = vpop.f32.mrf.mxu0
      %v588 = vadd.f32 0.0, %v587
      %v589 = vpop.f32.mrf.mxu0
      %v590 = vadd.f32 0.0, %v589
      %591 = vmatmul.bf16.gmra.mxu0 %v435
      %v592 = vpop.f32.mrf.mxu0
      %v593 = vadd.f32 0.0, %v592
      %v594 = vpop.f32.mrf.mxu0
      %v595 = vadd.f32 0.0, %v594
      %596 = vmatmul.bf16.gmra.mxu0 %v436
      %v597 = vpop.f32.mrf.mxu0
      %v598 = vadd.f32 0.0, %v597
      %v599 = vpop.f32.mrf.mxu0
      %v600 = vadd.f32 0.0, %v599
      %601 = vmatmul.bf16.gmra.mxu0 %v437
      %v602 = vpop.f32.mrf.mxu0
      %v603 = vadd.f32 0.0, %v602
      %v604 = vpop.f32.mrf.mxu0
      %v605 = vadd.f32 0.0, %v604
      %606 = vmatmul.bf16.gmra.mxu0 %v438
      %v607 = vpop.f32.mrf.mxu0
      %v608 = vadd.f32 0.0, %v607
      %v609 = vpop.f32.mrf.mxu0
      %v610 = vadd.f32 0.0, %v609
      %611 = vmatmul.bf16.gmra.mxu0 %v439
      %v612 = vpop.f32.mrf.mxu0
      %v613 = vadd.f32 0.0, %v612
      %v614 = vpop.f32.mrf.mxu0
      %v615 = vadd.f32 0.0, %v614
      %616 = vmatmul.bf16.gmra.mxu0 %v440
      %v617 = vpop.f32.mrf.mxu0
      %v618 = vadd.f32 0.0, %v617
      %v619 = vpop.f32.mrf.mxu0
      %v620 = vadd.f32 0.0, %v619
      %621 = vmatmul.bf16.gmra.mxu0 %v441
      %v622 = vpop.f32.mrf.mxu0
      %v623 = vadd.f32 0.0, %v622
      %v624 = vpop.f32.mrf.mxu0
      %v625 = vadd.f32 0.0, %v624
      %626 = vmatmul.bf16.gmra.mxu0 %v442
      %v627 = vpop.f32.mrf.mxu0
      %v628 = vadd.f32 0.0, %v627
      %v629 = vpop.f32.mrf.mxu0
      %v630 = vadd.f32 0.0, %v629
      %631 = vmatmul.bf16.gmra.mxu0 %v443
      %v632 = vpop.f32.mrf.mxu0
      %v633 = vadd.f32 0.0, %v632
      %v634 = vpop.f32.mrf.mxu0
      %v635 = vadd.f32 0.0, %v634
      %636 = vmatmul.bf16.gmra.mxu0 %v444
      %v637 = vpop.f32.mrf.mxu0
      %v638 = vadd.f32 0.0, %v637
      %v639 = vpop.f32.mrf.mxu0
      %v640 = vadd.f32 0.0, %v639
      %641 = vmatmul.bf16.gmra.mxu0 %v445
      %v642 = vpop.f32.mrf.mxu0
      %v643 = vadd.f32 0.0, %v642
      %v644 = vpop.f32.mrf.mxu0
      %v645 = vadd.f32 0.0, %v644
      %646 = vmatmul.bf16.gmra.mxu0 %v446
      %v647 = vpop.f32.mrf.mxu0
      %v648 = vadd.f32 0.0, %v647
      %v649 = vpop.f32.mrf.mxu0
      %v650 = vadd.f32 0.0, %v649
      %651 = vmatmul.bf16.gmra.mxu0 %v447
      %v652 = vpop.f32.mrf.mxu0
      %v653 = vadd.f32 0.0, %v652
      %v654 = vpop.f32.mrf.mxu0
      %v655 = vadd.f32 0.0, %v654
      %656 = vmatmul.bf16.gmra.mxu0 %v448
      %v657 = vpop.f32.mrf.mxu0
      %v658 = vadd.f32 0.0, %v657
      %v659 = vpop.f32.mrf.mxu0
      %v660 = vadd.f32 0.0, %v659
      %661 = vmatmul.bf16.gmra.mxu0 %v449
      %v662 = vpop.f32.mrf.mxu0
      %v663 = vadd.f32 0.0, %v662
      %v664 = vpop.f32.mrf.mxu0
      %v665 = vadd.f32 0.0, %v664
      %666 = vmatmul.bf16.gmra.mxu0 %v450
      %v667 = vpop.f32.mrf.mxu0
      %v668 = vadd.f32 0.0, %v667
      %v669 = vpop.f32.mrf.mxu0
      %v670 = vadd.f32 0.0, %v669
      %671 = vmatmul.bf16.gmra.mxu0 %v451
      %v672 = vpop.f32.mrf.mxu0
      %v673 = vadd.f32 0.0, %v672
      %v674 = vpop.f32.mrf.mxu0
      %v675 = vadd.f32 0.0, %v674
      %676 = vmatmul.bf16.gmra.mxu0 %v452
      %v677 = vpop.f32.mrf.mxu0
      %v678 = vadd.f32 0.0, %v677
      %v679 = vpop.f32.mrf.mxu0
      %v680 = vadd.f32 0.0, %v679
      %681 = vmatmul.bf16.gmra.mxu0 %v453
      %v682 = vpop.f32.mrf.mxu0
      %v683 = vadd.f32 0.0, %v682
      %v684 = vpop.f32.mrf.mxu0
      %v685 = vadd.f32 0.0, %v684
      %686 = vmatmul.bf16.gmra.mxu0 %v454
      %v687 = vpop.f32.mrf.mxu0
      %v688 = vadd.f32 0.0, %v687
      %v689 = vpop.f32.mrf.mxu0
      %v690 = vadd.f32 0.0, %v689
      %691 = vmatmul.bf16.gmra.mxu0 %v455
      %v692 = vpop.f32.mrf.mxu0
      %v693 = vadd.f32 0.0, %v692
      %v694 = vpop.f32.mrf.mxu0
      %v695 = vadd.f32 0.0, %v694
      %696 = vmatmul.bf16.gmra.mxu0 %v456
      %v697 = vpop.f32.mrf.mxu0
      %v698 = vadd.f32 0.0, %v697
      %v699 = vpop.f32.mrf.mxu0
      %v700 = vadd.f32 0.0, %v699
      %701 = vmatmul.bf16.gmra.mxu0 %v457
      %v702 = vpop.f32.mrf.mxu0
      %v703 = vadd.f32 0.0, %v702
      %v704 = vpop.f32.mrf.mxu0
      %v705 = vadd.f32 0.0, %v704
      %706 = vdwg.mxu0
      %v707 = vpack.c.bf16 %v548, %v548
      %v708 = vpack.c.bf16 %v550, %v550
      %v709 = vpack.c.bf16 %v553, %v553
      %v710 = vpack.c.bf16 %v555, %v555
      %v711 = vpack.c.bf16 %v558, %v558
      %v712 = vpack.c.bf16 %v560, %v560
      %v713 = vpack.c.bf16 %v563, %v563
      %v714 = vpack.c.bf16 %v565, %v565
      %v715 = vpack.c.bf16 %v568, %v568
      %v716 = vpack.c.bf16 %v570, %v570
      %v717 = vpack.c.bf16 %v573, %v573
      %v718 = vpack.c.bf16 %v575, %v575
      %v719 = vpack.c.bf16 %v578, %v578
      %v720 = vpack.c.bf16 %v580, %v580
      %v721 = vpack.c.bf16 %v583, %v583
      %v722 = vpack.c.bf16 %v585, %v585
      %v723 = vpack.c.bf16 %v588, %v588
      %v724 = vpack.c.bf16 %v590, %v590
      %v725 = vpack.c.bf16 %v593, %v593
      %v726 = vpack.c.bf16 %v595, %v595
      %v727 = vpack.c.bf16 %v598, %v598
      %v728 = vpack.c.bf16 %v600, %v600
      %v729 = vpack.c.bf16 %v603, %v603
      %v730 = vpack.c.bf16 %v605, %v605
      %v731 = vpack.c.bf16 %v608, %v608
      %v732 = vpack.c.bf16 %v610, %v610
      %v733 = vpack.c.bf16 %v613, %v613
      %v734 = vpack.c.bf16 %v615, %v615
      %v735 = vpack.c.bf16 %v618, %v618
      %v736 = vpack.c.bf16 %v620, %v620
      %v737 = vpack.c.bf16 %v623, %v623
      %v738 = vpack.c.bf16 %v625, %v625
      %v739 = vpack.c.bf16 %v628, %v628
      %v740 = vpack.c.bf16 %v630, %v630
      %v741 = vpack.c.bf16 %v633, %v633
      %v742 = vpack.c.bf16 %v635, %v635
      %v743 = vpack.c.bf16 %v638, %v638
      %v744 = vpack.c.bf16 %v640, %v640
      %v745 = vpack.c.bf16 %v643, %v643
      %v746 = vpack.c.bf16 %v645, %v645
      %v747 = vpack.c.bf16 %v648, %v648
      %v748 = vpack.c.bf16 %v650, %v650
      %v749 = vpack.c.bf16 %v653, %v653
      %v750 = vpack.c.bf16 %v655, %v655
      %v751 = vpack.c.bf16 %v658, %v658
      %v752 = vpack.c.bf16 %v660, %v660
      %v753 = vpack.c.bf16 %v663, %v663
      %v754 = vpack.c.bf16 %v665, %v665
      %v755 = vpack.c.bf16 %v668, %v668
      %v756 = vpack.c.bf16 %v670, %v670
      %v757 = vpack.c.bf16 %v673, %v673
      %v758 = vpack.c.bf16 %v675, %v675
      %v759 = vpack.c.bf16 %v678, %v678
      %v760 = vpack.c.bf16 %v680, %v680
      %v761 = vpack.c.bf16 %v683, %v683
      %v762 = vpack.c.bf16 %v685, %v685
      %v763 = vpack.c.bf16 %v688, %v688
      %v764 = vpack.c.bf16 %v690, %v690
      %v765 = vpack.c.bf16 %v693, %v693
      %v766 = vpack.c.bf16 %v695, %v695
      %v767 = vpack.c.bf16 %v698, %v698
      %v768 = vpack.c.bf16 %v700, %v700
      %v769 = vpack.c.bf16 %v703, %v703
      %v770 = vpack.c.bf16 %v705, %v705
      %771 = vst [vmem:[%s203] sm:$0xf] %v707
      %772 = vst [vmem:[%s203 + $0x4] sm:$0xf] %v708
      %773 = vst [vmem:[%s203 + $0x8] sm:$0xf] %v709
      %774 = vst [vmem:[%s203 + $0xc] sm:$0xf] %v710
      %775 = vst [vmem:[%s203 + $0x10] sm:$0xf] %v711
      %776 = vst [vmem:[%s203 + $0x14] sm:$0xf] %v712
      %777 = vst [vmem:[%s203 + $0x18] sm:$0xf] %v713
      %778 = vst [vmem:[%s203 + $0x1c] sm:$0xf] %v714
      %779 = vst [vmem:[%s203 + $0x20] sm:$0xf] %v715
      %780 = vst [vmem:[%s203 + $0x24] sm:$0xf] %v716
      %781 = vst [vmem:[%s203 + $0x28] sm:$0xf] %v717
      %782 = vst [vmem:[%s203 + $0x2c] sm:$0xf] %v718
      %783 = vst [vmem:[%s203 + $0x30] sm:$0xf] %v719
      %784 = vst [vmem:[%s203 + $0x34] sm:$0xf] %v720
      %785 = vst [vmem:[%s203 + $0x38] sm:$0xf] %v721
      %786 = vst [vmem:[%s203 + $0x3c] sm:$0xf] %v722
      %787 = vst [vmem:[%s203 + $0x40] sm:$0xf] %v723
      %788 = vst [vmem:[%s203 + $0x44] sm:$0xf] %v724
      %789 = vst [vmem:[%s203 + $0x48] sm:$0xf] %v725
      %790 = vst [vmem:[%s203 + $0x4c] sm:$0xf] %v726
      %791 = vst [vmem:[%s203 + $0x50] sm:$0xf] %v727
      %792 = vst [vmem:[%s203 + $0x54] sm:$0xf] %v728
      %793 = vst [vmem:[%s203 + $0x58] sm:$0xf] %v729
      %794 = vst [vmem:[%s203 + $0x5c] sm:$0xf] %v730
      %795 = vst [vmem:[%s203 + $0x60] sm:$0xf] %v731
      %796 = vst [vmem:[%s203 + $0x64] sm:$0xf] %v732
      %797 = vst [vmem:[%s203 + $0x68] sm:$0xf] %v733
      %798 = vst [vmem:[%s203 + $0x6c] sm:$0xf] %v734
      %799 = vst [vmem:[%s203 + $0x70] sm:$0xf] %v735
      %800 = vst [vmem:[%s203 + $0x74] sm:$0xf] %v736
      %801 = vst [vmem:[%s203 + $0x78] sm:$0xf] %v737
      %802 = vst [vmem:[%s203 + $0x7c] sm:$0xf] %v738
      %803 = vst [vmem:[%s203 + $0x80] sm:$0xf] %v739
      %804 = vst [vmem:[%s203 + $0x84] sm:$0xf] %v740
      %805 = vst [vmem:[%s203 + $0x88] sm:$0xf] %v741
      %806 = vst [vmem:[%s203 + $0x8c] sm:$0xf] %v742
      %807 = vst [vmem:[%s203 + $0x90] sm:$0xf] %v743
      %808 = vst [vmem:[%s203 + $0x94] sm:$0xf] %v744
      %809 = vst [vmem:[%s203 + $0x98] sm:$0xf] %v745
      %810 = vst [vmem:[%s203 + $0x9c] sm:$0xf] %v746
      %811 = vst [vmem:[%s203 + $0xa0] sm:$0xf] %v747
      %812 = vst [vmem:[%s203 + $0xa4] sm:$0xf] %v748
      %813 = vst [vmem:[%s203 + $0xa8] sm:$0xf] %v749
      %814 = vst [vmem:[%s203 + $0xac] sm:$0xf] %v750
      %815 = vst [vmem:[%s203 + $0xb0] sm:$0xf] %v751
      %816 = vst [vmem:[%s203 + $0xb4] sm:$0xf] %v752
      %817 = vst [vmem:[%s203 + $0xb8] sm:$0xf] %v753
      %818 = vst [vmem:[%s203 + $0xbc] sm:$0xf] %v754
      %819 = vst [vmem:[%s203 + $0xc0] sm:$0xf] %v755
      %820 = vst [vmem:[%s203 + $0xc4] sm:$0xf] %v756
      %821 = vst [vmem:[%s203 + $0xc8] sm:$0xf] %v757
      %822 = vst [vmem:[%s203 + $0xcc] sm:$0xf] %v758
      %823 = vst [vmem:[%s203 + $0xd0] sm:$0xf] %v759
      %824 = vst [vmem:[%s203 + $0xd4] sm:$0xf] %v760
      %825 = vst [vmem:[%s203 + $0xd8] sm:$0xf] %v761
      %826 = vst [vmem:[%s203 + $0xdc] sm:$0xf] %v762
      %827 = vst [vmem:[%s203 + $0xe0] sm:$0xf] %v763
      %828 = vst [vmem:[%s203 + $0xe4] sm:$0xf] %v764
      %829 = vst [vmem:[%s203 + $0xe8] sm:$0xf] %v765
      %830 = vst [vmem:[%s203 + $0xec] sm:$0xf] %v766
      %831 = vst [vmem:[%s203 + $0xf0] sm:$0xf] %v767
      %832 = vst [vmem:[%s203 + $0xf4] sm:$0xf] %v768
      %833 = vst [vmem:[%s203 + $0xf8] sm:$0xf] %v769
      %834 = vst [vmem:[%s203 + $0xfc] sm:$0xf] %v770
      %v835 = vld [vmem:[%s210] sm:$0xff]
      %v836 = vadd.f32 %v548, %v550
      %v837 = vadd.f32 %v836, %v553
      %v838 = vadd.f32 %v837, %v555
      %v839 = vadd.f32 %v838, %v558
      %v840 = vadd.f32 %v839, %v560
      %v841 = vadd.f32 %v840, %v563
      %v842 = vadd.f32 %v841, %v565
      %v843 = vadd.f32 %v842, %v568
      %v844 = vadd.f32 %v843, %v570
      %v845 = vadd.f32 %v844, %v573
      %v846 = vadd.f32 %v845, %v575
      %v847 = vadd.f32 %v846, %v578
      %v848 = vadd.f32 %v847, %v580
      %v849 = vadd.f32 %v848, %v583
      %v850 = vadd.f32 %v849, %v585
      %v851 = vadd.f32 %v850, %v588
      %v852 = vadd.f32 %v851, %v590
      %v853 = vadd.f32 %v852, %v593
      %v854 = vadd.f32 %v853, %v595
      %v855 = vadd.f32 %v854, %v598
      %v856 = vadd.f32 %v855, %v600
      %v857 = vadd.f32 %v856, %v603
      %v858 = vadd.f32 %v857, %v605
      %v859 = vadd.f32 %v858, %v608
      %v860 = vadd.f32 %v859, %v610
      %v861 = vadd.f32 %v860, %v613
      %v862 = vadd.f32 %v861, %v615
      %v863 = vadd.f32 %v862, %v618
      %v864 = vadd.f32 %v863, %v620
      %v865 = vadd.f32 %v864, %v623
      %v866 = vadd.f32 %v865, %v625
      %v867 = vadd.f32 %v866, %v628
      %v868 = vadd.f32 %v867, %v630
      %v869 = vadd.f32 %v868, %v633
      %v870 = vadd.f32 %v869, %v635
      %v871 = vadd.f32 %v870, %v638
      %v872 = vadd.f32 %v871, %v640
      %v873 = vadd.f32 %v872, %v643
      %v874 = vadd.f32 %v873, %v645
      %v875 = vadd.f32 %v874, %v648
      %v876 = vadd.f32 %v875, %v650
      %v877 = vadd.f32 %v876, %v653
      %v878 = vadd.f32 %v877, %v655
      %v879 = vadd.f32 %v878, %v658
      %v880 = vadd.f32 %v879, %v660
      %v881 = vadd.f32 %v880, %v663
      %v882 = vadd.f32 %v881, %v665
      %v883 = vadd.f32 %v882, %v668
      %v884 = vadd.f32 %v883, %v670
      %v885 = vadd.f32 %v884, %v673
      %v886 = vadd.f32 %v885, %v675
      %v887 = vadd.f32 %v886, %v678
      %v888 = vadd.f32 %v887, %v680
      %v889 = vadd.f32 %v888, %v683
      %v890 = vadd.f32 %v889, %v685
      %v891 = vadd.f32 %v890, %v688
      %v892 = vadd.f32 %v891, %v690
      %v893 = vadd.f32 %v892, %v693
      %v894 = vadd.f32 %v893, %v695
      %v895 = vadd.f32 %v894, %v698
      %v896 = vadd.f32 %v895, %v700
      %v897 = vadd.f32 %v896, %v703
      %v898 = vadd.f32 %v897, %v705
      %v899 = vadd.f32 %v835, %v898
      %900 = vst [vmem:[%s210] sm:$0xff] %v899
      %v901 = vld [vmem:[%s210 + $0x8] sm:$0xff]
      %v902 = vmul.f32 %v548, %v548
      %v903 = vmul.f32 %v550, %v550
      %v904 = vmul.f32 %v553, %v553
      %v905 = vmul.f32 %v555, %v555
      %v906 = vmul.f32 %v558, %v558
      %v907 = vmul.f32 %v560, %v560
      %v908 = vmul.f32 %v563, %v563
      %v909 = vmul.f32 %v565, %v565
      %v910 = vmul.f32 %v568, %v568
      %v911 = vmul.f32 %v570, %v570
      %v912 = vmul.f32 %v573, %v573
      %v913 = vmul.f32 %v575, %v575
      %v914 = vmul.f32 %v578, %v578
      %v915 = vmul.f32 %v580, %v580
      %v916 = vmul.f32 %v583, %v583
      %v917 = vmul.f32 %v585, %v585
      %v918 = vmul.f32 %v588, %v588
      %v919 = vmul.f32 %v590, %v590
      %v920 = vmul.f32 %v593, %v593
      %v921 = vmul.f32 %v595, %v595
      %v922 = vmul.f32 %v598, %v598
      %v923 = vmul.f32 %v600, %v600
      %v924 = vmul.f32 %v603, %v603
      %v925 = vmul.f32 %v605, %v605
      %v926 = vmul.f32 %v608, %v608
      %v927 = vmul.f32 %v610, %v610
      %v928 = vmul.f32 %v613, %v613
      %v929 = vmul.f32 %v615, %v615
      %v930 = vmul.f32 %v618, %v618
      %v931 = vmul.f32 %v620, %v620
      %v932 = vmul.f32 %v623, %v623
      %v933 = vmul.f32 %v625, %v625
      %v934 = vmul.f32 %v628, %v628
      %v935 = vmul.f32 %v630, %v630
      %v936 = vmul.f32 %v633, %v633
      %v937 = vmul.f32 %v635, %v635
      %v938 = vmul.f32 %v638, %v638
      %v939 = vmul.f32 %v640, %v640
      %v940 = vmul.f32 %v643, %v643
      %v941 = vmul.f32 %v645, %v645
      %v942 = vmul.f32 %v648, %v648
      %v943 = vmul.f32 %v650, %v650
      %v944 = vmul.f32 %v653, %v653
      %v945 = vmul.f32 %v655, %v655
      %v946 = vmul.f32 %v658, %v658
      %v947 = vmul.f32 %v660, %v660
      %v948 = vmul.f32 %v663, %v663
      %v949 = vmul.f32 %v665, %v665
      %v950 = vmul.f32 %v668, %v668
      %v951 = vmul.f32 %v670, %v670
      %v952 = vmul.f32 %v673, %v673
      %v953 = vmul.f32 %v675, %v675
      %v954 = vmul.f32 %v678, %v678
      %v955 = vmul.f32 %v680, %v680
      %v956 = vmul.f32 %v683, %v683
      %v957 = vmul.f32 %v685, %v685
      %v958 = vmul.f32 %v688, %v688
      %v959 = vmul.f32 %v690, %v690
      %v960 = vmul.f32 %v693, %v693
      %v961 = vmul.f32 %v695, %v695
      %v962 = vmul.f32 %v698, %v698
      %v963 = vmul.f32 %v700, %v700
      %v964 = vmul.f32 %v703, %v703
      %v965 = vmul.f32 %v705, %v705
      %v966 = vadd.f32 %v902, %v903
      %v967 = vadd.f32 %v966, %v904
      %v968 = vadd.f32 %v967, %v905
      %v969 = vadd.f32 %v968, %v906
      %v970 = vadd.f32 %v969, %v907
      %v971 = vadd.f32 %v970, %v908
      %v972 = vadd.f32 %v971, %v909
      %v973 = vadd.f32 %v972, %v910
      %v974 = vadd.f32 %v973, %v911
      %v975 = vadd.f32 %v974, %v912
      %v976 = vadd.f32 %v975, %v913
      %v977 = vadd.f32 %v976, %v914
      %v978 = vadd.f32 %v977, %v915
      %v979 = vadd.f32 %v978, %v916
      %v980 = vadd.f32 %v979, %v917
      %v981 = vadd.f32 %v980, %v918
      %v982 = vadd.f32 %v981, %v919
      %v983 = vadd.f32 %v982, %v920
      %v984 = vadd.f32 %v983, %v921
      %v985 = vadd.f32 %v984, %v922
      %v986 = vadd.f32 %v985, %v923
      %v987 = vadd.f32 %v986, %v924
      %v988 = vadd.f32 %v987, %v925
      %v989 = vadd.f32 %v988, %v926
      %v990 = vadd.f32 %v989, %v927
      %v991 = vadd.f32 %v990, %v928
      %v992 = vadd.f32 %v991, %v929
      %v993 = vadd.f32 %v992, %v930
      %v994 = vadd.f32 %v993, %v931
      %v995 = vadd.f32 %v994, %v932
      %v996 = vadd.f32 %v995, %v933
      %v997 = vadd.f32 %v996, %v934
      %v998 = vadd.f32 %v997, %v935
      %v999 = vadd.f32 %v998, %v936
      %v1000 = vadd.f32 %v999, %v937
      %v1001 = vadd.f32 %v1000, %v938
      %v1002 = vadd.f32 %v1001, %v939
      %v1003 = vadd.f32 %v1002, %v940
      %v1004 = vadd.f32 %v1003, %v941
      %v1005 = vadd.f32 %v1004, %v942
      %v1006 = vadd.f32 %v1005, %v943
      %v1007 = vadd.f32 %v1006, %v944
      %v1008 = vadd.f32 %v1007, %v945
      %v1009 = vadd.f32 %v1008, %v946
      %v1010 = vadd.f32 %v1009, %v947
      %v1011 = vadd.f32 %v1010, %v948
      %v1012 = vadd.f32 %v1011, %v949
      %v1013 = vadd.f32 %v1012, %v950
      %v1014 = vadd.f32 %v1013, %v951
      %v1015 = vadd.f32 %v1014, %v952
      %v1016 = vadd.f32 %v1015, %v953
      %v1017 = vadd.f32 %v1016, %v954
      %v1018 = vadd.f32 %v1017, %v955
      %v1019 = vadd.f32 %v1018, %v956
      %v1020 = vadd.f32 %v1019, %v957
      %v1021 = vadd.f32 %v1020, %v958
      %v1022 = vadd.f32 %v1021, %v959
      %v1023 = vadd.f32 %v1022, %v960
      %v1024 = vadd.f32 %v1023, %v961
      %v1025 = vadd.f32 %v1024, %v962
      %v1026 = vadd.f32 %v1025, %v963
      %v1027 = vadd.f32 %v1026, %v964
      %v1028 = vadd.f32 %v1027, %v965
      %v1029 = vadd.f32 %v901, %v1028
      %1030 = vst [vmem:[%s210 + $0x8] sm:$0xff] %v1029
      %s1031 = sadd.s32 %s19, %s20
      %s1032 = smul.u32 64, %s1031
      %p1033 = scmp.lt.s32.totalorder %s1032, 127
      %s1034 = scalar_select %p1033, %s1032, 127
      %s1035 = smul.addr %s1034, 4
      %s1036 = scalar_lea.vmem %s2, %s1035
      %s1037 = smul.u32 2, %s19
      %p1038 = scmp.lt.s32.totalorder %s1037, 3
      %s1039 = scalar_select %p1038, %s1037, 3
      %s1040 = smul.addr %s1039, 8
      %s1041 = scalar_lea.vmem %s3, %s1040
      // Predicated region
      $region33: #{ops_forward.4} parent=27 // pred_check
        %p1042 = pneg %p96
      $region34: #{ops_forward.4} parent=27 // pred_check_branch
        %1044 = sbr.rel (%p1042) target = $region36
      $region35: #{ops_forward.4} parent=27 // pred_region
        %s1045 = sadd.s32 %s19, %s20
        %s1046 = smul.u32 64, %s1045
      $region36: #{ops_forward.4} parent=27 // pred_fallthru
        _
      // Predicated region
      $region37: #{ops_forward.4} parent=27 // pred_check
        %p1047 = pneg %p122
      $region38: #{ops_forward.4} parent=27 // pred_check_branch
        %1049 = sbr.rel (%p1047) target = $region40
      $region39: #{ops_forward.4} parent=27 // pred_region
        %s1050 = smul.u32 2, %s19
      $region40: #{ops_forward.4} parent=27 // pred_fallthru
        _
    $region28: #{ops_forward.4} parent=5 // pred_fallthru
      _
    %p1051 = scmp.le.s32.totalorder 2, %s10
    // Predicated region
    $region41: #{ops_forward.4} parent=5 // pred_check
      %p1052 = pneg %p1051
    $region42: #{ops_forward.4} parent=5 // pred_check_branch
      %1054 = sbr.rel (%p1052) target = $region44
    $region43: #{ops_forward.4} parent=5 // pred_region
      %s1055 = ssub.s32 %s10, 2
      // Predicated region
      $region45: #{ops_forward.4} parent=43 // pred_check
        %p1056 = pneg %p102
      $region46: #{ops_forward.4} parent=43 // pred_check_branch
        %1058 = sbr.rel (%p1056) target = $region48
      $region47: #{ops_forward.4} parent=43 // pred_region
        %s1059 = sadd.s32 %s21, %s22
        %s1060 = smul.u32 64, %s1059
        %p1061 = scmp.lt.s32.totalorder %s1060, 127
        %s1062 = scalar_select %p1061, %s1060, 127
        %s1063 = smul.addr %s1062, 4
        %s1064 = scalar_lea.vmem %s2, %s1063
      $region48: #{ops_forward.4} parent=43 // pred_fallthru
        _
      // Predicated region
      $region49: #{ops_forward.4} parent=43 // pred_check
        %p1065 = pneg %p128
      $region50: #{ops_forward.4} parent=43 // pred_check_branch
        %1067 = sbr.rel (%p1065) target = $region52
      $region51: #{ops_forward.4} parent=43 // pred_region
        %s1068 = smul.u32 2, %s21
        %p1069 = scmp.lt.s32.totalorder %s1068, 3
        %s1070 = scalar_select %p1069, %s1068, 3
        %s1071 = smul.addr %s1070, 8
        %s1072 = scalar_lea.vmem %s3, %s1071
      $region52: #{ops_forward.4} parent=43 // pred_fallthru
        _
    $region44: #{ops_forward.4} parent=5 // pred_fallthru
      _
  $region6: #{ops_forward.4} parent=0 // loop_footer
    %s14 = sadd.s32 1, %s10
  $region7: #{ops_forward.4} parent=0 // loop_footer_branch
    %9 = sbr.rel target = $region3
  $region8: #{ops_forward.4} parent=0 // loop_exit
    _

// kernel: ops_forward.6
$region0: #{ops_forward.6}
  #allocation0 [shape = 'u32[]', space=smem, size = 0x4, offset = 0x4, fixed_abs, tag = 'smem constant byte address 0x4 - core index']
  #allocation1 [shape = 'u32[72,128]{1,0:T(1,128)}', space=vmem, size = 0x9000, scoped, tag = 'internal scratch']
  %s0 = inlined_call_operand.vmem [shape: bf16[1024,256], index: 0, kind: input, shape index: {}]
  %s1 = inlined_call_operand.vmem [shape: bf16[256,128], index: 1, kind: input, shape index: {}]
  %s2 = inlined_call_operand.vmem [shape: bf16[1024,128], index: 2, kind: output, shape index: {0}]
  %s3 = inlined_call_operand.vmem [shape: f32[32,128], index: 3, kind: output, shape index: {1}]
  %4 = xla_tuple %s2, %s3
  %s5 = sld [smem:[#allocation0]]
  $region53: #{ops_forward.6} parent=0
    _
  %s7 = ssub.s32 1, %s5
  %s8 = scalar_select 0, %s7, %s5
  loop: start=0, step=1, limit=4
  $region2: #{ops_forward.6} parent=0 // loop_pre_header
    _
  $region3: #{ops_forward.6} parent=0 // loop_header
    %s10 = sphi 0, %s14
    %p11 = scmp.ge.s32.totalorder %s10, 4
    %s17 = sphi 0, %s29
    %s18 = sphi 0, %s25
    %s19 = sphi 0, %s17
    %s20 = sphi 0, %s18
    %s21 = sphi 0, %s19
    %s22 = sphi 0, %s20
    %s34 = sphi 0, %s36
    %s37 = sphi 0, %s34
    %s38 = sphi 0, %s37
    %s54 = sphi 0, %s38
    %s58 = sphi 0, %s58
    %s60 = sphi 0, %s58
    %s61 = sphi 0, %s60
    %s75 = sphi 0, %s61
    %s83 = sphi 0, %s85
    %s86 = sphi 0, %s83
    %s87 = sphi 0, %s86
    %s103 = sphi 0, %s87
    %s109 = sphi 0, %s111
    %s112 = sphi 0, %s109
    %s113 = sphi 0, %s112
    %s129 = sphi 0, %s113
  $region4: #{ops_forward.6} parent=0 // loop_header_branch
    %13 = sbr.rel (%p11) target = $region8
  $region5: #{ops_forward.6} parent=0 // loop_body
    %s15 = ssub.s32 %s10, 1
    %s16 = ssub.s32 %s10, 2
    %s23 = sadd.s32 1, %s18
    %p24 = scmp.ge.s32.totalorder %s23, 1
    %s25 = scalar_select %p24, 0, %s23
    %s26 = sadd.s32 1, %s17
    %s27 = scalar_select %p24, %s26, %s17
    %p28 = scmp.ge.s32.totalorder %s27, 2
    %s29 = scalar_select %p28, 0, %s27
    %s30 = sadd.s32 %s17, %s18
    %s31 = sadd.s32 %s29, %s25
    %s32 = ssub.s32 %s30, %s31
    %p33 = scmp.eq.s32.totalorder %s32, 0
    %s35 = sadd.s32 %s34, 1
    %s36 = scalar_select %p33, %s34, %s35
    %p39 = pneg %p33
    %p40 = scmp.eq.s32.totalorder %s10, 1
    %p41 = por %p39, %p40
    %p42 = scmp.ne.s32.totalorder %s34, %s37
    %p43 = scmp.eq.s32.totalorder %s10, 0
    %p44 = por %p42, %p43
    %p45 = scmp.ne.s32.totalorder %s34, %s37
    %p46 = scmp.eq.s32.totalorder %s15, 1
    %p47 = por %p45, %p46
    %p48 = scmp.ne.s32.totalorder %s37, %s38
    %p49 = scmp.eq.s32.totalorder %s15, 0
    %p50 = por %p48, %p49
    %p51 = scmp.ne.s32.totalorder %s37, %s38
    %p52 = scmp.eq.s32.totalorder %s16, 1
    %p53 = por %p51, %p52
    %p55 = scmp.ne.s32.totalorder %s38, %s54
    %p56 = scmp.eq.s32.totalorder %s16, 0
    %p57 = por %p55, %p56
    %s59 = sadd.s32 %s58, 1
    %p62 = scmp.eq.s32.totalorder %s10, 1
    %p63 = scmp.ne.s32.totalorder %s58, %s60
    %p64 = scmp.eq.s32.totalorder %s10, 0
    %p65 = por %p63, %p64
    %p66 = scmp.ne.s32.totalorder %s58, %s60
    %p67 = scmp.eq.s32.totalorder %s15, 1
    %p68 = por %p66, %p67
    %p69 = scmp.ne.s32.totalorder %s60, %s61
    %p70 = scmp.eq.s32.totalorder %s15, 0
    %p71 = por %p69, %p70
    %p72 = scmp.ne.s32.totalorder %s60, %s61
    %p73 = scmp.eq.s32.totalorder %s16, 1
    %p74 = por %p72, %p73
    %p76 = scmp.ne.s32.totalorder %s61, %s75
    %p77 = scmp.eq.s32.totalorder %s16, 0
    %p78 = por %p76, %p77
    %s79 = sadd.s32 %s17, %s18
    %s80 = sadd.s32 %s29, %s25
    %s81 = ssub.s32 %s79, %s80
    %p82 = scmp.eq.s32.totalorder %s81, 0
    %s84 = sadd.s32 %s83, 1
    %s85 = scalar_select %p82, %s83, %s84
    %p88 = pneg %p82
    %p89 = scmp.eq.s32.totalorder %s10, 1
    %p90 = por %p88, %p89
    %p91 = scmp.ne.s32.totalorder %s83, %s86
    %p92 = scmp.eq.s32.totalorder %s10, 0
    %p93 = por %p91, %p92
    %p94 = scmp.ne.s32.totalorder %s83, %s86
    %p95 = scmp.eq.s32.totalorder %s15, 1
    %p96 = por %p94, %p95
    %p97 = scmp.ne.s32.totalorder %s86, %s87
    %p98 = scmp.eq.s32.totalorder %s15, 0
    %p99 = por %p97, %p98
    %p100 = scmp.ne.s32.totalorder %s86, %s87
    %p101 = scmp.eq.s32.totalorder %s16, 1
    %p102 = por %p100, %p101
    %p104 = scmp.ne.s32.totalorder %s87, %s103
    %p105 = scmp.eq.s32.totalorder %s16, 0
    %p106 = por %p104, %p105
    %s107 = ssub.s32 %s17, %s29
    %p108 = scmp.eq.s32.totalorder %s107, 0
    %s110 = sadd.s32 %s109, 1
    %s111 = scalar_select %p108, %s109, %s110
    %p114 = pneg %p108
    %p115 = scmp.eq.s32.totalorder %s10, 1
    %p116 = por %p114, %p115
    %p117 = scmp.ne.s32.totalorder %s109, %s112
    %p118 = scmp.eq.s32.totalorder %s10, 0
    %p119 = por %p117, %p118
    %p120 = scmp.ne.s32.totalorder %s109, %s112
    %p121 = scmp.eq.s32.totalorder %s15, 1
    %p122 = por %p120, %p121
    %p123 = scmp.ne.s32.totalorder %s112, %s113
    %p124 = scmp.eq.s32.totalorder %s15, 0
    %p125 = por %p123, %p124
    %p126 = scmp.ne.s32.totalorder %s112, %s113
    %p127 = scmp.eq.s32.totalorder %s16, 1
    %p128 = por %p126, %p127
    %p130 = scmp.ne.s32.totalorder %s113, %s129
    %p131 = scmp.eq.s32.totalorder %s16, 0
    %p132 = por %p130, %p131
    %p133 = scmp.le.s32.totalorder 1, %s10
    %p134 = scmp.lt.s32.totalorder %s10, 3
    %p135 = pnand %p133, %p134
    %p136 = pneg %p135
    // Predicated region
    $region9: #{ops_forward.6} parent=5 // pred_check
      _
    $region10: #{ops_forward.6} parent=5 // pred_check_branch
      %138 = sbr.rel (%p135) target = $region12
    $region11: #{ops_forward.6} parent=5 // pred_region
      %s139 = ssub.s32 %s10, 1
      // Predicated region
      $region13: #{ops_forward.6} parent=11 // pred_check
        %p140 = pneg %p71
      $region14: #{ops_forward.6} parent=11 // pred_check_branch
        %142 = sbr.rel (%p140) target = $region16
      $region15: #{ops_forward.6} parent=11 // pred_region
        _
      $region16: #{ops_forward.6} parent=11 // pred_fallthru
        _
    $region12: #{ops_forward.6} parent=5 // pred_fallthru
      _
    %p143 = scmp.lt.s32.totalorder %s10, 2
    // Predicated region
    $region17: #{ops_forward.6} parent=5 // pred_check
      %p144 = pneg %p143
    $region18: #{ops_forward.6} parent=5 // pred_check_branch
      %146 = sbr.rel (%p144) target = $region20
    $region19: #{ops_forward.6} parent=5 // pred_region
      // Predicated region
      $region21: #{ops_forward.6} parent=19 // pred_check
        %p147 = pneg %p44
      $region22: #{ops_forward.6} parent=19 // pred_check_branch
        %149 = sbr.rel (%p147) target = $region24
      $region23: #{ops_forward.6} parent=19 // pred_region
        %s150 = sadd.s32 %s17, %s18
        %s151 = smul.u32 64, %s150
        %p152 = scmp.lt.s32.totalorder %s151, 127
        %s153 = scalar_select %p152, %s151, 127
        %s154 = smul.addr %s153, 2
        %s155 = smul.addr %s154, 4
        %s156 = scalar_lea.vmem %s0, %s155
        %s157 = sadd.s32 %s17, %s18
        %s158 = smul.u32 64, %s157
      $region24: #{ops_forward.6} parent=19 // pred_fallthru
        _
    $region20: #{ops_forward.6} parent=5 // pred_fallthru
      _
    %p159 = scmp.le.s32.totalorder 1, %s10
    %p160 = scmp.lt.s32.totalorder %s10, 3
    %p161 = pnand %p159, %p160
    %p162 = pneg %p161
    // Predicated region
    $region25: #{ops_forward.6} parent=5 // pred_check
      _
    $region26: #{ops_forward.6} parent=5 // pred_check_branch
      %164 = sbr.rel (%p161) target = $region28
    $region27: #{ops_forward.6} parent=5 // pred_region
      %s165 = ssub.s32 %s10, 1
      %s166 = sadd.s32 %s19, %s20
      %s167 = smul.u32 64, %s166
      %p168 = scmp.lt.s32.totalorder %s167, 127
      %s169 = scalar_select %p168, %s167, 127
      %s170 = smul.addr %s169, 2
      %s171 = smul.addr %s170, 4
      %s172 = scalar_lea.vmem %s0, %s171
      %p173 = pneg %p50
      %p174 = pneg %p47
      %p175 = pneg %p71
      %p176 = pneg %p68
      %p177 = pneg %p99
      %p178 = pneg %p96
      %s179 = sadd.s32 %s19, %s20
      %s180 = smul.u32 64, %s179
      %p181 = scmp.lt.s32.totalorder %s180, 127
      %s182 = scalar_select %p181, %s180, 127
      %s183 = smul.addr %s182, 4
      %s184 = scalar_lea.vmem %s2, %s183
      %p185 = pneg %p125
      %p186 = pneg %p122
      %s187 = smul.u32 2, %s19
      %p188 = scmp.lt.s32.totalorder %s187, 3
      %s189 = scalar_select %p188, %s187, 3
      %s190 = smul.addr %s189, 8
      %s191 = scalar_lea.vmem %s3, %s190
      %s192 = sadd.s32 %s19, %s20
      %s193 = smul.u32 64, %s192
      %p194 = scmp.lt.s32.totalorder %s193, 127
      %s195 = scalar_select %p194, %s193, 127
      %s196 = smul.addr %s195, 2
      %s197 = smul.addr %s196, 4
      %s198 = scalar_lea.vmem %s0, %s197
      %s199 = sadd.s32 %s19, %s20
      %s200 = smul.u32 64, %s199
      %s201 = sadd.s32 %s19, %s20
      %s202 = smul.u32 64, %s201
      %p203 = scmp.lt.s32.totalorder %s202, 127
      %s204 = scalar_select %p203, %s202, 127
      %s205 = smul.addr %s204, 4
      %s206 = scalar_lea.vmem %s2, %s205
      %s207 = sadd.s32 %s19, %s20
      %s208 = smul.u32 64, %s207
      %s209 = smul.u32 2, %s19
      %p210 = scmp.lt.s32.totalorder %s209, 3
      %s211 = scalar_select %p210, %s209, 3
      %s212 = smul.addr %s211, 8
      %s213 = scalar_lea.vmem %s3, %s212
      %s214 = smul.u32 2, %s19
      %p215 = scmp.eq.s32.totalorder %s20, 0
      // Predicated region
      $region29: #{ops_forward.6} parent=27 // pred_check
        %p216 = pneg %p215
      $region30: #{ops_forward.6} parent=27 // pred_check_branch
        %218 = sbr.rel (%p216) target = $region32
      $region31: #{ops_forward.6} parent=27 // pred_region
        %219 = vst [vmem:[%s213] sm:$0xff] 0.0
        %220 = vst [vmem:[%s213 + $0x8] sm:$0xff] 0.0
      $region32: #{ops_forward.6} parent=27 // pred_fallthru
        _
      %v221 = vld [vmem:[%s198] sm:$0xff]
      %v222 = vld [vmem:[%s198 + $0x8] sm:$0xff]
      %v223 = vld [vmem:[%s198 + $0x10] sm:$0xff]
      %v224 = vld [vmem:[%s198 + $0x18] sm:$0xff]
      %v225 = vld [vmem:[%s198 + $0x20] sm:$0xff]
      %v226 = vld [vmem:[%s198 + $0x28] sm:$0xff]
      %v227 = vld [vmem:[%s198 + $0x30] sm:$0xff]
      %v228 = vld [vmem:[%s198 + $0x38] sm:$0xff]
      %v229 = vld [vmem:[%s198 + $0x40] sm:$0xff]
      %v230 = vld [vmem:[%s198 + $0x48] sm:$0xff]
      %v231 = vld [vmem:[%s198 + $0x50] sm:$0xff]
      %v232 = vld [vmem:[%s198 + $0x58] sm:$0xff]
      %v233 = vld [vmem:[%s198 + $0x60] sm:$0xff]
      %v234 = vld [vmem:[%s198 + $0x68] sm:$0xff]
      %v235 = vld [vmem:[%s198 + $0x70] sm:$0xff]
      %v236 = vld [vmem:[%s198 + $0x78] sm:$0xff]
      %v237 = vld [vmem:[%s198 + $0x80] sm:$0xff]
      %v238 = vld [vmem:[%s198 + $0x88] sm:$0xff]
      %v239 = vld [vmem:[%s198 + $0x90] sm:$0xff]
      %v240 = vld [vmem:[%s198 + $0x98] sm:$0xff]
      %v241 = vld [vmem:[%s198 + $0xa0] sm:$0xff]
      %v242 = vld [vmem:[%s198 + $0xa8] sm:$0xff]
      %v243 = vld [vmem:[%s198 + $0xb0] sm:$0xff]
      %v244 = vld [vmem:[%s198 + $0xb8] sm:$0xff]
      %v245 = vld [vmem:[%s198 + $0xc0] sm:$0xff]
      %v246 = vld [vmem:[%s198 + $0xc8] sm:$0xff]
      %v247 = vld [vmem:[%s198 + $0xd0] sm:$0xff]
      %v248 = vld [vmem:[%s198 + $0xd8] sm:$0xff]
      %v249 = vld [vmem:[%s198 + $0xe0] sm:$0xff]
      %v250 = vld [vmem:[%s198 + $0xe8] sm:$0xff]
      %v251 = vld [vmem:[%s198 + $0xf0] sm:$0xff]
      %v252 = vld [vmem:[%s198 + $0xf8] sm:$0xff]
      %v253 = vld [vmem:[%s198 + $0x100] sm:$0xff]
      %v254 = vld [vmem:[%s198 + $0x108] sm:$0xff]
      %v255 = vld [vmem:[%s198 + $0x110] sm:$0xff]
      %v256 = vld [vmem:[%s198 + $0x118] sm:$0xff]
      %v257 = vld [vmem:[%s198 + $0x120] sm:$0xff]
      %v258 = vld [vmem:[%s198 + $0x128] sm:$0xff]
      %v259 = vld [vmem:[%s198 + $0x130] sm:$0xff]
      %v260 = vld [vmem:[%s198 + $0x138] sm:$0xff]
      %v261 = vld [vmem:[%s198 + $0x140] sm:$0xff]
      %v262 = vld [vmem:[%s198 + $0x148] sm:$0xff]
      %v263 = vld [vmem:[%s198 + $0x150] sm:$0xff]
      %v264 = vld [vmem:[%s198 + $0x158] sm:$0xff]
      %v265 = vld [vmem:[%s198 + $0x160] sm:$0xff]
      %v266 = vld [vmem:[%s198 + $0x168] sm:$0xff]
      %v267 = vld [vmem:[%s198 + $0x170] sm:$0xff]
      %v268 = vld [vmem:[%s198 + $0x178] sm:$0xff]
      %v269 = vld [vmem:[%s198 + $0x180] sm:$0xff]
      %v270 = vld [vmem:[%s198 + $0x188] sm:$0xff]
      %v271 = vld [vmem:[%s198 + $0x190] sm:$0xff]
      %v272 = vld [vmem:[%s198 + $0x198] sm:$0xff]
      %v273 = vld [vmem:[%s198 + $0x1a0] sm:$0xff]
      %v274 = vld [vmem:[%s198 + $0x1a8] sm:$0xff]
      %v275 = vld [vmem:[%s198 + $0x1b0] sm:$0xff]
      %v276 = vld [vmem:[%s198 + $0x1b8] sm:$0xff]
      %v277 = vld [vmem:[%s198 + $0x1c0] sm:$0xff]
      %v278 = vld [vmem:[%s198 + $0x1c8] sm:$0xff]
      %v279 = vld [vmem:[%s198 + $0x1d0] sm:$0xff]
      %v280 = vld [vmem:[%s198 + $0x1d8] sm:$0xff]
      %v281 = vld [vmem:[%s198 + $0x1e0] sm:$0xff]
      %v282 = vld [vmem:[%s198 + $0x1e8] sm:$0xff]
      %v283 = vld [vmem:[%s198 + $0x1f0] sm:$0xff]
      %v284 = vld [vmem:[%s198 + $0x1f8] sm:$0xff]
      %v285 = vld [vmem:[%s1] sm:$0xf]
      %v286 = vld [vmem:[%s1 + $0x4] sm:$0xf]
      %v287 = vld [vmem:[%s1 + $0x8] sm:$0xf]
      %v288 = vld [vmem:[%s1 + $0xc] sm:$0xf]
      %v289 = vld [vmem:[%s1 + $0x10] sm:$0xf]
      %v290 = vld [vmem:[%s1 + $0x14] sm:$0xf]
      %v291 = vld [vmem:[%s1 + $0x18] sm:$0xf]
      %v292 = vld [vmem:[%s1 + $0x1c] sm:$0xf]
      %v293 = vld [vmem:[%s1 + $0x20] sm:$0xf]
      %v294 = vld [vmem:[%s1 + $0x24] sm:$0xf]
      %v295 = vld [vmem:[%s1 + $0x28] sm:$0xf]
      %v296 = vld [vmem:[%s1 + $0x2c] sm:$0xf]
      %v297 = vld [vmem:[%s1 + $0x30] sm:$0xf]
      %v298 = vld [vmem:[%s1 + $0x34] sm:$0xf]
      %v299 = vld [vmem:[%s1 + $0x38] sm:$0xf]
      %v300 = vld [vmem:[%s1 + $0x3c] sm:$0xf]
      %v301 = vld [vmem:[%s1 + $0x40] sm:$0xf]
      %v302 = vld [vmem:[%s1 + $0x44] sm:$0xf]
      %v303 = vld [vmem:[%s1 + $0x48] sm:$0xf]
      %v304 = vld [vmem:[%s1 + $0x4c] sm:$0xf]
      %v305 = vld [vmem:[%s1 + $0x50] sm:$0xf]
      %v306 = vld [vmem:[%s1 + $0x54] sm:$0xf]
      %v307 = vld [vmem:[%s1 + $0x58] sm:$0xf]
      %v308 = vld [vmem:[%s1 + $0x5c] sm:$0xf]
      %v309 = vld [vmem:[%s1 + $0x60] sm:$0xf]
      %v310 = vld [vmem:[%s1 + $0x64] sm:$0xf]
      %v311 = vld [vmem:[%s1 + $0x68] sm:$0xf]
      %v312 = vld [vmem:[%s1 + $0x6c] sm:$0xf]
      %v313 = vld [vmem:[%s1 + $0x70] sm:$0xf]
      %v314 = vld [vmem:[%s1 + $0x74] sm:$0xf]
      %v315 = vld [vmem:[%s1 + $0x78] sm:$0xf]
      %v316 = vld [vmem:[%s1 + $0x7c] sm:$0xf]
      %v381 = vunpack.c.l.b16 %v221
      %v382 = vunpack.c.h.b16 %v221
      %v383 = vunpack.c.l.b16 %v222
      %v384 = vunpack.c.h.b16 %v222
      %v385 = vunpack.c.l.b16 %v223
      %v386 = vunpack.c.h.b16 %v223
      %v387 = vunpack.c.l.b16 %v224
      %v388 = vunpack.c.h.b16 %v224
      %v389 = vunpack.c.l.b16 %v225
      %v390 = vunpack.c.h.b16 %v225
      %v391 = vunpack.c.l.b16 %v226
      %v392 = vunpack.c.h.b16 %v226
      %v393 = vunpack.c.l.b16 %v227
      %v394 = vunpack.c.h.b16 %v227
      %v395 = vunpack.c.l.b16 %v228
      %v396 = vunpack.c.h.b16 %v228
      %v397 = vunpack.c.l.b16 %v229
      %v398 = vunpack.c.h.b16 %v229
      %v399 = vunpack.c.l.b16 %v230
      %v400 = vunpack.c.h.b16 %v230
      %v401 = vunpack.c.l.b16 %v231
      %v402 = vunpack.c.h.b16 %v231
      %v403 = vunpack.c.l.b16 %v232
      %v404 = vunpack.c.h.b16 %v232
      %v405 = vunpack.c.l.b16 %v233
      %v406 = vunpack.c.h.b16 %v233
      %v407 = vunpack.c.l.b16 %v234
      %v408 = vunpack.c.h.b16 %v234
      %v409 = vunpack.c.l.b16 %v235
      %v410 = vunpack.c.h.b16 %v235
      %v411 = vunpack.c.l.b16 %v236
      %v412 = vunpack.c.h.b16 %v236
      %v413 = vunpack.c.l.b16 %v237
      %v414 = vunpack.c.h.b16 %v237
      %v415 = vunpack.c.l.b16 %v238
      %v416 = vunpack.c.h.b16 %v238
      %v417 = vunpack.c.l.b16 %v239
      %v418 = vunpack.c.h.b16 %v239
      %v419 = vunpack.c.l.b16 %v240
      %v420 = vunpack.c.h.b16 %v240
      %v421 = vunpack.c.l.b16 %v241
      %v422 = vunpack.c.h.b16 %v241
      %v423 = vunpack.c.l.b16 %v242
      %v424 = vunpack.c.h.b16 %v242
      %v425 = vunpack.c.l.b16 %v243
      %v426 = vunpack.c.h.b16 %v243
      %v427 = vunpack.c.l.b16 %v244
      %v428 = vunpack.c.h.b16 %v244
      %v429 = vunpack.c.l.b16 %v245
      %v430 = vunpack.c.h.b16 %v245
      %v431 = vunpack.c.l.b16 %v246
      %v432 = vunpack.c.h.b16 %v246
      %v433 = vunpack.c.l.b16 %v247
      %v434 = vunpack.c.h.b16 %v247
      %v435 = vunpack.c.l.b16 %v248
      %v436 = vunpack.c.h.b16 %v248
      %v437 = vunpack.c.l.b16 %v249
      %v438 = vunpack.c.h.b16 %v249
      %v439 = vunpack.c.l.b16 %v250
      %v440 = vunpack.c.h.b16 %v250
      %v441 = vunpack.c.l.b16 %v251
      %v442 = vunpack.c.h.b16 %v251
      %v443 = vunpack.c.l.b16 %v252
      %v444 = vunpack.c.h.b16 %v252
      %v445 = vunpack.c.l.b16 %v253
      %v446 = vunpack.c.h.b16 %v253
      %v447 = vunpack.c.l.b16 %v254
      %v448 = vunpack.c.h.b16 %v254
      %v449 = vunpack.c.l.b16 %v255
      %v450 = vunpack.c.h.b16 %v255
      %v451 = vunpack.c.l.b16 %v256
      %v452 = vunpack.c.h.b16 %v256
      %v453 = vunpack.c.l.b16 %v257
      %v454 = vunpack.c.h.b16 %v257
      %v455 = vunpack.c.l.b16 %v258
      %v456 = vunpack.c.h.b16 %v258
      %v457 = vunpack.c.l.b16 %v259
      %v458 = vunpack.c.h.b16 %v259
      %v459 = vunpack.c.l.b16 %v260
      %v460 = vunpack.c.h.b16 %v260
      %v461 = vunpack.c.l.b16 %v261
      %v462 = vunpack.c.h.b16 %v261
      %v463 = vunpack.c.l.b16 %v262
      %v464 = vunpack.c.h.b16 %v262
      %v465 = vunpack.c.l.b16 %v263
      %v466 = vunpack.c.h.b16 %v263
      %v467 = vunpack.c.l.b16 %v264
      %v468 = vunpack.c.h.b16 %v264
      %v469 = vunpack.c.l.b16 %v265
      %v470 = vunpack.c.h.b16 %v265
      %v471 = vunpack.c.l.b16 %v266
      %v472 = vunpack.c.h.b16 %v266
      %v473 = vunpack.c.l.b16 %v267
      %v474 = vunpack.c.h.b16 %v267
      %v475 = vunpack.c.l.b16 %v268
      %v476 = vunpack.c.h.b16 %v268
      %v477 = vunpack.c.l.b16 %v269
      %v478 = vunpack.c.h.b16 %v269
      %v479 = vunpack.c.l.b16 %v270
      %v480 = vunpack.c.h.b16 %v270
      %v481 = vunpack.c.l.b16 %v271
      %v482 = vunpack.c.h.b16 %v271
      %v483 = vunpack.c.l.b16 %v272
      %v484 = vunpack.c.h.b16 %v272
      %v485 = vunpack.c.l.b16 %v273
      %v486 = vunpack.c.h.b16 %v273
      %v487 = vunpack.c.l.b16 %v274
      %v488 = vunpack.c.h.b16 %v274
      %v489 = vunpack.c.l.b16 %v275
      %v490 = vunpack.c.h.b16 %v275
      %v491 = vunpack.c.l.b16 %v276
      %v492 = vunpack.c.h.b16 %v276
      %v493 = vunpack.c.l.b16 %v277
      %v494 = vunpack.c.h.b16 %v277
      %v495 = vunpack.c.l.b16 %v278
      %v496 = vunpack.c.h.b16 %v278
      %v497 = vunpack.c.l.b16 %v279
      %v498 = vunpack.c.h.b16 %v279
      %v499 = vunpack.c.l.b16 %v280
      %v500 = vunpack.c.h.b16 %v280
      %v501 = vunpack.c.l.b16 %v281
      %v502 = vunpack.c.h.b16 %v281
      %v503 = vunpack.c.l.b16 %v282
      %v504 = vunpack.c.h.b16 %v282
      %v505 = vunpack.c.l.b16 %v283
      %v506 = vunpack.c.h.b16 %v283
      %v507 = vunpack.c.l.b16 %v284
      %v508 = vunpack.c.h.b16 %v284
      %v509 = vpack.c.b16 %v383, %v381
      %v510 = vpack.c.b16 %v384, %v382
      %v511 = vpack.c.b16 %v387, %v385
      %v512 = vpack.c.b16 %v388, %v386
      %v513 = vpack.c.b16 %v391, %v389
      %v514 = vpack.c.b16 %v392, %v390
      %v515 = vpack.c.b16 %v395, %v393
      %v516 = vpack.c.b16 %v396, %v394
      %v517 = vpack.c.b16 %v399, %v397
      %v518 = vpack.c.b16 %v400, %v398
      %v519 = vpack.c.b16 %v403, %v401
      %v520 = vpack.c.b16 %v404, %v402
      %v521 = vpack.c.b16 %v407, %v405
      %v522 = vpack.c.b16 %v408, %v406
      %v523 = vpack.c.b16 %v411, %v409
      %v524 = vpack.c.b16 %v412, %v410
      %v525 = vpack.c.b16 %v415, %v413
      %v526 = vpack.c.b16 %v416, %v414
      %v527 = vpack.c.b16 %v419, %v417
      %v528 = vpack.c.b16 %v420, %v418
      %v529 = vpack.c.b16 %v423, %v421
      %v530 = vpack.c.b16 %v424, %v422
      %v531 = vpack.c.b16 %v427, %v425
      %v532 = vpack.c.b16 %v428, %v426
      %v533 = vpack.c.b16 %v431, %v429
      %v534 = vpack.c.b16 %v432, %v430
      %v535 = vpack.c.b16 %v435, %v433
      %v536 = vpack.c.b16 %v436, %v434
      %v537 = vpack.c.b16 %v439, %v437
      %v538 = vpack.c.b16 %v440, %v438
      %v539 = vpack.c.b16 %v443, %v441
      %v540 = vpack.c.b16 %v444, %v442
      %v541 = vpack.c.b16 %v447, %v445
      %v542 = vpack.c.b16 %v448, %v446
      %v543 = vpack.c.b16 %v451, %v449
      %v544 = vpack.c.b16 %v452, %v450
      %v545 = vpack.c.b16 %v455, %v453
      %v546 = vpack.c.b16 %v456, %v454
      %v547 = vpack.c.b16 %v459, %v457
      %v548 = vpack.c.b16 %v460, %v458
      %v549 = vpack.c.b16 %v463, %v461
      %v550 = vpack.c.b16 %v464, %v462
      %v551 = vpack.c.b16 %v467, %v465
      %v552 = vpack.c.b16 %v468, %v466
      %v553 = vpack.c.b16 %v471, %v469
      %v554 = vpack.c.b16 %v472, %v470
      %v555 = vpack.c.b16 %v475, %v473
      %v556 = vpack.c.b16 %v476, %v474
      %v557 = vpack.c.b16 %v479, %v477
      %v558 = vpack.c.b16 %v480, %v478
      %v559 = vpack.c.b16 %v483, %v481
      %v560 = vpack.c.b16 %v484, %v482
      %v561 = vpack.c.b16 %v487, %v485
      %v562 = vpack.c.b16 %v488, %v486
      %v563 = vpack.c.b16 %v491, %v489
      %v564 = vpack.c.b16 %v492, %v490
      %v565 = vpack.c.b16 %v495, %v493
      %v566 = vpack.c.b16 %v496, %v494
      %v567 = vpack.c.b16 %v499, %v497
      %v568 = vpack.c.b16 %v500, %v498
      %v569 = vpack.c.b16 %v503, %v501
      %v570 = vpack.c.b16 %v504, %v502
      %v571 = vpack.c.b16 %v507, %v505
      %v572 = vpack.c.b16 %v508, %v506
      %v669 = vunpack.c.l.b16 %v285
      %v670 = vunpack.c.l.b16 %v286
      %v671 = vunpack.c.l.b16 %v287
      %v672 = vunpack.c.l.b16 %v288
      %v673 = vunpack.c.l.b16 %v289
      %v674 = vunpack.c.l.b16 %v290
      %v675 = vunpack.c.l.b16 %v291
      %v676 = vunpack.c.l.b16 %v292
      %v677 = vunpack.c.l.b16 %v293
      %v678 = vunpack.c.l.b16 %v294
      %v679 = vunpack.c.l.b16 %v295
      %v680 = vunpack.c.l.b16 %v296
      %v681 = vunpack.c.l.b16 %v297
      %v682 = vunpack.c.l.b16 %v298
      %v683 = vunpack.c.l.b16 %v299
      %v684 = vunpack.c.l.b16 %v300
      %v685 = vunpack.c.l.b16 %v301
      %v686 = vunpack.c.l.b16 %v302
      %v687 = vunpack.c.l.b16 %v303
      %v688 = vunpack.c.l.b16 %v304
      %v689 = vunpack.c.l.b16 %v305
      %v690 = vunpack.c.l.b16 %v306
      %v691 = vunpack.c.l.b16 %v307
      %v692 = vunpack.c.l.b16 %v308
      %v693 = vunpack.c.l.b16 %v309
      %v694 = vunpack.c.l.b16 %v310
      %v695 = vunpack.c.l.b16 %v311
      %v696 = vunpack.c.l.b16 %v312
      %v697 = vunpack.c.l.b16 %v313
      %v698 = vunpack.c.l.b16 %v314
      %v699 = vunpack.c.l.b16 %v315
      %v700 = vunpack.c.l.b16 %v316
      %v701 = vpack.c.b16 %v670, %v669
      %v702 = vpack.c.b16 %v672, %v671
      %v703 = vpack.c.b16 %v674, %v673
      %v704 = vpack.c.b16 %v676, %v675
      %v705 = vpack.c.b16 %v678, %v677
      %v706 = vpack.c.b16 %v680, %v679
      %v707 = vpack.c.b16 %v682, %v681
      %v708 = vpack.c.b16 %v684, %v683
      %v709 = vpack.c.b16 %v686, %v685
      %v710 = vpack.c.b16 %v688, %v687
      %v711 = vpack.c.b16 %v690, %v689
      %v712 = vpack.c.b16 %v692, %v691
      %v713 = vpack.c.b16 %v694, %v693
      %v714 = vpack.c.b16 %v696, %v695
      %v715 = vpack.c.b16 %v698, %v697
      %v716 = vpack.c.b16 %v700, %v699
      %733 = vmatpush.bf16.msra.mxu0 %v708
      %734 = vmatpush.bf16.msra.mxu0 %v707
      %735 = vmatpush.bf16.msra.mxu0 %v706
      %736 = vmatpush.bf16.msra.mxu0 %v705
      %737 = vmatpush.bf16.msra.mxu0 %v704
      %738 = vmatpush.bf16.msra.mxu0 %v703
      %739 = vmatpush.bf16.msra.mxu0 %v702
      %740 = vmatpush.bf16.msra.mxu0 %v701
      %741 = vmatmul.bf16.gmra.mxu0 %v509
      %v742 = vpop.f32.mrf.mxu0
      %v743 = vadd.f32 0.0, %v742
      %v744 = vpop.f32.mrf.mxu0
      %v745 = vadd.f32 0.0, %v744
      %746 = vmatmul.bf16.gmra.mxu0 %v511
      %v747 = vpop.f32.mrf.mxu0
      %v748 = vadd.f32 0.0, %v747
      %v749 = vpop.f32.mrf.mxu0
      %v750 = vadd.f32 0.0, %v749
      %751 = vmatmul.bf16.gmra.mxu0 %v513
      %v752 = vpop.f32.mrf.mxu0
      %v753 = vadd.f32 0.0, %v752
      %v754 = vpop.f32.mrf.mxu0
      %v755 = vadd.f32 0.0, %v754
      %756 = vmatmul.bf16.gmra.mxu0 %v515
      %v757 = vpop.f32.mrf.mxu0
      %v758 = vadd.f32 0.0, %v757
      %v759 = vpop.f32.mrf.mxu0
      %v760 = vadd.f32 0.0, %v759
      %761 = vmatmul.bf16.gmra.mxu0 %v517
      %v762 = vpop.f32.mrf.mxu0
      %v763 = vadd.f32 0.0, %v762
      %v764 = vpop.f32.mrf.mxu0
      %v765 = vadd.f32 0.0, %v764
      %766 = vmatmul.bf16.gmra.mxu0 %v519
      %v767 = vpop.f32.mrf.mxu0
      %v768 = vadd.f32 0.0, %v767
      %v769 = vpop.f32.mrf.mxu0
      %v770 = vadd.f32 0.0, %v769
      %771 = vmatmul.bf16.gmra.mxu0 %v521
      %v772 = vpop.f32.mrf.mxu0
      %v773 = vadd.f32 0.0, %v772
      %v774 = vpop.f32.mrf.mxu0
      %v775 = vadd.f32 0.0, %v774
      %776 = vmatmul.bf16.gmra.mxu0 %v523
      %v777 = vpop.f32.mrf.mxu0
      %v778 = vadd.f32 0.0, %v777
      %v779 = vpop.f32.mrf.mxu0
      %v780 = vadd.f32 0.0, %v779
      %781 = vmatmul.bf16.gmra.mxu0 %v525
      %v782 = vpop.f32.mrf.mxu0
      %v783 = vadd.f32 0.0, %v782
      %v784 = vpop.f32.mrf.mxu0
      %v785 = vadd.f32 0.0, %v784
      %786 = vmatmul.bf16.gmra.mxu0 %v527
      %v787 = vpop.f32.mrf.mxu0
      %v788 = vadd.f32 0.0, %v787
      %v789 = vpop.f32.mrf.mxu0
      %v790 = vadd.f32 0.0, %v789
      %791 = vmatmul.bf16.gmra.mxu0 %v529
      %v792 = vpop.f32.mrf.mxu0
      %v793 = vadd.f32 0.0, %v792
      %v794 = vpop.f32.mrf.mxu0
      %v795 = vadd.f32 0.0, %v794
      %796 = vmatmul.bf16.gmra.mxu0 %v531
      %v797 = vpop.f32.mrf.mxu0
      %v798 = vadd.f32 0.0, %v797
      %v799 = vpop.f32.mrf.mxu0
      %v800 = vadd.f32 0.0, %v799
      %801 = vmatmul.bf16.gmra.mxu0 %v533
      %v802 = vpop.f32.mrf.mxu0
      %v803 = vadd.f32 0.0, %v802
      %v804 = vpop.f32.mrf.mxu0
      %v805 = vadd.f32 0.0, %v804
      %806 = vmatmul.bf16.gmra.mxu0 %v535
      %v807 = vpop.f32.mrf.mxu0
      %v808 = vadd.f32 0.0, %v807
      %v809 = vpop.f32.mrf.mxu0
      %v810 = vadd.f32 0.0, %v809
      %811 = vmatmul.bf16.gmra.mxu0 %v537
      %v812 = vpop.f32.mrf.mxu0
      %v813 = vadd.f32 0.0, %v812
      %v814 = vpop.f32.mrf.mxu0
      %v815 = vadd.f32 0.0, %v814
      %816 = vmatmul.bf16.gmra.mxu0 %v539
      %v817 = vpop.f32.mrf.mxu0
      %v818 = vadd.f32 0.0, %v817
      %v819 = vpop.f32.mrf.mxu0
      %v820 = vadd.f32 0.0, %v819
      %821 = vmatmul.bf16.gmra.mxu0 %v541
      %v822 = vpop.f32.mrf.mxu0
      %v823 = vadd.f32 0.0, %v822
      %v824 = vpop.f32.mrf.mxu0
      %v825 = vadd.f32 0.0, %v824
      %826 = vmatmul.bf16.gmra.mxu0 %v543
      %v827 = vpop.f32.mrf.mxu0
      %v828 = vadd.f32 0.0, %v827
      %v829 = vpop.f32.mrf.mxu0
      %v830 = vadd.f32 0.0, %v829
      %831 = vmatmul.bf16.gmra.mxu0 %v545
      %v832 = vpop.f32.mrf.mxu0
      %v833 = vadd.f32 0.0, %v832
      %v834 = vpop.f32.mrf.mxu0
      %v835 = vadd.f32 0.0, %v834
      %836 = vmatmul.bf16.gmra.mxu0 %v547
      %v837 = vpop.f32.mrf.mxu0
      %v838 = vadd.f32 0.0, %v837
      %v839 = vpop.f32.mrf.mxu0
      %v840 = vadd.f32 0.0, %v839
      %841 = vmatmul.bf16.gmra.mxu0 %v549
      %v842 = vpop.f32.mrf.mxu0
      %v843 = vadd.f32 0.0, %v842
      %v844 = vpop.f32.mrf.mxu0
      %v845 = vadd.f32 0.0, %v844
      %846 = vmatmul.bf16.gmra.mxu0 %v551
      %v847 = vpop.f32.mrf.mxu0
      %v848 = vadd.f32 0.0, %v847
      %v849 = vpop.f32.mrf.mxu0
      %v850 = vadd.f32 0.0, %v849
      %851 = vmatmul.bf16.gmra.mxu0 %v553
      %v852 = vpop.f32.mrf.mxu0
      %v853 = vadd.f32 0.0, %v852
      %v854 = vpop.f32.mrf.mxu0
      %v855 = vadd.f32 0.0, %v854
      %856 = vmatmul.bf16.gmra.mxu0 %v555
      %v857 = vpop.f32.mrf.mxu0
      %v858 = vadd.f32 0.0, %v857
      %v859 = vpop.f32.mrf.mxu0
      %v860 = vadd.f32 0.0, %v859
      %861 = vmatmul.bf16.gmra.mxu0 %v557
      %v862 = vpop.f32.mrf.mxu0
      %v863 = vadd.f32 0.0, %v862
      %v864 = vpop.f32.mrf.mxu0
      %v865 = vadd.f32 0.0, %v864
      %866 = vmatmul.bf16.gmra.mxu0 %v559
      %v867 = vpop.f32.mrf.mxu0
      %v868 = vadd.f32 0.0, %v867
      %v869 = vpop.f32.mrf.mxu0
      %v870 = vadd.f32 0.0, %v869
      %871 = vmatmul.bf16.gmra.mxu0 %v561
      %v872 = vpop.f32.mrf.mxu0
      %v873 = vadd.f32 0.0, %v872
      %v874 = vpop.f32.mrf.mxu0
      %v875 = vadd.f32 0.0, %v874
      %876 = vmatmul.bf16.gmra.mxu0 %v563
      %v877 = vpop.f32.mrf.mxu0
      %v878 = vadd.f32 0.0, %v877
      %v879 = vpop.f32.mrf.mxu0
      %v880 = vadd.f32 0.0, %v879
      %881 = vmatmul.bf16.gmra.mxu0 %v565
      %v882 = vpop.f32.mrf.mxu0
      %v883 = vadd.f32 0.0, %v882
      %v884 = vpop.f32.mrf.mxu0
      %v885 = vadd.f32 0.0, %v884
      %886 = vmatmul.bf16.gmra.mxu0 %v567
      %v887 = vpop.f32.mrf.mxu0
      %v888 = vadd.f32 0.0, %v887
      %v889 = vpop.f32.mrf.mxu0
      %v890 = vadd.f32 0.0, %v889
      %891 = vmatmul.bf16.gmra.mxu0 %v569
      %v892 = vpop.f32.mrf.mxu0
      %v893 = vadd.f32 0.0, %v892
      %v894 = vpop.f32.mrf.mxu0
      %v895 = vadd.f32 0.0, %v894
      %896 = vmatmul.bf16.gmra.mxu0 %v571
      %v897 = vpop.f32.mrf.mxu0
      %v898 = vadd.f32 0.0, %v897
      %v899 = vpop.f32.mrf.mxu0
      %v900 = vadd.f32 0.0, %v899
      %901 = vdwg.mxu0
      %902 = vmatpush.bf16.msra.mxu0 %v716
      %903 = vmatpush.bf16.msra.mxu0 %v715
      %904 = vmatpush.bf16.msra.mxu0 %v714
      %905 = vmatpush.bf16.msra.mxu0 %v713
      %906 = vmatpush.bf16.msra.mxu0 %v712
      %907 = vmatpush.bf16.msra.mxu0 %v711
      %908 = vmatpush.bf16.msra.mxu0 %v710
      %909 = vmatpush.bf16.msra.mxu0 %v709
      %910 = vmatmul.bf16.gmra.mxu0 %v510
      %v911 = vpop.f32.mrf.mxu0
      %v912 = vadd.f32 %v743, %v911
      %v913 = vpop.f32.mrf.mxu0
      %v914 = vadd.f32 %v745, %v913
      %915 = vmatmul.bf16.gmra.mxu0 %v512
      %v916 = vpop.f32.mrf.mxu0
      %v917 = vadd.f32 %v748, %v916
      %v918 = vpop.f32.mrf.mxu0
      %v919 = vadd.f32 %v750, %v918
      %920 = vmatmul.bf16.gmra.mxu0 %v514
      %v921 = vpop.f32.mrf.mxu0
      %v922 = vadd.f32 %v753, %v921
      %v923 = vpop.f32.mrf.mxu0
      %v924 = vadd.f32 %v755, %v923
      %925 = vmatmul.bf16.gmra.mxu0 %v516
      %v926 = vpop.f32.mrf.mxu0
      %v927 = vadd.f32 %v758, %v926
      %v928 = vpop.f32.mrf.mxu0
      %v929 = vadd.f32 %v760, %v928
      %930 = vmatmul.bf16.gmra.mxu0 %v518
      %v931 = vpop.f32.mrf.mxu0
      %v932 = vadd.f32 %v763, %v931
      %v933 = vpop.f32.mrf.mxu0
      %v934 = vadd.f32 %v765, %v933
      %935 = vmatmul.bf16.gmra.mxu0 %v520
      %v936 = vpop.f32.mrf.mxu0
      %v937 = vadd.f32 %v768, %v936
      %v938 = vpop.f32.mrf.mxu0
      %v939 = vadd.f32 %v770, %v938
      %940 = vmatmul.bf16.gmra.mxu0 %v522
      %v941 = vpop.f32.mrf.mxu0
      %v942 = vadd.f32 %v773, %v941
      %v943 = vpop.f32.mrf.mxu0
      %v944 = vadd.f32 %v775, %v943
      %945 = vmatmul.bf16.gmra.mxu0 %v524
      %v946 = vpop.f32.mrf.mxu0
      %v947 = vadd.f32 %v778, %v946
      %v948 = vpop.f32.mrf.mxu0
      %v949 = vadd.f32 %v780, %v948
      %950 = vmatmul.bf16.gmra.mxu0 %v526
      %v951 = vpop.f32.mrf.mxu0
      %v952 = vadd.f32 %v783, %v951
      %v953 = vpop.f32.mrf.mxu0
      %v954 = vadd.f32 %v785, %v953
      %955 = vmatmul.bf16.gmra.mxu0 %v528
      %v956 = vpop.f32.mrf.mxu0
      %v957 = vadd.f32 %v788, %v956
      %v958 = vpop.f32.mrf.mxu0
      %v959 = vadd.f32 %v790, %v958
      %960 = vmatmul.bf16.gmra.mxu0 %v530
      %v961 = vpop.f32.mrf.mxu0
      %v962 = vadd.f32 %v793, %v961
      %v963 = vpop.f32.mrf.mxu0
      %v964 = vadd.f32 %v795, %v963
      %965 = vmatmul.bf16.gmra.mxu0 %v532
      %v966 = vpop.f32.mrf.mxu0
      %v967 = vadd.f32 %v798, %v966
      %v968 = vpop.f32.mrf.mxu0
      %v969 = vadd.f32 %v800, %v968
      %970 = vmatmul.bf16.gmra.mxu0 %v534
      %v971 = vpop.f32.mrf.mxu0
      %v972 = vadd.f32 %v803, %v971
      %v973 = vpop.f32.mrf.mxu0
      %v974 = vadd.f32 %v805, %v973
      %975 = vmatmul.bf16.gmra.mxu0 %v536
      %v976 = vpop.f32.mrf.mxu0
      %v977 = vadd.f32 %v808, %v976
      %v978 = vpop.f32.mrf.mxu0
      %v979 = vadd.f32 %v810, %v978
      %980 = vmatmul.bf16.gmra.mxu0 %v538
      %v981 = vpop.f32.mrf.mxu0
      %v982 = vadd.f32 %v813, %v981
      %v983 = vpop.f32.mrf.mxu0
      %v984 = vadd.f32 %v815, %v983
      %985 = vmatmul.bf16.gmra.mxu0 %v540
      %v986 = vpop.f32.mrf.mxu0
      %v987 = vadd.f32 %v818, %v986
      %v988 = vpop.f32.mrf.mxu0
      %v989 = vadd.f32 %v820, %v988
      %990 = vmatmul.bf16.gmra.mxu0 %v542
      %v991 = vpop.f32.mrf.mxu0
      %v992 = vadd.f32 %v823, %v991
      %v993 = vpop.f32.mrf.mxu0
      %v994 = vadd.f32 %v825, %v993
      %995 = vmatmul.bf16.gmra.mxu0 %v544
      %v996 = vpop.f32.mrf.mxu0
      %v997 = vadd.f32 %v828, %v996
      %v998 = vpop.f32.mrf.mxu0
      %v999 = vadd.f32 %v830, %v998
      %1000 = vmatmul.bf16.gmra.mxu0 %v546
      %v1001 = vpop.f32.mrf.mxu0
      %v1002 = vadd.f32 %v833, %v1001
      %v1003 = vpop.f32.mrf.mxu0
      %v1004 = vadd.f32 %v835, %v1003
      %1005 = vmatmul.bf16.gmra.mxu0 %v548
      %v1006 = vpop.f32.mrf.mxu0
      %v1007 = vadd.f32 %v838, %v1006
      %v1008 = vpop.f32.mrf.mxu0
      %v1009 = vadd.f32 %v840, %v1008
      %1010 = vmatmul.bf16.gmra.mxu0 %v550
      %v1011 = vpop.f32.mrf.mxu0
      %v1012 = vadd.f32 %v843, %v1011
      %v1013 = vpop.f32.mrf.mxu0
      %v1014 = vadd.f32 %v845, %v1013
      %1015 = vmatmul.bf16.gmra.mxu0 %v552
      %v1016 = vpop.f32.mrf.mxu0
      %v1017 = vadd.f32 %v848, %v1016
      %v1018 = vpop.f32.mrf.mxu0
      %v1019 = vadd.f32 %v850, %v1018
      %1020 = vmatmul.bf16.gmra.mxu0 %v554
      %v1021 = vpop.f32.mrf.mxu0
      %v1022 = vadd.f32 %v853, %v1021
      %v1023 = vpop.f32.mrf.mxu0
      %v1024 = vadd.f32 %v855, %v1023
      %1025 = vmatmul.bf16.gmra.mxu0 %v556
      %v1026 = vpop.f32.mrf.mxu0
      %v1027 = vadd.f32 %v858, %v1026
      %v1028 = vpop.f32.mrf.mxu0
      %v1029 = vadd.f32 %v860, %v1028
      %1030 = vmatmul.bf16.gmra.mxu0 %v558
      %v1031 = vpop.f32.mrf.mxu0
      %v1032 = vadd.f32 %v863, %v1031
      %v1033 = vpop.f32.mrf.mxu0
      %v1034 = vadd.f32 %v865, %v1033
      %1035 = vmatmul.bf16.gmra.mxu0 %v560
      %v1036 = vpop.f32.mrf.mxu0
      %v1037 = vadd.f32 %v868, %v1036
      %v1038 = vpop.f32.mrf.mxu0
      %v1039 = vadd.f32 %v870, %v1038
      %1040 = vmatmul.bf16.gmra.mxu0 %v562
      %v1041 = vpop.f32.mrf.mxu0
      %v1042 = vadd.f32 %v873, %v1041
      %v1043 = vpop.f32.mrf.mxu0
      %v1044 = vadd.f32 %v875, %v1043
      %1045 = vmatmul.bf16.gmra.mxu0 %v564
      %v1046 = vpop.f32.mrf.mxu0
      %v1047 = vadd.f32 %v878, %v1046
      %v1048 = vpop.f32.mrf.mxu0
      %v1049 = vadd.f32 %v880, %v1048
      %1050 = vmatmul.bf16.gmra.mxu0 %v566
      %v1051 = vpop.f32.mrf.mxu0
      %v1052 = vadd.f32 %v883, %v1051
      %v1053 = vpop.f32.mrf.mxu0
      %v1054 = vadd.f32 %v885, %v1053
      %1055 = vmatmul.bf16.gmra.mxu0 %v568
      %v1056 = vpop.f32.mrf.mxu0
      %v1057 = vadd.f32 %v888, %v1056
      %v1058 = vpop.f32.mrf.mxu0
      %v1059 = vadd.f32 %v890, %v1058
      %1060 = vmatmul.bf16.gmra.mxu0 %v570
      %v1061 = vpop.f32.mrf.mxu0
      %v1062 = vadd.f32 %v893, %v1061
      %v1063 = vpop.f32.mrf.mxu0
      %v1064 = vadd.f32 %v895, %v1063
      %1065 = vmatmul.bf16.gmra.mxu0 %v572
      %v1066 = vpop.f32.mrf.mxu0
      %v1067 = vadd.f32 %v898, %v1066
      %v1068 = vpop.f32.mrf.mxu0
      %v1069 = vadd.f32 %v900, %v1068
      %1070 = vdwg.mxu0
      %v1071 = vpack.c.bf16 %v912, %v912
      %v1072 = vpack.c.bf16 %v914, %v914
      %v1073 = vpack.c.bf16 %v917, %v917
      %v1074 = vpack.c.bf16 %v919, %v919
      %v1075 = vpack.c.bf16 %v922, %v922
      %v1076 = vpack.c.bf16 %v924, %v924
      %v1077 = vpack.c.bf16 %v927, %v927
      %v1078 = vpack.c.bf16 %v929, %v929
      %v1079 = vpack.c.bf16 %v932, %v932
      %v1080 = vpack.c.bf16 %v934, %v934
      %v1081 = vpack.c.bf16 %v937, %v937
      %v1082 = vpack.c.bf16 %v939, %v939
      %v1083 = vpack.c.bf16 %v942, %v942
      %v1084 = vpack.c.bf16 %v944, %v944
      %v1085 = vpack.c.bf16 %v947, %v947
      %v1086 = vpack.c.bf16 %v949, %v949
      %v1087 = vpack.c.bf16 %v952, %v952
      %v1088 = vpack.c.bf16 %v954, %v954
      %v1089 = vpack.c.bf16 %v957, %v957
      %v1090 = vpack.c.bf16 %v959, %v959
      %v1091 = vpack.c.bf16 %v962, %v962
      %v1092 = vpack.c.bf16 %v964, %v964
      %v1093 = vpack.c.bf16 %v967, %v967
      %v1094 = vpack.c.bf16 %v969, %v969
      %v1095 = vpack.c.bf16 %v972, %v972
      %v1096 = vpack.c.bf16 %v974, %v974
      %v1097 = vpack.c.bf16 %v977, %v977
      %v1098 = vpack.c.bf16 %v979, %v979
      %v1099 = vpack.c.bf16 %v982, %v982
      %v1100 = vpack.c.bf16 %v984, %v984
      %v1101 = vpack.c.bf16 %v987, %v987
      %v1102 = vpack.c.bf16 %v989, %v989
      %v1103 = vpack.c.bf16 %v992, %v992
      %v1104 = vpack.c.bf16 %v994, %v994
      %v1105 = vpack.c.bf16 %v997, %v997
      %v1106 = vpack.c.bf16 %v999, %v999
      %v1107 = vpack.c.bf16 %v1002, %v1002
      %v1108 = vpack.c.bf16 %v1004, %v1004
      %v1109 = vpack.c.bf16 %v1007, %v1007
      %v1110 = vpack.c.bf16 %v1009, %v1009
      %v1111 = vpack.c.bf16 %v1012, %v1012
      %v1112 = vpack.c.bf16 %v1014, %v1014
      %v1113 = vpack.c.bf16 %v1017, %v1017
      %v1114 = vpack.c.bf16 %v1019, %v1019
      %v1115 = vpack.c.bf16 %v1022, %v1022
      %v1116 = vpack.c.bf16 %v1024, %v1024
      %v1117 = vpack.c.bf16 %v1027, %v1027
      %v1118 = vpack.c.bf16 %v1029, %v1029
      %v1119 = vpack.c.bf16 %v1032, %v1032
      %v1120 = vpack.c.bf16 %v1034, %v1034
      %v1121 = vpack.c.bf16 %v1037, %v1037
      %v1122 = vpack.c.bf16 %v1039, %v1039
      %v1123 = vpack.c.bf16 %v1042, %v1042
      %v1124 = vpack.c.bf16 %v1044, %v1044
      %v1125 = vpack.c.bf16 %v1047, %v1047
      %v1126 = vpack.c.bf16 %v1049, %v1049
      %v1127 = vpack.c.bf16 %v1052, %v1052
      %v1128 = vpack.c.bf16 %v1054, %v1054
      %v1129 = vpack.c.bf16 %v1057, %v1057
      %v1130 = vpack.c.bf16 %v1059, %v1059
      %v1131 = vpack.c.bf16 %v1062, %v1062
      %v1132 = vpack.c.bf16 %v1064, %v1064
      %v1133 = vpack.c.bf16 %v1067, %v1067
      %v1134 = vpack.c.bf16 %v1069, %v1069
      %1135 = vst [vmem:[%s206] sm:$0xf] %v1071
      %1136 = vst [vmem:[%s206 + $0x4] sm:$0xf] %v1072
      %1137 = vst [vmem:[%s206 + $0x8] sm:$0xf] %v1073
      %1138 = vst [vmem:[%s206 + $0xc] sm:$0xf] %v1074
      %1139 = vst [vmem:[%s206 + $0x10] sm:$0xf] %v1075
      %1140 = vst [vmem:[%s206 + $0x14] sm:$0xf] %v1076
      %1141 = vst [vmem:[%s206 + $0x18] sm:$0xf] %v1077
      %1142 = vst [vmem:[%s206 + $0x1c] sm:$0xf] %v1078
      %1143 = vst [vmem:[%s206 + $0x20] sm:$0xf] %v1079
      %1144 = vst [vmem:[%s206 + $0x24] sm:$0xf] %v1080
      %1145 = vst [vmem:[%s206 + $0x28] sm:$0xf] %v1081
      %1146 = vst [vmem:[%s206 + $0x2c] sm:$0xf] %v1082
      %1147 = vst [vmem:[%s206 + $0x30] sm:$0xf] %v1083
      %1148 = vst [vmem:[%s206 + $0x34] sm:$0xf] %v1084
      %1149 = vst [vmem:[%s206 + $0x38] sm:$0xf] %v1085
      %1150 = vst [vmem:[%s206 + $0x3c] sm:$0xf] %v1086
      %1151 = vst [vmem:[%s206 + $0x40] sm:$0xf] %v1087
      %1152 = vst [vmem:[%s206 + $0x44] sm:$0xf] %v1088
      %1153 = vst [vmem:[%s206 + $0x48] sm:$0xf] %v1089
      %1154 = vst [vmem:[%s206 + $0x4c] sm:$0xf] %v1090
      %1155 = vst [vmem:[%s206 + $0x50] sm:$0xf] %v1091
      %1156 = vst [vmem:[%s206 + $0x54] sm:$0xf] %v1092
      %1157 = vst [vmem:[%s206 + $0x58] sm:$0xf] %v1093
      %1158 = vst [vmem:[%s206 + $0x5c] sm:$0xf] %v1094
      %1159 = vst [vmem:[%s206 + $0x60] sm:$0xf] %v1095
      %1160 = vst [vmem:[%s206 + $0x64] sm:$0xf] %v1096
      %1161 = vst [vmem:[%s206 + $0x68] sm:$0xf] %v1097
      %1162 = vst [vmem:[%s206 + $0x6c] sm:$0xf] %v1098
      %1163 = vst [vmem:[%s206 + $0x70] sm:$0xf] %v1099
      %1164 = vst [vmem:[%s206 + $0x74] sm:$0xf] %v1100
      %1165 = vst [vmem:[%s206 + $0x78] sm:$0xf] %v1101
      %1166 = vst [vmem:[%s206 + $0x7c] sm:$0xf] %v1102
      %1167 = vst [vmem:[%s206 + $0x80] sm:$0xf] %v1103
      %1168 = vst [vmem:[%s206 + $0x84] sm:$0xf] %v1104
      %1169 = vst [vmem:[%s206 + $0x88] sm:$0xf] %v1105
      %1170 = vst [vmem:[%s206 + $0x8c] sm:$0xf] %v1106
      %1171 = vst [vmem:[%s206 + $0x90] sm:$0xf] %v1107
      %1172 = vst [vmem:[%s206 + $0x94] sm:$0xf] %v1108
      %1173 = vst [vmem:[%s206 + $0x98] sm:$0xf] %v1109
      %1174 = vst [vmem:[%s206 + $0x9c] sm:$0xf] %v1110
      %1175 = vst [vmem:[%s206 + $0xa0] sm:$0xf] %v1111
      %1176 = vst [vmem:[%s206 + $0xa4] sm:$0xf] %v1112
      %1177 = vst [vmem:[%s206 + $0xa8] sm:$0xf] %v1113
      %1178 = vst [vmem:[%s206 + $0xac] sm:$0xf] %v1114
      %1179 = vst [vmem:[%s206 + $0xb0] sm:$0xf] %v1115
      %1180 = vst [vmem:[%s206 + $0xb4] sm:$0xf] %v1116
      %1181 = vst [vmem:[%s206 + $0xb8] sm:$0xf] %v1117
      %1182 = vst [vmem:[%s206 + $0xbc] sm:$0xf] %v1118
      %1183 = vst [vmem:[%s206 + $0xc0] sm:$0xf] %v1119
      %1184 = vst [vmem:[%s206 + $0xc4] sm:$0xf] %v1120
      %1185 = vst [vmem:[%s206 + $0xc8] sm:$0xf] %v1121
      %1186 = vst [vmem:[%s206 + $0xcc] sm:$0xf] %v1122
      %1187 = vst [vmem:[%s206 + $0xd0] sm:$0xf] %v1123
      %1188 = vst [vmem:[%s206 + $0xd4] sm:$0xf] %v1124
      %1189 = vst [vmem:[%s206 + $0xd8] sm:$0xf] %v1125
      %1190 = vst [vmem:[%s206 + $0xdc] sm:$0xf] %v1126
      %1191 = vst [vmem:[%s206 + $0xe0] sm:$0xf] %v1127
      %1192 = vst [vmem:[%s206 + $0xe4] sm:$0xf] %v1128
      %1193 = vst [vmem:[%s206 + $0xe8] sm:$0xf] %v1129
      %1194 = vst [vmem:[%s206 + $0xec] sm:$0xf] %v1130
      %1195 = vst [vmem:[%s206 + $0xf0] sm:$0xf] %v1131
      %1196 = vst [vmem:[%s206 + $0xf4] sm:$0xf] %v1132
      %1197 = vst [vmem:[%s206 + $0xf8] sm:$0xf] %v1133
      %1198 = vst [vmem:[%s206 + $0xfc] sm:$0xf] %v1134
      %v1199 = vld [vmem:[%s213] sm:$0xff]
      %v1200 = vadd.f32 %v912, %v914
      %v1201 = vadd.f32 %v1200, %v917
      %v1202 = vadd.f32 %v1201, %v919
      %v1203 = vadd.f32 %v1202, %v922
      %v1204 = vadd.f32 %v1203, %v924
      %v1205 = vadd.f32 %v1204, %v927
      %v1206 = vadd.f32 %v1205, %v929
      %v1207 = vadd.f32 %v1206, %v932
      %v1208 = vadd.f32 %v1207, %v934
      %v1209 = vadd.f32 %v1208, %v937
      %v1210 = vadd.f32 %v1209, %v939
      %v1211 = vadd.f32 %v1210, %v942
      %v1212 = vadd.f32 %v1211, %v944
      %v1213 = vadd.f32 %v1212, %v947
      %v1214 = vadd.f32 %v1213, %v949
      %v1215 = vadd.f32 %v1214, %v952
      %v1216 = vadd.f32 %v1215, %v954
      %v1217 = vadd.f32 %v1216, %v957
      %v1218 = vadd.f32 %v1217, %v959
      %v1219 = vadd.f32 %v1218, %v962
      %v1220 = vadd.f32 %v1219, %v964
      %v1221 = vadd.f32 %v1220, %v967
      %v1222 = vadd.f32 %v1221, %v969
      %v1223 = vadd.f32 %v1222, %v972
      %v1224 = vadd.f32 %v1223, %v974
      %v1225 = vadd.f32 %v1224, %v977
      %v1226 = vadd.f32 %v1225, %v979
      %v1227 = vadd.f32 %v1226, %v982
      %v1228 = vadd.f32 %v1227, %v984
      %v1229 = vadd.f32 %v1228, %v987
      %v1230 = vadd.f32 %v1229, %v989
      %v1231 = vadd.f32 %v1230, %v992
      %v1232 = vadd.f32 %v1231, %v994
      %v1233 = vadd.f32 %v1232, %v997
      %v1234 = vadd.f32 %v1233, %v999
      %v1235 = vadd.f32 %v1234, %v1002
      %v1236 = vadd.f32 %v1235, %v1004
      %v1237 = vadd.f32 %v1236, %v1007
      %v1238 = vadd.f32 %v1237, %v1009
      %v1239 = vadd.f32 %v1238, %v1012
      %v1240 = vadd.f32 %v1239, %v1014
      %v1241 = vadd.f32 %v1240, %v1017
      %v1242 = vadd.f32 %v1241, %v1019
      %v1243 = vadd.f32 %v1242, %v1022
      %v1244 = vadd.f32 %v1243, %v1024
      %v1245 = vadd.f32 %v1244, %v1027
      %v1246 = vadd.f32 %v1245, %v1029
      %v1247 = vadd.f32 %v1246, %v1032
      %v1248 = vadd.f32 %v1247, %v1034
      %v1249 = vadd.f32 %v1248, %v1037
      %v1250 = vadd.f32 %v1249, %v1039
      %v1251 = vadd.f32 %v1250, %v1042
      %v1252 = vadd.f32 %v1251, %v1044
      %v1253 = vadd.f32 %v1252, %v1047
      %v1254 = vadd.f32 %v1253, %v1049
      %v1255 = vadd.f32 %v1254, %v1052
      %v1256 = vadd.f32 %v1255, %v1054
      %v1257 = vadd.f32 %v1256, %v1057
      %v1258 = vadd.f32 %v1257, %v1059
      %v1259 = vadd.f32 %v1258, %v1062
      %v1260 = vadd.f32 %v1259, %v1064
      %v1261 = vadd.f32 %v1260, %v1067
      %v1262 = vadd.f32 %v1261, %v1069
      %v1263 = vadd.f32 %v1199, %v1262
      %1264 = vst [vmem:[%s213] sm:$0xff] %v1263
      %v1265 = vld [vmem:[%s213 + $0x8] sm:$0xff]
      %v1266 = vmul.f32 %v912, %v912
      %v1267 = vmul.f32 %v914, %v914
      %v1268 = vmul.f32 %v917, %v917
      %v1269 = vmul.f32 %v919, %v919
      %v1270 = vmul.f32 %v922, %v922
      %v1271 = vmul.f32 %v924, %v924
      %v1272 = vmul.f32 %v927, %v927
      %v1273 = vmul.f32 %v929, %v929
      %v1274 = vmul.f32 %v932, %v932
      %v1275 = vmul.f32 %v934, %v934
      %v1276 = vmul.f32 %v937, %v937
      %v1277 = vmul.f32 %v939, %v939
      %v1278 = vmul.f32 %v942, %v942
      %v1279 = vmul.f32 %v944, %v944
      %v1280 = vmul.f32 %v947, %v947
      %v1281 = vmul.f32 %v949, %v949
      %v1282 = vmul.f32 %v952, %v952
      %v1283 = vmul.f32 %v954, %v954
      %v1284 = vmul.f32 %v957, %v957
      %v1285 = vmul.f32 %v959, %v959
      %v1286 = vmul.f32 %v962, %v962
      %v1287 = vmul.f32 %v964, %v964
      %v1288 = vmul.f32 %v967, %v967
      %v1289 = vmul.f32 %v969, %v969
      %v1290 = vmul.f32 %v972, %v972
      %v1291 = vmul.f32 %v974, %v974
      %v1292 = vmul.f32 %v977, %v977
      %v1293 = vmul.f32 %v979, %v979
      %v1294 = vmul.f32 %v982, %v982
      %v1295 = vmul.f32 %v984, %v984
      %v1296 = vmul.f32 %v987, %v987
      %v1297 = vmul.f32 %v989, %v989
      %v1298 = vmul.f32 %v992, %v992
      %v1299 = vmul.f32 %v994, %v994
      %v1300 = vmul.f32 %v997, %v997
      %v1301 = vmul.f32 %v999, %v999
      %v1302 = vmul.f32 %v1002, %v1002
      %v1303 = vmul.f32 %v1004, %v1004
      %v1304 = vmul.f32 %v1007, %v1007
      %v1305 = vmul.f32 %v1009, %v1009
      %v1306 = vmul.f32 %v1012, %v1012
      %v1307 = vmul.f32 %v1014, %v1014
      %v1308 = vmul.f32 %v1017, %v1017
      %v1309 = vmul.f32 %v1019, %v1019
      %v1310 = vmul.f32 %v1022, %v1022
      %v1311 = vmul.f32 %v1024, %v1024
      %v1312 = vmul.f32 %v1027, %v1027
      %v1313 = vmul.f32 %v1029, %v1029
      %v1314 = vmul.f32 %v1032, %v1032
      %v1315 = vmul.f32 %v1034, %v1034
      %v1316 = vmul.f32 %v1037, %v1037
      %v1317 = vmul.f32 %v1039, %v1039
      %v1318 = vmul.f32 %v1042, %v1042
      %v1319 = vmul.f32 %v1044, %v1044
      %v1320 = vmul.f32 %v1047, %v1047
      %v1321 = vmul.f32 %v1049, %v1049
      %v1322 = vmul.f32 %v1052, %v1052
      %v1323 = vmul.f32 %v1054, %v1054
      %v1324 = vmul.f32 %v1057, %v1057
      %v1325 = vmul.f32 %v1059, %v1059
      %v1326 = vmul.f32 %v1062, %v1062
      %v1327 = vmul.f32 %v1064, %v1064
      %v1328 = vmul.f32 %v1067, %v1067
      %v1329 = vmul.f32 %v1069, %v1069
      %v1330 = vadd.f32 %v1266, %v1267
      %v1331 = vadd.f32 %v1330, %v1268
      %v1332 = vadd.f32 %v1331, %v1269
      %v1333 = vadd.f32 %v1332, %v1270
      %v1334 = vadd.f32 %v1333, %v1271
      %v1335 = vadd.f32 %v1334, %v1272
      %v1336 = vadd.f32 %v1335, %v1273
      %v1337 = vadd.f32 %v1336, %v1274
      %v1338 = vadd.f32 %v1337, %v1275
      %v1339 = vadd.f32 %v1338, %v1276
      %v1340 = vadd.f32 %v1339, %v1277
      %v1341 = vadd.f32 %v1340, %v1278
      %v1342 = vadd.f32 %v1341, %v1279
      %v1343 = vadd.f32 %v1342, %v1280
      %v1344 = vadd.f32 %v1343, %v1281
      %v1345 = vadd.f32 %v1344, %v1282
      %v1346 = vadd.f32 %v1345, %v1283
      %v1347 = vadd.f32 %v1346, %v1284
      %v1348 = vadd.f32 %v1347, %v1285
      %v1349 = vadd.f32 %v1348, %v1286
      %v1350 = vadd.f32 %v1349, %v1287
      %v1351 = vadd.f32 %v1350, %v1288
      %v1352 = vadd.f32 %v1351, %v1289
      %v1353 = vadd.f32 %v1352, %v1290
      %v1354 = vadd.f32 %v1353, %v1291
      %v1355 = vadd.f32 %v1354, %v1292
      %v1356 = vadd.f32 %v1355, %v1293
      %v1357 = vadd.f32 %v1356, %v1294
      %v1358 = vadd.f32 %v1357, %v1295
      %v1359 = vadd.f32 %v1358, %v1296
      %v1360 = vadd.f32 %v1359, %v1297
      %v1361 = vadd.f32 %v1360, %v1298
      %v1362 = vadd.f32 %v1361, %v1299
      %v1363 = vadd.f32 %v1362, %v1300
      %v1364 = vadd.f32 %v1363, %v1301
      %v1365 = vadd.f32 %v1364, %v1302
      %v1366 = vadd.f32 %v1365, %v1303
      %v1367 = vadd.f32 %v1366, %v1304
      %v1368 = vadd.f32 %v1367, %v1305
      %v1369 = vadd.f32 %v1368, %v1306
      %v1370 = vadd.f32 %v1369, %v1307
      %v1371 = vadd.f32 %v1370, %v1308
      %v1372 = vadd.f32 %v1371, %v1309
      %v1373 = vadd.f32 %v1372, %v1310
      %v1374 = vadd.f32 %v1373, %v1311
      %v1375 = vadd.f32 %v1374, %v1312
      %v1376 = vadd.f32 %v1375, %v1313
      %v1377 = vadd.f32 %v1376, %v1314
      %v1378 = vadd.f32 %v1377, %v1315
      %v1379 = vadd.f32 %v1378, %v1316
      %v1380 = vadd.f32 %v1379, %v1317
      %v1381 = vadd.f32 %v1380, %v1318
      %v1382 = vadd.f32 %v1381, %v1319
      %v1383 = vadd.f32 %v1382, %v1320
      %v1384 = vadd.f32 %v1383, %v1321
      %v1385 = vadd.f32 %v1384, %v1322
      %v1386 = vadd.f32 %v1385, %v1323
      %v1387 = vadd.f32 %v1386, %v1324
      %v1388 = vadd.f32 %v1387, %v1325
      %v1389 = vadd.f32 %v1388, %v1326
      %v1390 = vadd.f32 %v1389, %v1327
      %v1391 = vadd.f32 %v1390, %v1328
      %v1392 = vadd.f32 %v1391, %v1329
      %v1393 = vadd.f32 %v1265, %v1392
      %1394 = vst [vmem:[%s213 + $0x8] sm:$0xff] %v1393
      %s1395 = sadd.s32 %s19, %s20
      %s1396 = smul.u32 64, %s1395
      %p1397 = scmp.lt.s32.totalorder %s1396, 127
      %s1398 = scalar_select %p1397, %s1396, 127
      %s1399 = smul.addr %s1398, 4
      %s1400 = scalar_lea.vmem %s2, %s1399
      %s1401 = smul.u32 2, %s19
      %p1402 = scmp.lt.s32.totalorder %s1401, 3
      %s1403 = scalar_select %p1402, %s1401, 3
      %s1404 = smul.addr %s1403, 8
      %s1405 = scalar_lea.vmem %s3, %s1404
      // Predicated region
      $region33: #{ops_forward.6} parent=27 // pred_check
        %p1406 = pneg %p96
      $region34: #{ops_forward.6} parent=27 // pred_check_branch
        %1408 = sbr.rel (%p1406) target = $region36
      $region35: #{ops_forward.6} parent=27 // pred_region
        %s1409 = sadd.s32 %s19, %s20
        %s1410 = smul.u32 64, %s1409
      $region36: #{ops_forward.6} parent=27 // pred_fallthru
        _
      // Predicated region
      $region37: #{ops_forward.6} parent=27 // pred_check
        %p1411 = pneg %p122
      $region38: #{ops_forward.6} parent=27 // pred_check_branch
        %1413 = sbr.rel (%p1411) target = $region40
      $region39: #{ops_forward.6} parent=27 // pred_region
        %s1414 = smul.u32 2, %s19
      $region40: #{ops_forward.6} parent=27 // pred_fallthru
        _
    $region28: #{ops_forward.6} parent=5 // pred_fallthru
      _
    %p1415 = scmp.le.s32.totalorder 2, %s10
    // Predicated region
    $region41: #{ops_forward.6} parent=5 // pred_check
      %p1416 = pneg %p1415
    $region42: #{ops_forward.6} parent=5 // pred_check_branch
      %1418 = sbr.rel (%p1416) target = $region44
    $region43: #{ops_forward.6} parent=5 // pred_region
      %s1419 = ssub.s32 %s10, 2
      // Predicated region
      $region45: #{ops_forward.6} parent=43 // pred_check
        %p1420 = pneg %p102
      $region46: #{ops_forward.6} parent=43 // pred_check_branch
        %1422 = sbr.rel (%p1420) target = $region48
      $region47: #{ops_forward.6} parent=43 // pred_region
        %s1423 = sadd.s32 %s21, %s22
        %s1424 = smul.u32 64, %s1423
        %p1425 = scmp.lt.s32.totalorder %s1424, 127
        %s1426 = scalar_select %p1425, %s1424, 127
        %s1427 = smul.addr %s1426, 4
        %s1428 = scalar_lea.vmem %s2, %s1427
      $region48: #{ops_forward.6} parent=43 // pred_fallthru
        _
      // Predicated region
      $region49: #{ops_forward.6} parent=43 // pred_check
        %p1429 = pneg %p128
      $region50: #{ops_forward.6} parent=43 // pred_check_branch
        %1431 = sbr.rel (%p1429) target = $region52
      $region51: #{ops_forward.6} parent=43 // pred_region
        %s1432 = smul.u32 2, %s21
        %p1433 = scmp.lt.s32.totalorder %s1432, 3
        %s1434 = scalar_select %p1433, %s1432, 3
        %s1435 = smul.addr %s1434, 8
        %s1436 = scalar_lea.vmem %s3, %s1435
      $region52: #{ops_forward.6} parent=43 // pred_fallthru
        _
    $region44: #{ops_forward.6} parent=5 // pred_fallthru
      _
  $region6: #{ops_forward.6} parent=0 // loop_footer
    %s14 = sadd.s32 1, %s10
  $region7: #{ops_forward.6} parent=0 // loop_footer_branch
    %9 = sbr.rel target = $region3
  $region8: #{ops_forward.6} parent=0 // loop_exit
    _

// kernel: ops_forward.7
$region0: #{ops_forward.7}
  #allocation0 [shape = 'u32[]', space=smem, size = 0x4, offset = 0x4, fixed_abs, tag = 'smem constant byte address 0x4 - core index']
  #allocation1 [shape = 'u32[72,128]{1,0:T(1,128)}', space=vmem, size = 0x9000, scoped, tag = 'internal scratch']
  %s0 = inlined_call_operand.vmem [shape: bf16[1024,128], index: 0, kind: input, shape index: {}]
  %s1 = inlined_call_operand.vmem [shape: f32[1,128], index: 1, kind: input, shape index: {}]
  %s2 = inlined_call_operand.vmem [shape: f32[1,128], index: 2, kind: input, shape index: {}]
  %s3 = inlined_call_operand.vmem [shape: f32[1024,128], index: 3, kind: output, shape index: {}]
  %s4 = sld [smem:[#allocation0]]
  $region45: #{ops_forward.7} parent=0
    _
  %s6 = ssub.s32 1, %s4
  %s7 = scalar_select 0, %s6, %s4
  loop: start=0, step=1, limit=4
  $region2: #{ops_forward.7} parent=0 // loop_pre_header
    _
  $region3: #{ops_forward.7} parent=0 // loop_header
    %s9 = sphi 0, %s13
    %p10 = scmp.ge.s32.totalorder %s9, 4
    %s19 = sphi 0, %s21
    %s22 = sphi 0, %s19
    %s23 = sphi 0, %s22
    %s39 = sphi 0, %s23
    %s43 = sphi 0, %s43
    %s45 = sphi 0, %s43
    %s46 = sphi 0, %s45
    %s60 = sphi 0, %s46
    %s64 = sphi 0, %s64
    %s66 = sphi 0, %s64
    %s67 = sphi 0, %s66
    %s81 = sphi 0, %s67
    %s87 = sphi 0, %s89
    %s90 = sphi 0, %s87
    %s91 = sphi 0, %s90
    %s107 = sphi 0, %s91
  $region4: #{ops_forward.7} parent=0 // loop_header_branch
    %12 = sbr.rel (%p10) target = $region8
  $region5: #{ops_forward.7} parent=0 // loop_body
    %s14 = ssub.s32 %s9, 1
    %s15 = ssub.s32 %s9, 2
    %s16 = sadd.s32 %s9, 1
    %s17 = ssub.s32 %s9, %s16
    %p18 = scmp.eq.s32.totalorder %s17, 0
    %s20 = sadd.s32 %s19, 1
    %s21 = scalar_select %p18, %s19, %s20
    %p24 = pneg %p18
    %p25 = scmp.eq.s32.totalorder %s9, 1
    %p26 = por %p24, %p25
    %p27 = scmp.ne.s32.totalorder %s19, %s22
    %p28 = scmp.eq.s32.totalorder %s9, 0
    %p29 = por %p27, %p28
    %p30 = scmp.ne.s32.totalorder %s19, %s22
    %p31 = scmp.eq.s32.totalorder %s14, 1
    %p32 = por %p30, %p31
    %p33 = scmp.ne.s32.totalorder %s22, %s23
    %p34 = scmp.eq.s32.totalorder %s14, 0
    %p35 = por %p33, %p34
    %p36 = scmp.ne.s32.totalorder %s22, %s23
    %p37 = scmp.eq.s32.totalorder %s15, 1
    %p38 = por %p36, %p37
    %p40 = scmp.ne.s32.totalorder %s23, %s39
    %p41 = scmp.eq.s32.totalorder %s15, 0
    %p42 = por %p40, %p41
    %s44 = sadd.s32 %s43, 1
    %p47 = scmp.eq.s32.totalorder %s9, 1
    %p48 = scmp.ne.s32.totalorder %s43, %s45
    %p49 = scmp.eq.s32.totalorder %s9, 0
    %p50 = por %p48, %p49
    %p51 = scmp.ne.s32.totalorder %s43, %s45
    %p52 = scmp.eq.s32.totalorder %s14, 1
    %p53 = por %p51, %p52
    %p54 = scmp.ne.s32.totalorder %s45, %s46
    %p55 = scmp.eq.s32.totalorder %s14, 0
    %p56 = por %p54, %p55
    %p57 = scmp.ne.s32.totalorder %s45, %s46
    %p58 = scmp.eq.s32.totalorder %s15, 1
    %p59 = por %p57, %p58
    %p61 = scmp.ne.s32.totalorder %s46, %s60
    %p62 = scmp.eq.s32.totalorder %s15, 0
    %p63 = por %p61, %p62
    %s65 = sadd.s32 %s64, 1
    %p68 = scmp.eq.s32.totalorder %s9, 1
    %p69 = scmp.ne.s32.totalorder %s64, %s66
    %p70 = scmp.eq.s32.totalorder %s9, 0
    %p71 = por %p69, %p70
    %p72 = scmp.ne.s32.totalorder %s64, %s66
    %p73 = scmp.eq.s32.totalorder %s14, 1
    %p74 = por %p72, %p73
    %p75 = scmp.ne.s32.totalorder %s66, %s67
    %p76 = scmp.eq.s32.totalorder %s14, 0
    %p77 = por %p75, %p76
    %p78 = scmp.ne.s32.totalorder %s66, %s67
    %p79 = scmp.eq.s32.totalorder %s15, 1
    %p80 = por %p78, %p79
    %p82 = scmp.ne.s32.totalorder %s67, %s81
    %p83 = scmp.eq.s32.totalorder %s15, 0
    %p84 = por %p82, %p83
    %s85 = ssub.s32 %s9, %s16
    %p86 = scmp.eq.s32.totalorder %s85, 0
    %s88 = sadd.s32 %s87, 1
    %s89 = scalar_select %p86, %s87, %s88
    %p92 = pneg %p86
    %p93 = scmp.eq.s32.totalorder %s9, 1
    %p94 = por %p92, %p93
    %p95 = scmp.ne.s32.totalorder %s87, %s90
    %p96 = scmp.eq.s32.totalorder %s9, 0
    %p97 = por %p95, %p96
    %p98 = scmp.ne.s32.totalorder %s87, %s90
    %p99 = scmp.eq.s32.totalorder %s14, 1
    %p100 = por %p98, %p99
    %p101 = scmp.ne.s32.totalorder %s90, %s91
    %p102 = scmp.eq.s32.totalorder %s14, 0
    %p103 = por %p101, %p102
    %p104 = scmp.ne.s32.totalorder %s90, %s91
    %p105 = scmp.eq.s32.totalorder %s15, 1
    %p106 = por %p104, %p105
    %p108 = scmp.ne.s32.totalorder %s91, %s107
    %p109 = scmp.eq.s32.totalorder %s15, 0
    %p110 = por %p108, %p109
    %p111 = scmp.le.s32.totalorder 1, %s9
    %p112 = scmp.lt.s32.totalorder %s9, 3
    %p113 = pnand %p111, %p112
    %p114 = pneg %p113
    // Predicated region
    $region9: #{ops_forward.7} parent=5 // pred_check
      _
    $region10: #{ops_forward.7} parent=5 // pred_check_branch
      %116 = sbr.rel (%p113) target = $region12
    $region11: #{ops_forward.7} parent=5 // pred_region
      %s117 = ssub.s32 %s9, 1
      // Predicated region
      $region13: #{ops_forward.7} parent=11 // pred_check
        %p118 = pneg %p56
      $region14: #{ops_forward.7} parent=11 // pred_check_branch
        %120 = sbr.rel (%p118) target = $region16
      $region15: #{ops_forward.7} parent=11 // pred_region
        _
      $region16: #{ops_forward.7} parent=11 // pred_fallthru
        _
      // Predicated region
      $region17: #{ops_forward.7} parent=11 // pred_check
        %p121 = pneg %p77
      $region18: #{ops_forward.7} parent=11 // pred_check_branch
        %123 = sbr.rel (%p121) target = $region20
      $region19: #{ops_forward.7} parent=11 // pred_region
        _
      $region20: #{ops_forward.7} parent=11 // pred_fallthru
        _
    $region12: #{ops_forward.7} parent=5 // pred_fallthru
      _
    %p124 = scmp.lt.s32.totalorder %s9, 2
    // Predicated region
    $region21: #{ops_forward.7} parent=5 // pred_check
      %p125 = pneg %p124
    $region22: #{ops_forward.7} parent=5 // pred_check_branch
      %127 = sbr.rel (%p125) target = $region24
    $region23: #{ops_forward.7} parent=5 // pred_region
      // Predicated region
      $region25: #{ops_forward.7} parent=23 // pred_check
        %p128 = pneg %p29
      $region26: #{ops_forward.7} parent=23 // pred_check_branch
        %130 = sbr.rel (%p128) target = $region28
      $region27: #{ops_forward.7} parent=23 // pred_region
        %s131 = smul.u32 64, %s9
        %p132 = scmp.lt.s32.totalorder %s131, 127
        %s133 = scalar_select %p132, %s131, 127
        %s134 = smul.addr %s133, 4
        %s135 = scalar_lea.vmem %s0, %s134
        %s136 = smul.u32 64, %s9
      $region28: #{ops_forward.7} parent=23 // pred_fallthru
        _
    $region24: #{ops_forward.7} parent=5 // pred_fallthru
      _
    %p137 = scmp.le.s32.totalorder 1, %s9
    %p138 = scmp.lt.s32.totalorder %s9, 3
    %p139 = pnand %p137, %p138
    %p140 = pneg %p139
    // Predicated region
    $region29: #{ops_forward.7} parent=5 // pred_check
      _
    $region30: #{ops_forward.7} parent=5 // pred_check_branch
      %142 = sbr.rel (%p139) target = $region32
    $region31: #{ops_forward.7} parent=5 // pred_region
      %s143 = ssub.s32 %s9, 1
      %s144 = smul.u32 64, %s14
      %p145 = scmp.lt.s32.totalorder %s144, 127
      %s146 = scalar_select %p145, %s144, 127
      %s147 = smul.addr %s146, 4
      %s148 = scalar_lea.vmem %s0, %s147
      %p149 = pneg %p35
      %p150 = pneg %p32
      %p151 = pneg %p56
      %p152 = pneg %p53
      %p153 = pneg %p77
      %p154 = pneg %p74
      %p155 = pneg %p103
      %p156 = pneg %p100
      %s157 = smul.u32 64, %s14
      %p158 = scmp.lt.s32.totalorder %s157, 127
      %s159 = scalar_select %p158, %s157, 127
      %s160 = smul.addr %s159, 8
      %s161 = scalar_lea.vmem %s3, %s160
      %s162 = smul.u32 64, %s14
      %p163 = scmp.lt.s32.totalorder %s162, 127
      %s164 = scalar_select %p163, %s162, 127
      %s165 = smul.addr %s164, 4
      %s166 = scalar_lea.vmem %s0, %s165
      %s167 = smul.u32 64, %s14
      %s168 = smul.u32 64, %s14
      %p169 = scmp.lt.s32.totalorder %s168, 127
      %s170 = scalar_select %p169, %s168, 127
      %s171 = smul.addr %s170, 8
      %s172 = scalar_lea.vmem %s3, %s171
      %s173 = smul.u32 64, %s14
      %v174 = vld [vmem:[%s166] sm:$0xf]
      %v175 = vld [vmem:[%s166 + $0x4] sm:$0xf]
      %v176 = vld [vmem:[%s166 + $0x8] sm:$0xf]
      %v177 = vld [vmem:[%s166 + $0xc] sm:$0xf]
      %v178 = vld [vmem:[%s166 + $0x10] sm:$0xf]
      %v179 = vld [vmem:[%s166 + $0x14] sm:$0xf]
      %v180 = vld [vmem:[%s166 + $0x18] sm:$0xf]
      %v181 = vld [vmem:[%s166 + $0x1c] sm:$0xf]
      %v182 = vld [vmem:[%s166 + $0x20] sm:$0xf]
      %v183 = vld [vmem:[%s166 + $0x24] sm:$0xf]
      %v184 = vld [vmem:[%s166 + $0x28] sm:$0xf]
      %v185 = vld [vmem:[%s166 + $0x2c] sm:$0xf]
      %v186 = vld [vmem:[%s166 + $0x30] sm:$0xf]
      %v187 = vld [vmem:[%s166 + $0x34] sm:$0xf]
      %v188 = vld [vmem:[%s166 + $0x38] sm:$0xf]
      %v189 = vld [vmem:[%s166 + $0x3c] sm:$0xf]
      %v190 = vld [vmem:[%s166 + $0x40] sm:$0xf]
      %v191 = vld [vmem:[%s166 + $0x44] sm:$0xf]
      %v192 = vld [vmem:[%s166 + $0x48] sm:$0xf]
      %v193 = vld [vmem:[%s166 + $0x4c] sm:$0xf]
      %v194 = vld [vmem:[%s166 + $0x50] sm:$0xf]
      %v195 = vld [vmem:[%s166 + $0x54] sm:$0xf]
      %v196 = vld [vmem:[%s166 + $0x58] sm:$0xf]
      %v197 = vld [vmem:[%s166 + $0x5c] sm:$0xf]
      %v198 = vld [vmem:[%s166 + $0x60] sm:$0xf]
      %v199 = vld [vmem:[%s166 + $0x64] sm:$0xf]
      %v200 = vld [vmem:[%s166 + $0x68] sm:$0xf]
      %v201 = vld [vmem:[%s166 + $0x6c] sm:$0xf]
      %v202 = vld [vmem:[%s166 + $0x70] sm:$0xf]
      %v203 = vld [vmem:[%s166 + $0x74] sm:$0xf]
      %v204 = vld [vmem:[%s166 + $0x78] sm:$0xf]
      %v205 = vld [vmem:[%s166 + $0x7c] sm:$0xf]
      %v206 = vld [vmem:[%s166 + $0x80] sm:$0xf]
      %v207 = vld [vmem:[%s166 + $0x84] sm:$0xf]
      %v208 = vld [vmem:[%s166 + $0x88] sm:$0xf]
      %v209 = vld [vmem:[%s166 + $0x8c] sm:$0xf]
      %v210 = vld [vmem:[%s166 + $0x90] sm:$0xf]
      %v211 = vld [vmem:[%s166 + $0x94] sm:$0xf]
      %v212 = vld [vmem:[%s166 + $0x98] sm:$0xf]
      %v213 = vld [vmem:[%s166 + $0x9c] sm:$0xf]
      %v214 = vld [vmem:[%s166 + $0xa0] sm:$0xf]
      %v215 = vld [vmem:[%s166 + $0xa4] sm:$0xf]
      %v216 = vld [vmem:[%s166 + $0xa8] sm:$0xf]
      %v217 = vld [vmem:[%s166 + $0xac] sm:$0xf]
      %v218 = vld [vmem:[%s166 + $0xb0] sm:$0xf]
      %v219 = vld [vmem:[%s166 + $0xb4] sm:$0xf]
      %v220 = vld [vmem:[%s166 + $0xb8] sm:$0xf]
      %v221 = vld [vmem:[%s166 + $0xbc] sm:$0xf]
      %v222 = vld [vmem:[%s166 + $0xc0] sm:$0xf]
      %v223 = vld [vmem:[%s166 + $0xc4] sm:$0xf]
      %v224 = vld [vmem:[%s166 + $0xc8] sm:$0xf]
      %v225 = vld [vmem:[%s166 + $0xcc] sm:$0xf]
      %v226 = vld [vmem:[%s166 + $0xd0] sm:$0xf]
      %v227 = vld [vmem:[%s166 + $0xd4] sm:$0xf]
      %v228 = vld [vmem:[%s166 + $0xd8] sm:$0xf]
      %v229 = vld [vmem:[%s166 + $0xdc] sm:$0xf]
      %v230 = vld [vmem:[%s166 + $0xe0] sm:$0xf]
      %v231 = vld [vmem:[%s166 + $0xe4] sm:$0xf]
      %v232 = vld [vmem:[%s166 + $0xe8] sm:$0xf]
      %v233 = vld [vmem:[%s166 + $0xec] sm:$0xf]
      %v234 = vld [vmem:[%s166 + $0xf0] sm:$0xf]
      %v235 = vld [vmem:[%s166 + $0xf4] sm:$0xf]
      %v236 = vld [vmem:[%s166 + $0xf8] sm:$0xf]
      %v237 = vld [vmem:[%s166 + $0xfc] sm:$0xf]
      %v238 = vunpack.c.l.bf16 %v174
      %v239 = vunpack.c.l.bf16 %v175
      %v240 = vunpack.c.l.bf16 %v176
      %v241 = vunpack.c.l.bf16 %v177
      %v242 = vunpack.c.l.bf16 %v178
      %v243 = vunpack.c.l.bf16 %v179
      %v244 = vunpack.c.l.bf16 %v180
      %v245 = vunpack.c.l.bf16 %v181
      %v246 = vunpack.c.l.bf16 %v182
      %v247 = vunpack.c.l.bf16 %v183
      %v248 = vunpack.c.l.bf16 %v184
      %v249 = vunpack.c.l.bf16 %v185
      %v250 = vunpack.c.l.bf16 %v186
      %v251 = vunpack.c.l.bf16 %v187
      %v252 = vunpack.c.l.bf16 %v188
      %v253 = vunpack.c.l.bf16 %v189
      %v254 = vunpack.c.l.bf16 %v190
      %v255 = vunpack.c.l.bf16 %v191
      %v256 = vunpack.c.l.bf16 %v192
      %v257 = vunpack.c.l.bf16 %v193
      %v258 = vunpack.c.l.bf16 %v194
      %v259 = vunpack.c.l.bf16 %v195
      %v260 = vunpack.c.l.bf16 %v196
      %v261 = vunpack.c.l.bf16 %v197
      %v262 = vunpack.c.l.bf16 %v198
      %v263 = vunpack.c.l.bf16 %v199
      %v264 = vunpack.c.l.bf16 %v200
      %v265 = vunpack.c.l.bf16 %v201
      %v266 = vunpack.c.l.bf16 %v202
      %v267 = vunpack.c.l.bf16 %v203
      %v268 = vunpack.c.l.bf16 %v204
      %v269 = vunpack.c.l.bf16 %v205
      %v270 = vunpack.c.l.bf16 %v206
      %v271 = vunpack.c.l.bf16 %v207
      %v272 = vunpack.c.l.bf16 %v208
      %v273 = vunpack.c.l.bf16 %v209
      %v274 = vunpack.c.l.bf16 %v210
      %v275 = vunpack.c.l.bf16 %v211
      %v276 = vunpack.c.l.bf16 %v212
      %v277 = vunpack.c.l.bf16 %v213
      %v278 = vunpack.c.l.bf16 %v214
      %v279 = vunpack.c.l.bf16 %v215
      %v280 = vunpack.c.l.bf16 %v216
      %v281 = vunpack.c.l.bf16 %v217
      %v282 = vunpack.c.l.bf16 %v218
      %v283 = vunpack.c.l.bf16 %v219
      %v284 = vunpack.c.l.bf16 %v220
      %v285 = vunpack.c.l.bf16 %v221
      %v286 = vunpack.c.l.bf16 %v222
      %v287 = vunpack.c.l.bf16 %v223
      %v288 = vunpack.c.l.bf16 %v224
      %v289 = vunpack.c.l.bf16 %v225
      %v290 = vunpack.c.l.bf16 %v226
      %v291 = vunpack.c.l.bf16 %v227
      %v292 = vunpack.c.l.bf16 %v228
      %v293 = vunpack.c.l.bf16 %v229
      %v294 = vunpack.c.l.bf16 %v230
      %v295 = vunpack.c.l.bf16 %v231
      %v296 = vunpack.c.l.bf16 %v232
      %v297 = vunpack.c.l.bf16 %v233
      %v298 = vunpack.c.l.bf16 %v234
      %v299 = vunpack.c.l.bf16 %v235
      %v300 = vunpack.c.l.bf16 %v236
      %v301 = vunpack.c.l.bf16 %v237
      %v302 = vld [vmem:[%s1] sm:$0x1]
      %v304 = vperm.slane %v302, 0
      %v306 = vmul.f32 %v238, %v304
      %v307 = vmul.f32 %v239, %v304
      %v308 = vmul.f32 %v240, %v304
      %v309 = vmul.f32 %v241, %v304
      %v310 = vmul.f32 %v242, %v304
      %v311 = vmul.f32 %v243, %v304
      %v312 = vmul.f32 %v244, %v304
      %v313 = vmul.f32 %v245, %v304
      %v314 = vmul.f32 %v246, %v304
      %v315 = vmul.f32 %v247, %v304
      %v316 = vmul.f32 %v248, %v304
      %v317 = vmul.f32 %v249, %v304
      %v318 = vmul.f32 %v250, %v304
      %v319 = vmul.f32 %v251, %v304
      %v320 = vmul.f32 %v252, %v304
      %v321 = vmul.f32 %v253, %v304
      %v322 = vmul.f32 %v254, %v304
      %v323 = vmul.f32 %v255, %v304
      %v324 = vmul.f32 %v256, %v304
      %v325 = vmul.f32 %v257, %v304
      %v326 = vmul.f32 %v258, %v304
      %v327 = vmul.f32 %v259, %v304
      %v328 = vmul.f32 %v260, %v304
      %v329 = vmul.f32 %v261, %v304
      %v330 = vmul.f32 %v262, %v304
      %v331 = vmul.f32 %v263, %v304
      %v332 = vmul.f32 %v264, %v304
      %v333 = vmul.f32 %v265, %v304
      %v334 = vmul.f32 %v266, %v304
      %v335 = vmul.f32 %v267, %v304
      %v336 = vmul.f32 %v268, %v304
      %v337 = vmul.f32 %v269, %v304
      %v338 = vmul.f32 %v270, %v304
      %v339 = vmul.f32 %v271, %v304
      %v340 = vmul.f32 %v272, %v304
      %v341 = vmul.f32 %v273, %v304
      %v342 = vmul.f32 %v274, %v304
      %v343 = vmul.f32 %v275, %v304
      %v344 = vmul.f32 %v276, %v304
      %v345 = vmul.f32 %v277, %v304
      %v346 = vmul.f32 %v278, %v304
      %v347 = vmul.f32 %v279, %v304
      %v348 = vmul.f32 %v280, %v304
      %v349 = vmul.f32 %v281, %v304
      %v350 = vmul.f32 %v282, %v304
      %v351 = vmul.f32 %v283, %v304
      %v352 = vmul.f32 %v284, %v304
      %v353 = vmul.f32 %v285, %v304
      %v354 = vmul.f32 %v286, %v304
      %v355 = vmul.f32 %v287, %v304
      %v356 = vmul.f32 %v288, %v304
      %v357 = vmul.f32 %v289, %v304
      %v358 = vmul.f32 %v290, %v304
      %v359 = vmul.f32 %v291, %v304
      %v360 = vmul.f32 %v292, %v304
      %v361 = vmul.f32 %v293, %v304
      %v362 = vmul.f32 %v294, %v304
      %v363 = vmul.f32 %v295, %v304
      %v364 = vmul.f32 %v296, %v304
      %v365 = vmul.f32 %v297, %v304
      %v366 = vmul.f32 %v298, %v304
      %v367 = vmul.f32 %v299, %v304
      %v368 = vmul.f32 %v300, %v304
      %v369 = vmul.f32 %v301, %v304
      %v370 = vld [vmem:[%s2] sm:$0x1]
      %v372 = vperm.slane %v370, 0
      %v374 = vadd.f32 %v306, %v372
      %v375 = vadd.f32 %v307, %v372
      %v376 = vadd.f32 %v308, %v372
      %v377 = vadd.f32 %v309, %v372
      %v378 = vadd.f32 %v310, %v372
      %v379 = vadd.f32 %v311, %v372
      %v380 = vadd.f32 %v312, %v372
      %v381 = vadd.f32 %v313, %v372
      %v382 = vadd.f32 %v314, %v372
      %v383 = vadd.f32 %v315, %v372
      %v384 = vadd.f32 %v316, %v372
      %v385 = vadd.f32 %v317, %v372
      %v386 = vadd.f32 %v318, %v372
      %v387 = vadd.f32 %v319, %v372
      %v388 = vadd.f32 %v320, %v372
      %v389 = vadd.f32 %v321, %v372
      %v390 = vadd.f32 %v322, %v372
      %v391 = vadd.f32 %v323, %v372
      %v392 = vadd.f32 %v324, %v372
      %v393 = vadd.f32 %v325, %v372
      %v394 = vadd.f32 %v326, %v372
      %v395 = vadd.f32 %v327, %v372
      %v396 = vadd.f32 %v328, %v372
      %v397 = vadd.f32 %v329, %v372
      %v398 = vadd.f32 %v330, %v372
      %v399 = vadd.f32 %v331, %v372
      %v400 = vadd.f32 %v332, %v372
      %v401 = vadd.f32 %v333, %v372
      %v402 = vadd.f32 %v334, %v372
      %v403 = vadd.f32 %v335, %v372
      %v404 = vadd.f32 %v336, %v372
      %v405 = vadd.f32 %v337, %v372
      %v406 = vadd.f32 %v338, %v372
      %v407 = vadd.f32 %v339, %v372
      %v408 = vadd.f32 %v340, %v372
      %v409 = vadd.f32 %v341, %v372
      %v410 = vadd.f32 %v342, %v372
      %v411 = vadd.f32 %v343, %v372
      %v412 = vadd.f32 %v344, %v372
      %v413 = vadd.f32 %v345, %v372
      %v414 = vadd.f32 %v346, %v372
      %v415 = vadd.f32 %v347, %v372
      %v416 = vadd.f32 %v348, %v372
      %v417 = vadd.f32 %v349, %v372
      %v418 = vadd.f32 %v350, %v372
      %v419 = vadd.f32 %v351, %v372
      %v420 = vadd.f32 %v352, %v372
      %v421 = vadd.f32 %v353, %v372
      %v422 = vadd.f32 %v354, %v372
      %v423 = vadd.f32 %v355, %v372
      %v424 = vadd.f32 %v356, %v372
      %v425 = vadd.f32 %v357, %v372
      %v426 = vadd.f32 %v358, %v372
      %v427 = vadd.f32 %v359, %v372
      %v428 = vadd.f32 %v360, %v372
      %v429 = vadd.f32 %v361, %v372
      %v430 = vadd.f32 %v362, %v372
      %v431 = vadd.f32 %v363, %v372
      %v432 = vadd.f32 %v364, %v372
      %v433 = vadd.f32 %v365, %v372
      %v434 = vadd.f32 %v366, %v372
      %v435 = vadd.f32 %v367, %v372
      %v436 = vadd.f32 %v368, %v372
      %v437 = vadd.f32 %v369, %v372
      %v438 = vmax.f32 %v374, 0.0
      %v439 = vmax.f32 %v375, 0.0
      %v440 = vmax.f32 %v376, 0.0
      %v441 = vmax.f32 %v377, 0.0
      %v442 = vmax.f32 %v378, 0.0
      %v443 = vmax.f32 %v379, 0.0
      %v444 = vmax.f32 %v380, 0.0
      %v445 = vmax.f32 %v381, 0.0
      %v446 = vmax.f32 %v382, 0.0
      %v447 = vmax.f32 %v383, 0.0
      %v448 = vmax.f32 %v384, 0.0
      %v449 = vmax.f32 %v385, 0.0
      %v450 = vmax.f32 %v386, 0.0
      %v451 = vmax.f32 %v387, 0.0
      %v452 = vmax.f32 %v388, 0.0
      %v453 = vmax.f32 %v389, 0.0
      %v454 = vmax.f32 %v390, 0.0
      %v455 = vmax.f32 %v391, 0.0
      %v456 = vmax.f32 %v392, 0.0
      %v457 = vmax.f32 %v393, 0.0
      %v458 = vmax.f32 %v394, 0.0
      %v459 = vmax.f32 %v395, 0.0
      %v460 = vmax.f32 %v396, 0.0
      %v461 = vmax.f32 %v397, 0.0
      %v462 = vmax.f32 %v398, 0.0
      %v463 = vmax.f32 %v399, 0.0
      %v464 = vmax.f32 %v400, 0.0
      %v465 = vmax.f32 %v401, 0.0
      %v466 = vmax.f32 %v402, 0.0
      %v467 = vmax.f32 %v403, 0.0
      %v468 = vmax.f32 %v404, 0.0
      %v469 = vmax.f32 %v405, 0.0
      %v470 = vmax.f32 %v406, 0.0
      %v471 = vmax.f32 %v407, 0.0
      %v472 = vmax.f32 %v408, 0.0
      %v473 = vmax.f32 %v409, 0.0
      %v474 = vmax.f32 %v410, 0.0
      %v475 = vmax.f32 %v411, 0.0
      %v476 = vmax.f32 %v412, 0.0
      %v477 = vmax.f32 %v413, 0.0
      %v478 = vmax.f32 %v414, 0.0
      %v479 = vmax.f32 %v415, 0.0
      %v480 = vmax.f32 %v416, 0.0
      %v481 = vmax.f32 %v417, 0.0
      %v482 = vmax.f32 %v418, 0.0
      %v483 = vmax.f32 %v419, 0.0
      %v484 = vmax.f32 %v420, 0.0
      %v485 = vmax.f32 %v421, 0.0
      %v486 = vmax.f32 %v422, 0.0
      %v487 = vmax.f32 %v423, 0.0
      %v488 = vmax.f32 %v424, 0.0
      %v489 = vmax.f32 %v425, 0.0
      %v490 = vmax.f32 %v426, 0.0
      %v491 = vmax.f32 %v427, 0.0
      %v492 = vmax.f32 %v428, 0.0
      %v493 = vmax.f32 %v429, 0.0
      %v494 = vmax.f32 %v430, 0.0
      %v495 = vmax.f32 %v431, 0.0
      %v496 = vmax.f32 %v432, 0.0
      %v497 = vmax.f32 %v433, 0.0
      %v498 = vmax.f32 %v434, 0.0
      %v499 = vmax.f32 %v435, 0.0
      %v500 = vmax.f32 %v436, 0.0
      %v501 = vmax.f32 %v437, 0.0
      %502 = vst [vmem:[%s172] sm:$0xff] %v438
      %503 = vst [vmem:[%s172 + $0x8] sm:$0xff] %v439
      %504 = vst [vmem:[%s172 + $0x10] sm:$0xff] %v440
      %505 = vst [vmem:[%s172 + $0x18] sm:$0xff] %v441
      %506 = vst [vmem:[%s172 + $0x20] sm:$0xff] %v442
      %507 = vst [vmem:[%s172 + $0x28] sm:$0xff] %v443
      %508 = vst [vmem:[%s172 + $0x30] sm:$0xff] %v444
      %509 = vst [vmem:[%s172 + $0x38] sm:$0xff] %v445
      %510 = vst [vmem:[%s172 + $0x40] sm:$0xff] %v446
      %511 = vst [vmem:[%s172 + $0x48] sm:$0xff] %v447
      %512 = vst [vmem:[%s172 + $0x50] sm:$0xff] %v448
      %513 = vst [vmem:[%s172 + $0x58] sm:$0xff] %v449
      %514 = vst [vmem:[%s172 + $0x60] sm:$0xff] %v450
      %515 = vst [vmem:[%s172 + $0x68] sm:$0xff] %v451
      %516 = vst [vmem:[%s172 + $0x70] sm:$0xff] %v452
      %517 = vst [vmem:[%s172 + $0x78] sm:$0xff] %v453
      %518 = vst [vmem:[%s172 + $0x80] sm:$0xff] %v454
      %519 = vst [vmem:[%s172 + $0x88] sm:$0xff] %v455
      %520 = vst [vmem:[%s172 + $0x90] sm:$0xff] %v456
      %521 = vst [vmem:[%s172 + $0x98] sm:$0xff] %v457
      %522 = vst [vmem:[%s172 + $0xa0] sm:$0xff] %v458
      %523 = vst [vmem:[%s172 + $0xa8] sm:$0xff] %v459
      %524 = vst [vmem:[%s172 + $0xb0] sm:$0xff] %v460
      %525 = vst [vmem:[%s172 + $0xb8] sm:$0xff] %v461
      %526 = vst [vmem:[%s172 + $0xc0] sm:$0xff] %v462
      %527 = vst [vmem:[%s172 + $0xc8] sm:$0xff] %v463
      %528 = vst [vmem:[%s172 + $0xd0] sm:$0xff] %v464
      %529 = vst [vmem:[%s172 + $0xd8] sm:$0xff] %v465
      %530 = vst [vmem:[%s172 + $0xe0] sm:$0xff] %v466
      %531 = vst [vmem:[%s172 + $0xe8] sm:$0xff] %v467
      %532 = vst [vmem:[%s172 + $0xf0] sm:$0xff] %v468
      %533 = vst [vmem:[%s172 + $0xf8] sm:$0xff] %v469
      %534 = vst [vmem:[%s172 + $0x100] sm:$0xff] %v470
      %535 = vst [vmem:[%s172 + $0x108] sm:$0xff] %v471
      %536 = vst [vmem:[%s172 + $0x110] sm:$0xff] %v472
      %537 = vst [vmem:[%s172 + $0x118] sm:$0xff] %v473
      %538 = vst [vmem:[%s172 + $0x120] sm:$0xff] %v474
      %539 = vst [vmem:[%s172 + $0x128] sm:$0xff] %v475
      %540 = vst [vmem:[%s172 + $0x130] sm:$0xff] %v476
      %541 = vst [vmem:[%s172 + $0x138] sm:$0xff] %v477
      %542 = vst [vmem:[%s172 + $0x140] sm:$0xff] %v478
      %543 = vst [vmem:[%s172 + $0x148] sm:$0xff] %v479
      %544 = vst [vmem:[%s172 + $0x150] sm:$0xff] %v480
      %545 = vst [vmem:[%s172 + $0x158] sm:$0xff] %v481
      %546 = vst [vmem:[%s172 + $0x160] sm:$0xff] %v482
      %547 = vst [vmem:[%s172 + $0x168] sm:$0xff] %v483
      %548 = vst [vmem:[%s172 + $0x170] sm:$0xff] %v484
      %549 = vst [vmem:[%s172 + $0x178] sm:$0xff] %v485
      %550 = vst [vmem:[%s172 + $0x180] sm:$0xff] %v486
      %551 = vst [vmem:[%s172 + $0x188] sm:$0xff] %v487
      %552 = vst [vmem:[%s172 + $0x190] sm:$0xff] %v488
      %553 = vst [vmem:[%s172 + $0x198] sm:$0xff] %v489
      %554 = vst [vmem:[%s172 + $0x1a0] sm:$0xff] %v490
      %555 = vst [vmem:[%s172 + $0x1a8] sm:$0xff] %v491
      %556 = vst [vmem:[%s172 + $0x1b0] sm:$0xff] %v492
      %557 = vst [vmem:[%s172 + $0x1b8] sm:$0xff] %v493
      %558 = vst [vmem:[%s172 + $0x1c0] sm:$0xff] %v494
      %559 = vst [vmem:[%s172 + $0x1c8] sm:$0xff] %v495
      %560 = vst [vmem:[%s172 + $0x1d0] sm:$0xff] %v496
      %561 = vst [vmem:[%s172 + $0x1d8] sm:$0xff] %v497
      %562 = vst [vmem:[%s172 + $0x1e0] sm:$0xff] %v498
      %563 = vst [vmem:[%s172 + $0x1e8] sm:$0xff] %v499
      %564 = vst [vmem:[%s172 + $0x1f0] sm:$0xff] %v500
      %565 = vst [vmem:[%s172 + $0x1f8] sm:$0xff] %v501
      %s566 = smul.u32 64, %s14
      %p567 = scmp.lt.s32.totalorder %s566, 127
      %s568 = scalar_select %p567, %s566, 127
      %s569 = smul.addr %s568, 8
      %s570 = scalar_lea.vmem %s3, %s569
      // Predicated region
      $region33: #{ops_forward.7} parent=31 // pred_check
        %p571 = pneg %p100
      $region34: #{ops_forward.7} parent=31 // pred_check_branch
        %573 = sbr.rel (%p571) target = $region36
      $region35: #{ops_forward.7} parent=31 // pred_region
        %s574 = smul.u32 64, %s14
      $region36: #{ops_forward.7} parent=31 // pred_fallthru
        _
    $region32: #{ops_forward.7} parent=5 // pred_fallthru
      _
    %p575 = scmp.le.s32.totalorder 2, %s9
    // Predicated region
    $region37: #{ops_forward.7} parent=5 // pred_check
      %p576 = pneg %p575
    $region38: #{ops_forward.7} parent=5 // pred_check_branch
      %578 = sbr.rel (%p576) target = $region40
    $region39: #{ops_forward.7} parent=5 // pred_region
      %s579 = ssub.s32 %s9, 2
      // Predicated region
      $region41: #{ops_forward.7} parent=39 // pred_check
        %p580 = pneg %p106
      $region42: #{ops_forward.7} parent=39 // pred_check_branch
        %582 = sbr.rel (%p580) target = $region44
      $region43: #{ops_forward.7} parent=39 // pred_region
        %s583 = smul.u32 64, %s15
        %p584 = scmp.lt.s32.totalorder %s583, 127
        %s585 = scalar_select %p584, %s583, 127
        %s586 = smul.addr %s585, 8
        %s587 = scalar_lea.vmem %s3, %s586
      $region44: #{ops_forward.7} parent=39 // pred_fallthru
        _
    $region40: #{ops_forward.7} parent=5 // pred_fallthru
      _
  $region6: #{ops_forward.7} parent=0 // loop_footer
    %s13 = sadd.s32 1, %s9
  $region7: #{ops_forward.7} parent=0 // loop_footer_branch
    %8 = sbr.rel target = $region3
  $region8: #{ops_forward.7} parent=0 // loop_exit
    _

</llo_original>
